<compile_context>
chip_gen: v7x
topology: tpu7x:2x2x1
jax: 0.10.0
libtpu: 0.0.40
codegen_flags: <defaults>
</compile_context>

<pallas_src>
import math

import jax
import jax.numpy as jnp
from jax.experimental import pallas as pl
from jax.experimental.pallas import tpu as pltpu

# Logical MLP dims: 784 -> 512 -> 256 -> 128 -> 64 -> 10
DIMS = [784, 512, 256, 128, 64, 10]
# Dims as seen by the kernel: input stays 784 (no wrapper pad), hidden dims are
# already lane-aligned, 64 and the final 10 are zero-padded to 128.
PAD_DIMS = [784, 512, 256, 128, 128, 128]

MAX_TILE_B = 512  # cap on rows per grid step


def _round_up(n, m):
    return ((n + m - 1) // m) * m


def mlp_kernel(x_ref,
               w1_ref, b1_ref, w2_ref, b2_ref, w3_ref, b3_ref,
               w4_ref, b4_ref, w5_ref, b5_ref,
               o_ref):
    """Fused 5-layer MLP (Linear+ReLU x4, final Linear) on one batch tile."""

    def linear(h, w_ref, b_ref, relu):
        w = w_ref[...]
        y = jnp.dot(h.astype(w.dtype), w,
                    preferred_element_type=jnp.float32) + b_ref[...]
        return jnp.maximum(y, 0.0) if relu else y

    h = x_ref[...]
    h = linear(h, w1_ref, b1_ref, True)
    h = linear(h, w2_ref, b2_ref, True)
    h = linear(h, w3_ref, b3_ref, True)
    h = linear(h, w4_ref, b4_ref, True)
    h = linear(h, w5_ref, b5_ref, False)
    o_ref[...] = h.astype(o_ref.dtype)


def prepare_params(params, compute_dtype=jnp.bfloat16):
    """Zero-pad each (w, b) to PAD_DIMS and cast weights to compute_dtype.

    Called ONCE (hoisted out of the forward); biases stay f32 since they are
    added to the f32 accumulator."""
    flat = []
    for li, (w, b) in enumerate(params):
        in_p, out_p = PAD_DIMS[li], PAD_DIMS[li + 1]
        if w.shape == (in_p, out_p):
            wp = w.astype(compute_dtype)
        else:
            wp = jnp.zeros((in_p, out_p), compute_dtype)
            wp = wp.at[:w.shape[0], :w.shape[1]].set(w.astype(compute_dtype))
        bp = jnp.zeros((1, out_p), jnp.float32)
        bp = bp.at[:, :b.shape[1]].set(b.astype(jnp.float32))
        flat.extend([wp, bp])
    return flat


def net_forward(x, flat_params, compute_dtype=jnp.bfloat16):
    """x: any shape that flattens to [B, 784] (e.g. [B, 1, 28, 28]).
    flat_params: output of prepare_params(params, compute_dtype)."""
    x2d = x.reshape(-1, DIMS[0]).astype(compute_dtype)
    B = x2d.shape[0]

    # Sublane alignment: bf16 packs 16 rows per vreg, f32 packs 8.
    sublane = 8 * (4 // jnp.dtype(compute_dtype).itemsize)
    # Balance the grid across (up to) two TensorCores, cap the tile size.
    tile_b = min(MAX_TILE_B, _round_up(max(-(-B // 2), 1), sublane))
    b_pad = _round_up(B, tile_b)

    # Skip the batch-pad copy entirely when B is already tile-aligned.
    if b_pad == B:
        xp = x2d
    else:
        xp = jnp.zeros((b_pad, DIMS[0]), compute_dtype).at[:B, :].set(x2d)

    flops = 2 * b_pad * sum(DIMS[i] * DIMS[i + 1] for i in range(len(DIMS) - 1))
    bytes_accessed = (xp.size * xp.dtype.itemsize
                      + sum(int(p.size) * p.dtype.itemsize for p in flat_params)
                      + b_pad * PAD_DIMS[-1] * 4)
    cost = pl.CostEstimate(flops=flops, transcendentals=0,
                           bytes_accessed=bytes_accessed)

    def _call(use_buffered):
        def const_spec(shape):
            # Weights/biases: whole array, same block every step.
            if use_buffered:
                return pl.BlockSpec(shape, lambda i: (0, 0),
                                    pipeline_mode=pl.Buffered(1))
            return pl.BlockSpec(shape, lambda i: (0, 0))

        in_specs = [pl.BlockSpec((tile_b, DIMS[0]), lambda i: (i, 0))]
        in_specs += [const_spec(p.shape) for p in flat_params]

        return pl.pallas_call(
            mlp_kernel,
            out_shape=jax.ShapeDtypeStruct((b_pad, PAD_DIMS[-1]), jnp.float32),
            grid_spec=pltpu.PrefetchScalarGridSpec(
                num_scalar_prefetch=0,
                grid=(b_pad // tile_b,),
                in_specs=in_specs,
                out_specs=pl.BlockSpec((tile_b, PAD_DIMS[-1]),
                                       lambda i: (i, 0)),
            ),
            compiler_params=pltpu.CompilerParams(
                dimension_semantics=("parallel",),
                vmem_limit_bytes=32 * 1024 * 1024,
            ),
            cost_estimate=cost,
        )(xp, *flat_params)

    try:
        out = _call(True)
    except Exception:
        # pl.Buffered(1) not accepted by this JAX build -> default buffering.
        out = _call(False)

    # Strip batch padding and the lane padding of the final layer (128 -> 10).
    return out[:B, :DIMS[-1]]


def init_params(key):
    """torch.nn.Linear default init: U(-1/sqrt(fan_in), 1/sqrt(fan_in)).
    Weights stored as [in, out] (already transposed for x @ W)."""
    params = []
    for idx in range(len(DIMS) - 1):
        fan_in, fan_out = DIMS[idx], DIMS[idx + 1]
        key, kw, kb = jax.random.split(key, 3)
        bound = 1.0 / math.sqrt(fan_in)
        w = jax.random.uniform(kw, (fan_in, fan_out), jnp.float32, -bound, bound)
        b = jax.random.uniform(kb, (1, fan_out), jnp.float32, -bound, bound)
        params.append((w, b))
    return params


def reference_forward(x, params):
    h = x.reshape(-1, DIMS[0]).astype(jnp.float32)
    for i, (w, b) in enumerate(params):
        h = h @ w + b
        if i < len(params) - 1:
            h = jnp.maximum(h, 0.0)
    return h


if __name__ == "__main__":
    key = jax.random.PRNGKey(0)
    kx, kp = jax.random.split(key)
    params = init_params(kp)

    # small MNIST-like batch: [B, 1, 28, 28] -> view(-1, 784)
    x = jax.random.normal(kx, (16, 1, 28, 28), jnp.float32)
    ref = reference_forward(x, params)

    # Exact path (f32 MXU), tight tolerance.
    f32_params = prepare_params(params, jnp.float32)
    out_f32 = jax.block_until_ready(net_forward(x, f32_params, jnp.float32))
    assert out_f32.shape == (16, 10), out_f32.shape
    assert jnp.allclose(out_f32, ref, atol=1e-3, rtol=1e-3), \
        float(jnp.max(jnp.abs(out_f32 - ref)))

    # Default fast path (bf16 weights/activations, f32 accumulation).
    bf16_params = prepare_params(params, jnp.bfloat16)
    out_bf16 = jax.block_until_ready(net_forward(x, bf16_params, jnp.bfloat16))
    assert out_bf16.shape == (16, 10), out_bf16.shape
    assert jnp.allclose(out_bf16, ref, atol=5e-2, rtol=5e-2), \
        float(jnp.max(jnp.abs(out_bf16 - ref)))

    # Larger batch: multi-step grid (two balanced 144-row tiles) + batch pad.
    x2 = jax.random.normal(kx, (272, 784), jnp.float32)
    ref2 = reference_forward(x2, params)
    out2 = jax.block_until_ready(net_forward(x2, bf16_params, jnp.bfloat16))
    assert out2.shape == (272, 10), out2.shape
    assert jnp.allclose(out2, ref2, atol=5e-2, rtol=5e-2), \
        float(jnp.max(jnp.abs(out2 - ref2)))

    print("KERNEL_OK")
</pallas_src>

<mosaic_0001>
module attributes {stable_mosaic.version = 11 : i64} {
  func.func @mlp_kernel(%arg0: i32, %arg1: memref<8x784xf32, #tpu.memory_space<vmem>>, %arg2: memref<784x512xf32, #tpu.memory_space<vmem>>, %arg3: memref<1x512xf32, #tpu.memory_space<vmem>>, %arg4: memref<512x256xf32, #tpu.memory_space<vmem>>, %arg5: memref<1x256xf32, #tpu.memory_space<vmem>>, %arg6: memref<256x128xf32, #tpu.memory_space<vmem>>, %arg7: memref<1x128xf32, #tpu.memory_space<vmem>>, %arg8: memref<128x128xf32, #tpu.memory_space<vmem>>, %arg9: memref<1x128xf32, #tpu.memory_space<vmem>>, %arg10: memref<128x128xf32, #tpu.memory_space<vmem>>, %arg11: memref<1x128xf32, #tpu.memory_space<vmem>>, %arg12: memref<8x128xf32, #tpu.memory_space<vmem>>) attributes {dimension_semantics = [#tpu.dimension_semantics<parallel>], iteration_bounds = array<i64: 2>, scalar_prefetch = 0 : i64, scratch_operands = 0 : i64, tpu.core_type = #tpu.core_type<tc>, window_params = [{transform_indices = @transform_0, window_bounds = array<i64: 8, 784>}, {pipeline_mode = #tpu.pipeline_mode<synchronous>, transform_indices = @transform_1, window_bounds = array<i64: 784, 512>}, {pipeline_mode = #tpu.pipeline_mode<synchronous>, transform_indices = @transform_2, window_bounds = array<i64: 1, 512>}, {pipeline_mode = #tpu.pipeline_mode<synchronous>, transform_indices = @transform_3, window_bounds = array<i64: 512, 256>}, {pipeline_mode = #tpu.pipeline_mode<synchronous>, transform_indices = @transform_4, window_bounds = array<i64: 1, 256>}, {pipeline_mode = #tpu.pipeline_mode<synchronous>, transform_indices = @transform_5, window_bounds = array<i64: 256, 128>}, {pipeline_mode = #tpu.pipeline_mode<synchronous>, transform_indices = @transform_6, window_bounds = array<i64: 1, 128>}, {pipeline_mode = #tpu.pipeline_mode<synchronous>, transform_indices = @transform_7, window_bounds = array<i64: 128, 128>}, {pipeline_mode = #tpu.pipeline_mode<synchronous>, transform_indices = @transform_8, window_bounds = array<i64: 1, 128>}, {pipeline_mode = #tpu.pipeline_mode<synchronous>, transform_indices = @transform_9, window_bounds = array<i64: 128, 128>}, {pipeline_mode = #tpu.pipeline_mode<synchronous>, transform_indices = @transform_10, window_bounds = array<i64: 1, 128>}, {transform_indices = @transform_11, window_bounds = array<i64: 8, 128>}]} {
    %c0 = arith.constant 0 : index
    %c0_0 = arith.constant 0 : index
    %0 = vector.load %arg1[%c0, %c0_0] : memref<8x784xf32, #tpu.memory_space<vmem>>, vector<8x784xf32>
    %c0_1 = arith.constant 0 : index
    %c0_2 = arith.constant 0 : index
    %1 = vector.load %arg2[%c0_1, %c0_2] : memref<784x512xf32, #tpu.memory_space<vmem>>, vector<784x512xf32>
    %cst = arith.constant dense<0.000000e+00> : vector<8x512xf32>
    %2 = tpu.matmul %0, %1, %cst {dimension_numbers = #tpu.dot_dimension_numbers<[1], [0], [0], [1], [0, 0, 1, 1], [], []>} : vector<8x784xf32>, vector<784x512xf32>, vector<8x512xf32> -> vector<8x512xf32>
    %c0_3 = arith.constant 0 : index
    %c0_4 = arith.constant 0 : index
    %3 = vector.load %arg3[%c0_3, %c0_4] : memref<1x512xf32, #tpu.memory_space<vmem>>, vector<1x512xf32>
    %4 = vector.broadcast %3 : vector<1x512xf32> to vector<8x512xf32>
    %5 = arith.addf %2, %4 : vector<8x512xf32>
    %cst_5 = arith.constant 0.000000e+00 : f32
    %6 = vector.broadcast %cst_5 : f32 to vector<8x512xf32>
    %7 = arith.maximumf %5, %6 : vector<8x512xf32>
    %c0_6 = arith.constant 0 : index
    %c0_7 = arith.constant 0 : index
    %8 = vector.load %arg4[%c0_6, %c0_7] : memref<512x256xf32, #tpu.memory_space<vmem>>, vector<512x256xf32>
    %cst_8 = arith.constant dense<0.000000e+00> : vector<8x256xf32>
    %9 = tpu.matmul %7, %8, %cst_8 {dimension_numbers = #tpu.dot_dimension_numbers<[1], [0], [0], [1], [0, 0, 1, 1], [], []>} : vector<8x512xf32>, vector<512x256xf32>, vector<8x256xf32> -> vector<8x256xf32>
    %c0_9 = arith.constant 0 : index
    %c0_10 = arith.constant 0 : index
    %10 = vector.load %arg5[%c0_9, %c0_10] : memref<1x256xf32, #tpu.memory_space<vmem>>, vector<1x256xf32>
    %11 = vector.broadcast %10 : vector<1x256xf32> to vector<8x256xf32>
    %12 = arith.addf %9, %11 : vector<8x256xf32>
    %cst_11 = arith.constant 0.000000e+00 : f32
    %13 = vector.broadcast %cst_11 : f32 to vector<8x256xf32>
    %14 = arith.maximumf %12, %13 : vector<8x256xf32>
    %c0_12 = arith.constant 0 : index
    %c0_13 = arith.constant 0 : index
    %15 = vector.load %arg6[%c0_12, %c0_13] : memref<256x128xf32, #tpu.memory_space<vmem>>, vector<256x128xf32>
    %cst_14 = arith.constant dense<0.000000e+00> : vector<8x128xf32>
    %16 = tpu.matmul %14, %15, %cst_14 {dimension_numbers = #tpu.dot_dimension_numbers<[1], [0], [0], [1], [0, 0, 1, 1], [], []>} : vector<8x256xf32>, vector<256x128xf32>, vector<8x128xf32> -> vector<8x128xf32>
    %c0_15 = arith.constant 0 : index
    %c0_16 = arith.constant 0 : index
    %17 = vector.load %arg7[%c0_15, %c0_16] : memref<1x128xf32, #tpu.memory_space<vmem>>, vector<1x128xf32>
    %18 = vector.broadcast %17 : vector<1x128xf32> to vector<8x128xf32>
    %19 = arith.addf %16, %18 : vector<8x128xf32>
    %cst_17 = arith.constant 0.000000e+00 : f32
    %20 = vector.broadcast %cst_17 : f32 to vector<8x128xf32>
    %21 = arith.maximumf %19, %20 : vector<8x128xf32>
    %c0_18 = arith.constant 0 : index
    %c0_19 = arith.constant 0 : index
    %22 = vector.load %arg8[%c0_18, %c0_19] : memref<128x128xf32, #tpu.memory_space<vmem>>, vector<128x128xf32>
    %cst_20 = arith.constant dense<0.000000e+00> : vector<8x128xf32>
    %23 = tpu.matmul %21, %22, %cst_20 {dimension_numbers = #tpu.dot_dimension_numbers<[1], [0], [0], [1], [0, 0, 1, 1], [], []>} : vector<8x128xf32>, vector<128x128xf32>, vector<8x128xf32> -> vector<8x128xf32>
    %c0_21 = arith.constant 0 : index
    %c0_22 = arith.constant 0 : index
    %24 = vector.load %arg9[%c0_21, %c0_22] : memref<1x128xf32, #tpu.memory_space<vmem>>, vector<1x128xf32>
    %25 = vector.broadcast %24 : vector<1x128xf32> to vector<8x128xf32>
    %26 = arith.addf %23, %25 : vector<8x128xf32>
    %cst_23 = arith.constant 0.000000e+00 : f32
    %27 = vector.broadcast %cst_23 : f32 to vector<8x128xf32>
    %28 = arith.maximumf %26, %27 : vector<8x128xf32>
    %c0_24 = arith.constant 0 : index
    %c0_25 = arith.constant 0 : index
    %29 = vector.load %arg10[%c0_24, %c0_25] : memref<128x128xf32, #tpu.memory_space<vmem>>, vector<128x128xf32>
    %cst_26 = arith.constant dense<0.000000e+00> : vector<8x128xf32>
    %30 = tpu.matmul %28, %29, %cst_26 {dimension_numbers = #tpu.dot_dimension_numbers<[1], [0], [0], [1], [0, 0, 1, 1], [], []>} : vector<8x128xf32>, vector<128x128xf32>, vector<8x128xf32> -> vector<8x128xf32>
    %c0_27 = arith.constant 0 : index
    %c0_28 = arith.constant 0 : index
    %31 = vector.load %arg11[%c0_27, %c0_28] : memref<1x128xf32, #tpu.memory_space<vmem>>, vector<1x128xf32>
    %32 = vector.broadcast %31 : vector<1x128xf32> to vector<8x128xf32>
    %33 = arith.addf %30, %32 : vector<8x128xf32>
    %c0_29 = arith.constant 0 : index
    %c0_30 = arith.constant 0 : index
    %34 = vector.load %arg12[%c0_29, %c0_30] : memref<8x128xf32, #tpu.memory_space<vmem>>, vector<8x128xf32>
    tpu.vector_store %arg12[%c0_29, %c0_30], %33 {strides = array<i32>} : memref<8x128xf32, #tpu.memory_space<vmem>>, vector<8x128xf32>,
    return
  }
  func.func @transform_0(%arg0: i32) -> (i32, i32) {
    %c0_i32 = arith.constant 0 : i32
    %c0_i32_0 = arith.constant 0 : i32
    return %arg0, %c0_i32 : i32, i32
  }
  func.func @transform_1(%arg0: i32) -> (i32, i32) {
    %c0_i32 = arith.constant 0 : i32
    %c0_i32_0 = arith.constant 0 : i32
    %c0_i32_1 = arith.constant 0 : i32
    return %c0_i32, %c0_i32_0 : i32, i32
  }
  func.func @transform_2(%arg0: i32) -> (i32, i32) {
    %c0_i32 = arith.constant 0 : i32
    %c0_i32_0 = arith.constant 0 : i32
    %c0_i32_1 = arith.constant 0 : i32
    return %c0_i32, %c0_i32_0 : i32, i32
  }
  func.func @transform_3(%arg0: i32) -> (i32, i32) {
    %c0_i32 = arith.constant 0 : i32
    %c0_i32_0 = arith.constant 0 : i32
    %c0_i32_1 = arith.constant 0 : i32
    return %c0_i32, %c0_i32_0 : i32, i32
  }
  func.func @transform_4(%arg0: i32) -> (i32, i32) {
    %c0_i32 = arith.constant 0 : i32
    %c0_i32_0 = arith.constant 0 : i32
    %c0_i32_1 = arith.constant 0 : i32
    return %c0_i32, %c0_i32_0 : i32, i32
  }
  func.func @transform_5(%arg0: i32) -> (i32, i32) {
    %c0_i32 = arith.constant 0 : i32
    %c0_i32_0 = arith.constant 0 : i32
    %c0_i32_1 = arith.constant 0 : i32
    return %c0_i32, %c0_i32_0 : i32, i32
  }
  func.func @transform_6(%arg0: i32) -> (i32, i32) {
    %c0_i32 = arith.constant 0 : i32
    %c0_i32_0 = arith.constant 0 : i32
    %c0_i32_1 = arith.constant 0 : i32
    return %c0_i32, %c0_i32_0 : i32, i32
  }
  func.func @transform_7(%arg0: i32) -> (i32, i32) {
    %c0_i32 = arith.constant 0 : i32
    %c0_i32_0 = arith.constant 0 : i32
    %c0_i32_1 = arith.constant 0 : i32
    return %c0_i32, %c0_i32_0 : i32, i32
  }
  func.func @transform_8(%arg0: i32) -> (i32, i32) {
    %c0_i32 = arith.constant 0 : i32
    %c0_i32_0 = arith.constant 0 : i32
    %c0_i32_1 = arith.constant 0 : i32
    return %c0_i32, %c0_i32_0 : i32, i32
  }
  func.func @transform_9(%arg0: i32) -> (i32, i32) {
    %c0_i32 = arith.constant 0 : i32
    %c0_i32_0 = arith.constant 0 : i32
    %c0_i32_1 = arith.constant 0 : i32
    return %c0_i32, %c0_i32_0 : i32, i32
  }
  func.func @transform_10(%arg0: i32) -> (i32, i32) {
    %c0_i32 = arith.constant 0 : i32
    %c0_i32_0 = arith.constant 0 : i32
    %c0_i32_1 = arith.constant 0 : i32
    return %c0_i32, %c0_i32_0 : i32, i32
  }
  func.func @transform_11(%arg0: i32) -> (i32, i32) {
    %c0_i32 = arith.constant 0 : i32
    %c0_i32_0 = arith.constant 0 : i32
    return %arg0, %c0_i32 : i32, i32
  }
}

module attributes {stable_mosaic.version = 11 : i64} {
  func.func @mlp_kernel(%arg0: i32, %arg1: memref<8x784xf32, #tpu.memory_space<vmem>>, %arg2: memref<784x512xf32, #tpu.memory_space<vmem>>, %arg3: memref<1x512xf32, #tpu.memory_space<vmem>>, %arg4: memref<512x256xf32, #tpu.memory_space<vmem>>, %arg5: memref<1x256xf32, #tpu.memory_space<vmem>>, %arg6: memref<256x128xf32, #tpu.memory_space<vmem>>, %arg7: memref<1x128xf32, #tpu.memory_space<vmem>>, %arg8: memref<128x128xf32, #tpu.memory_space<vmem>>, %arg9: memref<1x128xf32, #tpu.memory_space<vmem>>, %arg10: memref<128x128xf32, #tpu.memory_space<vmem>>, %arg11: memref<1x128xf32, #tpu.memory_space<vmem>>, %arg12: memref<8x128xf32, #tpu.memory_space<vmem>>) attributes {dimension_semantics = [#tpu.dimension_semantics<parallel>], iteration_bounds = array<i64: 2>, scalar_prefetch = 0 : i64, scratch_operands = 0 : i64, tpu.core_type = #tpu.core_type<tc>, window_params = [{transform_indices = @transform_0, window_bounds = array<i64: 8, 784>}, {pipeline_mode = #tpu.pipeline_mode<synchronous>, transform_indices = @transform_1, window_bounds = array<i64: 784, 512>}, {pipeline_mode = #tpu.pipeline_mode<synchronous>, transform_indices = @transform_2, window_bounds = array<i64: 1, 512>}, {pipeline_mode = #tpu.pipeline_mode<synchronous>, transform_indices = @transform_3, window_bounds = array<i64: 512, 256>}, {pipeline_mode = #tpu.pipeline_mode<synchronous>, transform_indices = @transform_4, window_bounds = array<i64: 1, 256>}, {pipeline_mode = #tpu.pipeline_mode<synchronous>, transform_indices = @transform_5, window_bounds = array<i64: 256, 128>}, {pipeline_mode = #tpu.pipeline_mode<synchronous>, transform_indices = @transform_6, window_bounds = array<i64: 1, 128>}, {pipeline_mode = #tpu.pipeline_mode<synchronous>, transform_indices = @transform_7, window_bounds = array<i64: 128, 128>}, {pipeline_mode = #tpu.pipeline_mode<synchronous>, transform_indices = @transform_8, window_bounds = array<i64: 1, 128>}, {pipeline_mode = #tpu.pipeline_mode<synchronous>, transform_indices = @transform_9, window_bounds = array<i64: 128, 128>}, {pipeline_mode = #tpu.pipeline_mode<synchronous>, transform_indices = @transform_10, window_bounds = array<i64: 1, 128>}, {transform_indices = @transform_11, window_bounds = array<i64: 8, 128>}]} {
    %c0 = arith.constant 0 : index
    %c0_0 = arith.constant 0 : index
    %0 = vector.load %arg1[%c0, %c0_0] : memref<8x784xf32, #tpu.memory_space<vmem>>, vector<8x784xf32>
    %c0_1 = arith.constant 0 : index
    %c0_2 = arith.constant 0 : index
    %1 = vector.load %arg2[%c0_1, %c0_2] : memref<784x512xf32, #tpu.memory_space<vmem>>, vector<784x512xf32>
    %cst = arith.constant dense<0.000000e+00> : vector<8x512xf32>
    %2 = tpu.matmul %0, %1, %cst {dimension_numbers = #tpu.dot_dimension_numbers<[1], [0], [0], [1], [0, 0, 1, 1], [], []>} : vector<8x784xf32>, vector<784x512xf32>, vector<8x512xf32> -> vector<8x512xf32>
    %c0_3 = arith.constant 0 : index
    %c0_4 = arith.constant 0 : index
    %3 = vector.load %arg3[%c0_3, %c0_4] : memref<1x512xf32, #tpu.memory_space<vmem>>, vector<1x512xf32>
    %4 = vector.broadcast %3 : vector<1x512xf32> to vector<8x512xf32>
    %5 = arith.addf %2, %4 : vector<8x512xf32>
    %cst_5 = arith.constant 0.000000e+00 : f32
    %6 = vector.broadcast %cst_5 : f32 to vector<8x512xf32>
    %7 = arith.maximumf %5, %6 : vector<8x512xf32>
    %c0_6 = arith.constant 0 : index
    %c0_7 = arith.constant 0 : index
    %8 = vector.load %arg4[%c0_6, %c0_7] : memref<512x256xf32, #tpu.memory_space<vmem>>, vector<512x256xf32>
    %cst_8 = arith.constant dense<0.000000e+00> : vector<8x256xf32>
    %9 = tpu.matmul %7, %8, %cst_8 {dimension_numbers = #tpu.dot_dimension_numbers<[1], [0], [0], [1], [0, 0, 1, 1], [], []>} : vector<8x512xf32>, vector<512x256xf32>, vector<8x256xf32> -> vector<8x256xf32>
    %c0_9 = arith.constant 0 : index
    %c0_10 = arith.constant 0 : index
    %10 = vector.load %arg5[%c0_9, %c0_10] : memref<1x256xf32, #tpu.memory_space<vmem>>, vector<1x256xf32>
    %11 = vector.broadcast %10 : vector<1x256xf32> to vector<8x256xf32>
    %12 = arith.addf %9, %11 : vector<8x256xf32>
    %cst_11 = arith.constant 0.000000e+00 : f32
    %13 = vector.broadcast %cst_11 : f32 to vector<8x256xf32>
    %14 = arith.maximumf %12, %13 : vector<8x256xf32>
    %c0_12 = arith.constant 0 : index
    %c0_13 = arith.constant 0 : index
    %15 = vector.load %arg6[%c0_12, %c0_13] : memref<256x128xf32, #tpu.memory_space<vmem>>, vector<256x128xf32>
    %cst_14 = arith.constant dense<0.000000e+00> : vector<8x128xf32>
    %16 = tpu.matmul %14, %15, %cst_14 {dimension_numbers = #tpu.dot_dimension_numbers<[1], [0], [0], [1], [0, 0, 1, 1], [], []>} : vector<8x256xf32>, vector<256x128xf32>, vector<8x128xf32> -> vector<8x128xf32>
    %c0_15 = arith.constant 0 : index
    %c0_16 = arith.constant 0 : index
    %17 = vector.load %arg7[%c0_15, %c0_16] : memref<1x128xf32, #tpu.memory_space<vmem>>, vector<1x128xf32>
    %18 = vector.broadcast %17 : vector<1x128xf32> to vector<8x128xf32>
    %19 = arith.addf %16, %18 : vector<8x128xf32>
    %cst_17 = arith.constant 0.000000e+00 : f32
    %20 = vector.broadcast %cst_17 : f32 to vector<8x128xf32>
    %21 = arith.maximumf %19, %20 : vector<8x128xf32>
    %c0_18 = arith.constant 0 : index
    %c0_19 = arith.constant 0 : index
    %22 = vector.load %arg8[%c0_18, %c0_19] : memref<128x128xf32, #tpu.memory_space<vmem>>, vector<128x128xf32>
    %cst_20 = arith.constant dense<0.000000e+00> : vector<8x128xf32>
    %23 = tpu.matmul %21, %22, %cst_20 {dimension_numbers = #tpu.dot_dimension_numbers<[1], [0], [0], [1], [0, 0, 1, 1], [], []>} : vector<8x128xf32>, vector<128x128xf32>, vector<8x128xf32> -> vector<8x128xf32>
    %c0_21 = arith.constant 0 : index
    %c0_22 = arith.constant 0 : index
    %24 = vector.load %arg9[%c0_21, %c0_22] : memref<1x128xf32, #tpu.memory_space<vmem>>, vector<1x128xf32>
    %25 = vector.broadcast %24 : vector<1x128xf32> to vector<8x128xf32>
    %26 = arith.addf %23, %25 : vector<8x128xf32>
    %cst_23 = arith.constant 0.000000e+00 : f32
    %27 = vector.broadcast %cst_23 : f32 to vector<8x128xf32>
    %28 = arith.maximumf %26, %27 : vector<8x128xf32>
    %c0_24 = arith.constant 0 : index
    %c0_25 = arith.constant 0 : index
    %29 = vector.load %arg10[%c0_24, %c0_25] : memref<128x128xf32, #tpu.memory_space<vmem>>, vector<128x128xf32>
    %cst_26 = arith.constant dense<0.000000e+00> : vector<8x128xf32>
    %30 = tpu.matmul %28, %29, %cst_26 {dimension_numbers = #tpu.dot_dimension_numbers<[1], [0], [0], [1], [0, 0, 1, 1], [], []>} : vector<8x128xf32>, vector<128x128xf32>, vector<8x128xf32> -> vector<8x128xf32>
    %c0_27 = arith.constant 0 : index
    %c0_28 = arith.constant 0 : index
    %31 = vector.load %arg11[%c0_27, %c0_28] : memref<1x128xf32, #tpu.memory_space<vmem>>, vector<1x128xf32>
    %32 = vector.broadcast %31 : vector<1x128xf32> to vector<8x128xf32>
    %33 = arith.addf %30, %32 : vector<8x128xf32>
    %c0_29 = arith.constant 0 : index
    %c0_30 = arith.constant 0 : index
    %34 = vector.load %arg12[%c0_29, %c0_30] : memref<8x128xf32, #tpu.memory_space<vmem>>, vector<8x128xf32>
    tpu.vector_store %arg12[%c0_29, %c0_30], %33 {strides = array<i32>} : memref<8x128xf32, #tpu.memory_space<vmem>>, vector<8x128xf32>,
    return
  }
  func.func @transform_0(%arg0: i32) -> (i32, i32) {
    %c0_i32 = arith.constant 0 : i32
    %c0_i32_0 = arith.constant 0 : i32
    return %arg0, %c0_i32 : i32, i32
  }
  func.func @transform_1(%arg0: i32) -> (i32, i32) {
    %c0_i32 = arith.constant 0 : i32
    %c0_i32_0 = arith.constant 0 : i32
    %c0_i32_1 = arith.constant 0 : i32
    return %c0_i32, %c0_i32_0 : i32, i32
  }
  func.func @transform_2(%arg0: i32) -> (i32, i32) {
    %c0_i32 = arith.constant 0 : i32
    %c0_i32_0 = arith.constant 0 : i32
    %c0_i32_1 = arith.constant 0 : i32
    return %c0_i32, %c0_i32_0 : i32, i32
  }
  func.func @transform_3(%arg0: i32) -> (i32, i32) {
    %c0_i32 = arith.constant 0 : i32
    %c0_i32_0 = arith.constant 0 : i32
    %c0_i32_1 = arith.constant 0 : i32
    return %c0_i32, %c0_i32_0 : i32, i32
  }
  func.func @transform_4(%arg0: i32) -> (i32, i32) {
    %c0_i32 = arith.constant 0 : i32
    %c0_i32_0 = arith.constant 0 : i32
    %c0_i32_1 = arith.constant 0 : i32
    return %c0_i32, %c0_i32_0 : i32, i32
  }
  func.func @transform_5(%arg0: i32) -> (i32, i32) {
    %c0_i32 = arith.constant 0 : i32
    %c0_i32_0 = arith.constant 0 : i32
    %c0_i32_1 = arith.constant 0 : i32
    return %c0_i32, %c0_i32_0 : i32, i32
  }
  func.func @transform_6(%arg0: i32) -> (i32, i32) {
    %c0_i32 = arith.constant 0 : i32
    %c0_i32_0 = arith.constant 0 : i32
    %c0_i32_1 = arith.constant 0 : i32
    return %c0_i32, %c0_i32_0 : i32, i32
  }
  func.func @transform_7(%arg0: i32) -> (i32, i32) {
    %c0_i32 = arith.constant 0 : i32
    %c0_i32_0 = arith.constant 0 : i32
    %c0_i32_1 = arith.constant 0 : i32
    return %c0_i32, %c0_i32_0 : i32, i32
  }
  func.func @transform_8(%arg0: i32) -> (i32, i32) {
    %c0_i32 = arith.constant 0 : i32
    %c0_i32_0 = arith.constant 0 : i32
    %c0_i32_1 = arith.constant 0 : i32
    return %c0_i32, %c0_i32_0 : i32, i32
  }
  func.func @transform_9(%arg0: i32) -> (i32, i32) {
    %c0_i32 = arith.constant 0 : i32
    %c0_i32_0 = arith.constant 0 : i32
    %c0_i32_1 = arith.constant 0 : i32
    return %c0_i32, %c0_i32_0 : i32, i32
  }
  func.func @transform_10(%arg0: i32) -> (i32, i32) {
    %c0_i32 = arith.constant 0 : i32
    %c0_i32_0 = arith.constant 0 : i32
    %c0_i32_1 = arith.constant 0 : i32
    return %c0_i32, %c0_i32_0 : i32, i32
  }
  func.func @transform_11(%arg0: i32) -> (i32, i32) {
    %c0_i32 = arith.constant 0 : i32
    %c0_i32_0 = arith.constant 0 : i32
    return %arg0, %c0_i32 : i32, i32
  }
}

</mosaic_0001>

<llo_original>
// kernel: tpu_custom_call.1
$region0: #{tpu_custom_call.1}
  #allocation0 [shape = 'u32[]', space=smem, size = 0x4, offset = 0x4, fixed_abs, tag = 'smem constant byte address 0x4 - core index']
  #allocation1 [shape = 'u32[144,128]{1,0:T(1,128)}', space=vmem, size = 0x12000, scoped, tag = 'internal scratch']
  %s0 = inlined_call_operand.hbm [shape: f32[16,784], index: 0, kind: input, shape index: {}]
  %s1 = inlined_call_operand.hbm [shape: f32[784,512], index: 1, kind: input, shape index: {}]
  %s2 = inlined_call_operand.hbm [shape: f32[1,512], index: 2, kind: input, shape index: {}]
  %s3 = inlined_call_operand.hbm [shape: f32[512,256], index: 3, kind: input, shape index: {}]
  %s4 = inlined_call_operand.hbm [shape: f32[1,256], index: 4, kind: input, shape index: {}]
  %s5 = inlined_call_operand.hbm [shape: f32[256,128], index: 5, kind: input, shape index: {}]
  %s6 = inlined_call_operand.hbm [shape: f32[1,128], index: 6, kind: input, shape index: {}]
  %s7 = inlined_call_operand.hbm [shape: f32[128,128], index: 7, kind: input, shape index: {}]
  %s8 = inlined_call_operand.hbm [shape: f32[1,128], index: 8, kind: input, shape index: {}]
  %s9 = inlined_call_operand.hbm [shape: f32[128,128], index: 9, kind: input, shape index: {}]
  %s10 = inlined_call_operand.hbm [shape: f32[1,128], index: 10, kind: input, shape index: {}]
  %s11 = inlined_call_operand.hbm [shape: f32[16,128], index: 11, kind: output, shape index: {}]
  %s12 = sld [smem:[#allocation0]]
  $region121: #{tpu_custom_call.1} parent=0
    _
  %s14 = ssub.s32 1, %s12
  %s15 = scalar_select 0, %s14, %s12
  $region1: #{tpu_custom_call.1} parent=0
    #allocation2 [shape = 'u8[57344]{0}', space=vmem, size = 0xe000, scoped, tag = 'input window, operand 0']
    #allocation3 [shape = 's32[2]{0}', space=sflag, size = 0x8, scoped, tag = 'scoped memory for tpu_custom_call.1']
    #allocation4 [shape = 's32[2]{0}', space=sflag, size = 0x8, scoped, tag = 'scoped memory for tpu_custom_call.1']
    #allocation5 [shape = 'u8[1605632]{0}', space=vmem, size = 0x188000, scoped, tag = 'input window, operand 1, single buffered']
    #allocation6 [shape = 's32[1]{0}', space=sflag, size = 0x4, scoped, tag = 'scoped memory for tpu_custom_call.1']
    #allocation7 [shape = 'u8[2048]{0}', space=vmem, size = 0x800, scoped, tag = 'input window, operand 2, single buffered']
    #allocation8 [shape = 'u8[524288]{0}', space=vmem, size = 0x80000, scoped, tag = 'input window, operand 3, single buffered']
    #allocation9 [shape = 's32[1]{0}', space=sflag, size = 0x4, scoped, tag = 'scoped memory for tpu_custom_call.1']
    #allocation10 [shape = 'u8[1024]{0}', space=vmem, size = 0x400, scoped, tag = 'input window, operand 4, single buffered']
    #allocation11 [shape = 'u8[131072]{0}', space=vmem, size = 0x20000, scoped, tag = 'input window, operand 5, single buffered']
    #allocation12 [shape = 's32[1]{0}', space=sflag, size = 0x4, scoped, tag = 'scoped memory for tpu_custom_call.1']
    #allocation13 [shape = 'u8[512]{0}', space=vmem, size = 0x400, scoped, tag = 'input window, operand 6, single buffered']
    #allocation14 [shape = 'u8[65536]{0}', space=vmem, size = 0x10000, scoped, tag = 'input window, operand 7, single buffered']
    #allocation15 [shape = 's32[1]{0}', space=sflag, size = 0x4, scoped, tag = 'scoped memory for tpu_custom_call.1']
    #allocation16 [shape = 'u8[512]{0}', space=vmem, size = 0x400, scoped, tag = 'input window, operand 8, single buffered']
    #allocation17 [shape = 'u8[65536]{0}', space=vmem, size = 0x10000, scoped, tag = 'input window, operand 9, single buffered']
    #allocation18 [shape = 's32[1]{0}', space=sflag, size = 0x4, scoped, tag = 'scoped memory for tpu_custom_call.1']
    #allocation19 [shape = 'u8[512]{0}', space=vmem, size = 0x400, scoped, tag = 'input window, operand 10, single buffered']
    #allocation20 [shape = 'u8[8192]{0}', space=vmem, size = 0x2000, scoped, tag = 'output window, operand 0']
    %16 = vsyncpa [#allocation3], 0
    %s17 = scalar_lea.sflag [#allocation3], 1
    %18 = vsyncpa %s17, 0
    %19 = vsyncpa [#allocation6], 0
    %20 = vsyncpa [#allocation9], 0
    %21 = vsyncpa [#allocation12], 0
    %22 = vsyncpa [#allocation15], 0
    %23 = vsyncpa [#allocation18], 0
    %24 = vsyncpa [#allocation4], 0
    %s25 = scalar_lea.sflag [#allocation4], 1
    %26 = vsyncpa %s25, 0
    loop: start=0, step=1, limit=4
    $region2: #{tpu_custom_call.1} parent=1 // loop_pre_header
      _
    $region3: #{tpu_custom_call.1} parent=1 // loop_header
      %s28 = sphi 0, %s32
      %p29 = scmp.ge.s32.totalorder %s28, 4
      %s38 = sphi 0, %s40
      %s41 = sphi 0, %s38
      %s42 = sphi 0, %s41
      %s58 = sphi 0, %s42
      %s62 = sphi 0, %s62
      %s64 = sphi 0, %s62
      %s65 = sphi 0, %s64
      %s79 = sphi 0, %s65
      %s83 = sphi 0, %s83
      %s85 = sphi 0, %s83
      %s86 = sphi 0, %s85
      %s100 = sphi 0, %s86
      %s104 = sphi 0, %s104
      %s106 = sphi 0, %s104
      %s107 = sphi 0, %s106
      %s121 = sphi 0, %s107
      %s125 = sphi 0, %s125
      %s127 = sphi 0, %s125
      %s128 = sphi 0, %s127
      %s142 = sphi 0, %s128
      %s146 = sphi 0, %s146
      %s148 = sphi 0, %s146
      %s149 = sphi 0, %s148
      %s163 = sphi 0, %s149
      %s167 = sphi 0, %s167
      %s169 = sphi 0, %s167
      %s170 = sphi 0, %s169
      %s184 = sphi 0, %s170
      %s188 = sphi 0, %s188
      %s190 = sphi 0, %s188
      %s191 = sphi 0, %s190
      %s205 = sphi 0, %s191
      %s209 = sphi 0, %s209
      %s211 = sphi 0, %s209
      %s212 = sphi 0, %s211
      %s226 = sphi 0, %s212
      %s230 = sphi 0, %s230
      %s232 = sphi 0, %s230
      %s233 = sphi 0, %s232
      %s247 = sphi 0, %s233
      %s251 = sphi 0, %s251
      %s253 = sphi 0, %s251
      %s254 = sphi 0, %s253
      %s268 = sphi 0, %s254
      %s274 = sphi 0, %s276
      %s277 = sphi 0, %s274
      %s278 = sphi 0, %s277
      %s294 = sphi 0, %s278
    $region4: #{tpu_custom_call.1} parent=1 // loop_header_branch
      %31 = sbr.rel (%p29) target = $region8
    $region5: #{tpu_custom_call.1} parent=1 // loop_body
      %s33 = ssub.s32 %s28, 1
      %s34 = ssub.s32 %s28, 2
      %s35 = sadd.s32 %s28, 1
      %s36 = ssub.s32 %s28, %s35
      %p37 = scmp.eq.s32.totalorder %s36, 0
      %s39 = sadd.s32 %s38, 1
      %s40 = scalar_select %p37, %s38, %s39
      %p43 = pneg %p37
      %p44 = scmp.eq.s32.totalorder %s28, 1
      %p45 = por %p43, %p44
      %p46 = scmp.ne.s32.totalorder %s38, %s41
      %p47 = scmp.eq.s32.totalorder %s28, 0
      %p48 = por %p46, %p47
      %p49 = scmp.ne.s32.totalorder %s38, %s41
      %p50 = scmp.eq.s32.totalorder %s33, 1
      %p51 = por %p49, %p50
      %p52 = scmp.ne.s32.totalorder %s41, %s42
      %p53 = scmp.eq.s32.totalorder %s33, 0
      %p54 = por %p52, %p53
      %p55 = scmp.ne.s32.totalorder %s41, %s42
      %p56 = scmp.eq.s32.totalorder %s34, 1
      %p57 = por %p55, %p56
      %p59 = scmp.ne.s32.totalorder %s42, %s58
      %p60 = scmp.eq.s32.totalorder %s34, 0
      %p61 = por %p59, %p60
      %s63 = sadd.s32 %s62, 1
      %p66 = scmp.eq.s32.totalorder %s28, 1
      %p67 = scmp.ne.s32.totalorder %s62, %s64
      %p68 = scmp.eq.s32.totalorder %s28, 0
      %p69 = por %p67, %p68
      %p70 = scmp.ne.s32.totalorder %s62, %s64
      %p71 = scmp.eq.s32.totalorder %s33, 1
      %p72 = por %p70, %p71
      %p73 = scmp.ne.s32.totalorder %s64, %s65
      %p74 = scmp.eq.s32.totalorder %s33, 0
      %p75 = por %p73, %p74
      %p76 = scmp.ne.s32.totalorder %s64, %s65
      %p77 = scmp.eq.s32.totalorder %s34, 1
      %p78 = por %p76, %p77
      %p80 = scmp.ne.s32.totalorder %s65, %s79
      %p81 = scmp.eq.s32.totalorder %s34, 0
      %p82 = por %p80, %p81
      %s84 = sadd.s32 %s83, 1
      %p87 = scmp.eq.s32.totalorder %s28, 1
      %p88 = scmp.ne.s32.totalorder %s83, %s85
      %p89 = scmp.eq.s32.totalorder %s28, 0
      %p90 = por %p88, %p89
      %p91 = scmp.ne.s32.totalorder %s83, %s85
      %p92 = scmp.eq.s32.totalorder %s33, 1
      %p93 = por %p91, %p92
      %p94 = scmp.ne.s32.totalorder %s85, %s86
      %p95 = scmp.eq.s32.totalorder %s33, 0
      %p96 = por %p94, %p95
      %p97 = scmp.ne.s32.totalorder %s85, %s86
      %p98 = scmp.eq.s32.totalorder %s34, 1
      %p99 = por %p97, %p98
      %p101 = scmp.ne.s32.totalorder %s86, %s100
      %p102 = scmp.eq.s32.totalorder %s34, 0
      %p103 = por %p101, %p102
      %s105 = sadd.s32 %s104, 1
      %p108 = scmp.eq.s32.totalorder %s28, 1
      %p109 = scmp.ne.s32.totalorder %s104, %s106
      %p110 = scmp.eq.s32.totalorder %s28, 0
      %p111 = por %p109, %p110
      %p112 = scmp.ne.s32.totalorder %s104, %s106
      %p113 = scmp.eq.s32.totalorder %s33, 1
      %p114 = por %p112, %p113
      %p115 = scmp.ne.s32.totalorder %s106, %s107
      %p116 = scmp.eq.s32.totalorder %s33, 0
      %p117 = por %p115, %p116
      %p118 = scmp.ne.s32.totalorder %s106, %s107
      %p119 = scmp.eq.s32.totalorder %s34, 1
      %p120 = por %p118, %p119
      %p122 = scmp.ne.s32.totalorder %s107, %s121
      %p123 = scmp.eq.s32.totalorder %s34, 0
      %p124 = por %p122, %p123
      %s126 = sadd.s32 %s125, 1
      %p129 = scmp.eq.s32.totalorder %s28, 1
      %p130 = scmp.ne.s32.totalorder %s125, %s127
      %p131 = scmp.eq.s32.totalorder %s28, 0
      %p132 = por %p130, %p131
      %p133 = scmp.ne.s32.totalorder %s125, %s127
      %p134 = scmp.eq.s32.totalorder %s33, 1
      %p135 = por %p133, %p134
      %p136 = scmp.ne.s32.totalorder %s127, %s128
      %p137 = scmp.eq.s32.totalorder %s33, 0
      %p138 = por %p136, %p137
      %p139 = scmp.ne.s32.totalorder %s127, %s128
      %p140 = scmp.eq.s32.totalorder %s34, 1
      %p141 = por %p139, %p140
      %p143 = scmp.ne.s32.totalorder %s128, %s142
      %p144 = scmp.eq.s32.totalorder %s34, 0
      %p145 = por %p143, %p144
      %s147 = sadd.s32 %s146, 1
      %p150 = scmp.eq.s32.totalorder %s28, 1
      %p151 = scmp.ne.s32.totalorder %s146, %s148
      %p152 = scmp.eq.s32.totalorder %s28, 0
      %p153 = por %p151, %p152
      %p154 = scmp.ne.s32.totalorder %s146, %s148
      %p155 = scmp.eq.s32.totalorder %s33, 1
      %p156 = por %p154, %p155
      %p157 = scmp.ne.s32.totalorder %s148, %s149
      %p158 = scmp.eq.s32.totalorder %s33, 0
      %p159 = por %p157, %p158
      %p160 = scmp.ne.s32.totalorder %s148, %s149
      %p161 = scmp.eq.s32.totalorder %s34, 1
      %p162 = por %p160, %p161
      %p164 = scmp.ne.s32.totalorder %s149, %s163
      %p165 = scmp.eq.s32.totalorder %s34, 0
      %p166 = por %p164, %p165
      %s168 = sadd.s32 %s167, 1
      %p171 = scmp.eq.s32.totalorder %s28, 1
      %p172 = scmp.ne.s32.totalorder %s167, %s169
      %p173 = scmp.eq.s32.totalorder %s28, 0
      %p174 = por %p172, %p173
      %p175 = scmp.ne.s32.totalorder %s167, %s169
      %p176 = scmp.eq.s32.totalorder %s33, 1
      %p177 = por %p175, %p176
      %p178 = scmp.ne.s32.totalorder %s169, %s170
      %p179 = scmp.eq.s32.totalorder %s33, 0
      %p180 = por %p178, %p179
      %p181 = scmp.ne.s32.totalorder %s169, %s170
      %p182 = scmp.eq.s32.totalorder %s34, 1
      %p183 = por %p181, %p182
      %p185 = scmp.ne.s32.totalorder %s170, %s184
      %p186 = scmp.eq.s32.totalorder %s34, 0
      %p187 = por %p185, %p186
      %s189 = sadd.s32 %s188, 1
      %p192 = scmp.eq.s32.totalorder %s28, 1
      %p193 = scmp.ne.s32.totalorder %s188, %s190
      %p194 = scmp.eq.s32.totalorder %s28, 0
      %p195 = por %p193, %p194
      %p196 = scmp.ne.s32.totalorder %s188, %s190
      %p197 = scmp.eq.s32.totalorder %s33, 1
      %p198 = por %p196, %p197
      %p199 = scmp.ne.s32.totalorder %s190, %s191
      %p200 = scmp.eq.s32.totalorder %s33, 0
      %p201 = por %p199, %p200
      %p202 = scmp.ne.s32.totalorder %s190, %s191
      %p203 = scmp.eq.s32.totalorder %s34, 1
      %p204 = por %p202, %p203
      %p206 = scmp.ne.s32.totalorder %s191, %s205
      %p207 = scmp.eq.s32.totalorder %s34, 0
      %p208 = por %p206, %p207
      %s210 = sadd.s32 %s209, 1
      %p213 = scmp.eq.s32.totalorder %s28, 1
      %p214 = scmp.ne.s32.totalorder %s209, %s211
      %p215 = scmp.eq.s32.totalorder %s28, 0
      %p216 = por %p214, %p215
      %p217 = scmp.ne.s32.totalorder %s209, %s211
      %p218 = scmp.eq.s32.totalorder %s33, 1
      %p219 = por %p217, %p218
      %p220 = scmp.ne.s32.totalorder %s211, %s212
      %p221 = scmp.eq.s32.totalorder %s33, 0
      %p222 = por %p220, %p221
      %p223 = scmp.ne.s32.totalorder %s211, %s212
      %p224 = scmp.eq.s32.totalorder %s34, 1
      %p225 = por %p223, %p224
      %p227 = scmp.ne.s32.totalorder %s212, %s226
      %p228 = scmp.eq.s32.totalorder %s34, 0
      %p229 = por %p227, %p228
      %s231 = sadd.s32 %s230, 1
      %p234 = scmp.eq.s32.totalorder %s28, 1
      %p235 = scmp.ne.s32.totalorder %s230, %s232
      %p236 = scmp.eq.s32.totalorder %s28, 0
      %p237 = por %p235, %p236
      %p238 = scmp.ne.s32.totalorder %s230, %s232
      %p239 = scmp.eq.s32.totalorder %s33, 1
      %p240 = por %p238, %p239
      %p241 = scmp.ne.s32.totalorder %s232, %s233
      %p242 = scmp.eq.s32.totalorder %s33, 0
      %p243 = por %p241, %p242
      %p244 = scmp.ne.s32.totalorder %s232, %s233
      %p245 = scmp.eq.s32.totalorder %s34, 1
      %p246 = por %p244, %p245
      %p248 = scmp.ne.s32.totalorder %s233, %s247
      %p249 = scmp.eq.s32.totalorder %s34, 0
      %p250 = por %p248, %p249
      %s252 = sadd.s32 %s251, 1
      %p255 = scmp.eq.s32.totalorder %s28, 1
      %p256 = scmp.ne.s32.totalorder %s251, %s253
      %p257 = scmp.eq.s32.totalorder %s28, 0
      %p258 = por %p256, %p257
      %p259 = scmp.ne.s32.totalorder %s251, %s253
      %p260 = scmp.eq.s32.totalorder %s33, 1
      %p261 = por %p259, %p260
      %p262 = scmp.ne.s32.totalorder %s253, %s254
      %p263 = scmp.eq.s32.totalorder %s33, 0
      %p264 = por %p262, %p263
      %p265 = scmp.ne.s32.totalorder %s253, %s254
      %p266 = scmp.eq.s32.totalorder %s34, 1
      %p267 = por %p265, %p266
      %p269 = scmp.ne.s32.totalorder %s254, %s268
      %p270 = scmp.eq.s32.totalorder %s34, 0
      %p271 = por %p269, %p270
      %s272 = ssub.s32 %s28, %s35
      %p273 = scmp.eq.s32.totalorder %s272, 0
      %s275 = sadd.s32 %s274, 1
      %s276 = scalar_select %p273, %s274, %s275
      %p279 = pneg %p273
      %p280 = scmp.eq.s32.totalorder %s28, 1
      %p281 = por %p279, %p280
      %p282 = scmp.ne.s32.totalorder %s274, %s277
      %p283 = scmp.eq.s32.totalorder %s28, 0
      %p284 = por %p282, %p283
      %p285 = scmp.ne.s32.totalorder %s274, %s277
      %p286 = scmp.eq.s32.totalorder %s33, 1
      %p287 = por %p285, %p286
      %p288 = scmp.ne.s32.totalorder %s277, %s278
      %p289 = scmp.eq.s32.totalorder %s33, 0
      %p290 = por %p288, %p289
      %p291 = scmp.ne.s32.totalorder %s277, %s278
      %p292 = scmp.eq.s32.totalorder %s34, 1
      %p293 = por %p291, %p292
      %p295 = scmp.ne.s32.totalorder %s278, %s294
      %p296 = scmp.eq.s32.totalorder %s34, 0
      %p297 = por %p295, %p296
      %p298 = scmp.le.s32.totalorder 1, %s28
      %p299 = scmp.lt.s32.totalorder %s28, 3
      %p300 = pnand %p298, %p299
      %p301 = pneg %p300
      // Predicated region
      $region9: #{tpu_custom_call.1} parent=5 // pred_check
        _
      $region10: #{tpu_custom_call.1} parent=5 // pred_check_branch
        %303 = sbr.rel (%p300) target = $region12
      $region11: #{tpu_custom_call.1} parent=5 // pred_region
        %s304 = ssub.s32 %s28, 1
        // Predicated region
        $region13: #{tpu_custom_call.1} parent=11 // pred_check
          %p305 = pneg %p75
        $region14: #{tpu_custom_call.1} parent=11 // pred_check_branch
          %307 = sbr.rel (%p305) target = $region16
        $region15: #{tpu_custom_call.1} parent=11 // pred_region
          %s309 = ssub.s32 50176, 50176
          %310 = vsyncadd [#allocation6], %s309
          %s311 = sshll.u32 [#allocation5], 4
          %s312 = int_to_ptr.vmem [resolvable:$true] %s311
          %317 = dma.hbm_to_vmem [thread:$0]  %s1, 50176, %s312, [#allocation6], 512, 512, 32
        $region16: #{tpu_custom_call.1} parent=11 // pred_fallthru
          _
        // Predicated region
        $region17: #{tpu_custom_call.1} parent=11 // pred_check
          %p318 = pneg %p96
        $region18: #{tpu_custom_call.1} parent=11 // pred_check_branch
          %320 = sbr.rel (%p318) target = $region20
        $region19: #{tpu_custom_call.1} parent=11 // pred_region
          %s322 = ssub.s32 64, 64
          %323 = vsyncadd [#allocation6], %s322
          %s325 = sshll.u32 [#allocation7], 4
          %s326 = int_to_ptr.vmem [resolvable:$true] %s325
          %328 = dma.hbm_to_vmem [thread:$0]  %s2, 64, %s326, [#allocation6]
        $region20: #{tpu_custom_call.1} parent=11 // pred_fallthru
          _
        // Predicated region
        $region21: #{tpu_custom_call.1} parent=11 // pred_check
          %p329 = pneg %p117
        $region22: #{tpu_custom_call.1} parent=11 // pred_check_branch
          %331 = sbr.rel (%p329) target = $region24
        $region23: #{tpu_custom_call.1} parent=11 // pred_region
          %s333 = ssub.s32 16384, 16384
          %334 = vsyncadd [#allocation9], %s333
          %s335 = sshll.u32 [#allocation8], 4
          %s336 = int_to_ptr.vmem [resolvable:$true] %s335
          %341 = dma.hbm_to_vmem [thread:$0]  %s3, 16384, %s336, [#allocation9], 256, 256, 16
        $region24: #{tpu_custom_call.1} parent=11 // pred_fallthru
          _
        // Predicated region
        $region25: #{tpu_custom_call.1} parent=11 // pred_check
          %p342 = pneg %p138
        $region26: #{tpu_custom_call.1} parent=11 // pred_check_branch
          %344 = sbr.rel (%p342) target = $region28
        $region27: #{tpu_custom_call.1} parent=11 // pred_region
          %s346 = ssub.s32 32, 32
          %347 = vsyncadd [#allocation9], %s346
          %s349 = sshll.u32 [#allocation10], 4
          %s350 = int_to_ptr.vmem [resolvable:$true] %s349
          %352 = dma.hbm_to_vmem [thread:$0]  %s4, 32, %s350, [#allocation9]
        $region28: #{tpu_custom_call.1} parent=11 // pred_fallthru
          _
        // Predicated region
        $region29: #{tpu_custom_call.1} parent=11 // pred_check
          %p353 = pneg %p159
        $region30: #{tpu_custom_call.1} parent=11 // pred_check_branch
          %355 = sbr.rel (%p353) target = $region32
        $region31: #{tpu_custom_call.1} parent=11 // pred_region
          %s357 = ssub.s32 4096, 4096
          %358 = vsyncadd [#allocation12], %s357
          %s359 = sshll.u32 [#allocation11], 4
          %s360 = int_to_ptr.vmem [resolvable:$true] %s359
          %365 = dma.hbm_to_vmem [thread:$0]  %s5, 4096, %s360, [#allocation12], 128, 128, 8
        $region32: #{tpu_custom_call.1} parent=11 // pred_fallthru
          _
        // Predicated region
        $region33: #{tpu_custom_call.1} parent=11 // pred_check
          %p366 = pneg %p180
        $region34: #{tpu_custom_call.1} parent=11 // pred_check_branch
          %368 = sbr.rel (%p366) target = $region36
        $region35: #{tpu_custom_call.1} parent=11 // pred_region
          %s370 = ssub.s32 16, 16
          %371 = vsyncadd [#allocation12], %s370
          %s373 = sshll.u32 [#allocation13], 4
          %s374 = int_to_ptr.vmem [resolvable:$true] %s373
          %376 = dma.hbm_to_vmem [thread:$0]  %s6, 16, %s374, [#allocation12]
        $region36: #{tpu_custom_call.1} parent=11 // pred_fallthru
          _
        // Predicated region
        $region37: #{tpu_custom_call.1} parent=11 // pred_check
          %p377 = pneg %p201
        $region38: #{tpu_custom_call.1} parent=11 // pred_check_branch
          %379 = sbr.rel (%p377) target = $region40
        $region39: #{tpu_custom_call.1} parent=11 // pred_region
          %s381 = ssub.s32 2048, 2048
          %382 = vsyncadd [#allocation15], %s381
          %s383 = sshll.u32 [#allocation14], 4
          %s384 = int_to_ptr.vmem [resolvable:$true] %s383
          %389 = dma.hbm_to_vmem [thread:$0]  %s7, 2048, %s384, [#allocation15], 128, 128, 8
        $region40: #{tpu_custom_call.1} parent=11 // pred_fallthru
          _
        // Predicated region
        $region41: #{tpu_custom_call.1} parent=11 // pred_check
          %p390 = pneg %p222
        $region42: #{tpu_custom_call.1} parent=11 // pred_check_branch
          %392 = sbr.rel (%p390) target = $region44
        $region43: #{tpu_custom_call.1} parent=11 // pred_region
          %s394 = ssub.s32 16, 16
          %395 = vsyncadd [#allocation15], %s394
          %s397 = sshll.u32 [#allocation16], 4
          %s398 = int_to_ptr.vmem [resolvable:$true] %s397
          %400 = dma.hbm_to_vmem [thread:$0]  %s8, 16, %s398, [#allocation15]
        $region44: #{tpu_custom_call.1} parent=11 // pred_fallthru
          _
        // Predicated region
        $region45: #{tpu_custom_call.1} parent=11 // pred_check
          %p401 = pneg %p243
        $region46: #{tpu_custom_call.1} parent=11 // pred_check_branch
          %403 = sbr.rel (%p401) target = $region48
        $region47: #{tpu_custom_call.1} parent=11 // pred_region
          %s405 = ssub.s32 2048, 2048
          %406 = vsyncadd [#allocation18], %s405
          %s407 = sshll.u32 [#allocation17], 4
          %s408 = int_to_ptr.vmem [resolvable:$true] %s407
          %413 = dma.hbm_to_vmem [thread:$0]  %s9, 2048, %s408, [#allocation18], 128, 128, 8
        $region48: #{tpu_custom_call.1} parent=11 // pred_fallthru
          _
        // Predicated region
        $region49: #{tpu_custom_call.1} parent=11 // pred_check
          %p414 = pneg %p264
        $region50: #{tpu_custom_call.1} parent=11 // pred_check_branch
          %416 = sbr.rel (%p414) target = $region52
        $region51: #{tpu_custom_call.1} parent=11 // pred_region
          %s418 = ssub.s32 16, 16
          %419 = vsyncadd [#allocation18], %s418
          %s421 = sshll.u32 [#allocation19], 4
          %s422 = int_to_ptr.vmem [resolvable:$true] %s421
          %424 = dma.hbm_to_vmem [thread:$0]  %s10, 16, %s422, [#allocation18]
        $region52: #{tpu_custom_call.1} parent=11 // pred_fallthru
          _
      $region12: #{tpu_custom_call.1} parent=5 // pred_fallthru
        _
      %p425 = scmp.lt.s32.totalorder %s28, 2
      // Predicated region
      $region53: #{tpu_custom_call.1} parent=5 // pred_check
        %p426 = pneg %p425
      $region54: #{tpu_custom_call.1} parent=5 // pred_check_branch
        %428 = sbr.rel (%p426) target = $region56
      $region55: #{tpu_custom_call.1} parent=5 // pred_region
        // Predicated region
        $region57: #{tpu_custom_call.1} parent=55 // pred_check
          %p429 = pneg %p48
        $region58: #{tpu_custom_call.1} parent=55 // pred_check_branch
          %431 = sbr.rel (%p429) target = $region60
        $region59: #{tpu_custom_call.1} parent=55 // pred_region
          %s432 = sand.u32 %s38, 1
          %s433 = scalar_lea.sflag [#allocation3], %s432
          %s434 = sand.u32 %s38, 1
          %s435 = smul.addr %s434, 56
          %s436 = scalar_lea.vmem [#allocation2], %s435
          %s438 = ssub.s32 896, 896
          %439 = vsyncadd %s433, %s438
          %s440 = smul.addr %s28, 7
          %s441 = smul.addr %s440, 128
          %s442 = scalar_lea.hbm %s0, %s441
          %s444 = sshll.u32 %s436, 4
          %s445 = int_to_ptr.vmem [resolvable:$true] %s444
          %447 = dma.hbm_to_vmem [thread:$0]  %s442, 896, %s445, %s433
        $region60: #{tpu_custom_call.1} parent=55 // pred_fallthru
          _
      $region56: #{tpu_custom_call.1} parent=5 // pred_fallthru
        _
      %p448 = scmp.le.s32.totalorder 1, %s28
      %p449 = scmp.lt.s32.totalorder %s28, 3
      %p450 = pnand %p448, %p449
      %p451 = pneg %p450
      // Predicated region
      $region61: #{tpu_custom_call.1} parent=5 // pred_check
        _
      $region62: #{tpu_custom_call.1} parent=5 // pred_check_branch
        %453 = sbr.rel (%p450) target = $region64
      $region63: #{tpu_custom_call.1} parent=5 // pred_region
        %s454 = ssub.s32 %s28, 1
        %s455 = sand.u32 %s41, 1
        %s456 = scalar_lea.sflag [#allocation3], %s455
        %s457 = sand.u32 %s41, 1
        %s458 = smul.addr %s457, 56
        %s459 = scalar_lea.vmem [#allocation2], %s458
        // Predicated region
        $region65: #{tpu_custom_call.1} parent=63 // pred_check
          %p460 = pneg %p54
        $region66: #{tpu_custom_call.1} parent=63 // pred_check_branch
          %462 = sbr.rel (%p460) target = $region68
        $region67: #{tpu_custom_call.1} parent=63 // pred_region
          %463 = dma.done %s456, 896
        $region68: #{tpu_custom_call.1} parent=63 // pred_fallthru
          _
        // Predicated region
        $region69: #{tpu_custom_call.1} parent=63 // pred_check
          %p464 = pneg %p75
        $region70: #{tpu_custom_call.1} parent=63 // pred_check_branch
          %466 = sbr.rel (%p464) target = $region72
        $region71: #{tpu_custom_call.1} parent=63 // pred_region
          %467 = dma.done [#allocation6], 50176
        $region72: #{tpu_custom_call.1} parent=63 // pred_fallthru
          _
        // Predicated region
        $region73: #{tpu_custom_call.1} parent=63 // pred_check
          %p468 = pneg %p96
        $region74: #{tpu_custom_call.1} parent=63 // pred_check_branch
          %470 = sbr.rel (%p468) target = $region76
        $region75: #{tpu_custom_call.1} parent=63 // pred_region
          %471 = dma.done [#allocation6], 64
        $region76: #{tpu_custom_call.1} parent=63 // pred_fallthru
          _
        // Predicated region
        $region77: #{tpu_custom_call.1} parent=63 // pred_check
          %p472 = pneg %p117
        $region78: #{tpu_custom_call.1} parent=63 // pred_check_branch
          %474 = sbr.rel (%p472) target = $region80
        $region79: #{tpu_custom_call.1} parent=63 // pred_region
          %475 = dma.done [#allocation9], 16384
        $region80: #{tpu_custom_call.1} parent=63 // pred_fallthru
          _
        // Predicated region
        $region81: #{tpu_custom_call.1} parent=63 // pred_check
          %p476 = pneg %p138
        $region82: #{tpu_custom_call.1} parent=63 // pred_check_branch
          %478 = sbr.rel (%p476) target = $region84
        $region83: #{tpu_custom_call.1} parent=63 // pred_region
          %479 = dma.done [#allocation9], 32
        $region84: #{tpu_custom_call.1} parent=63 // pred_fallthru
          _
        // Predicated region
        $region85: #{tpu_custom_call.1} parent=63 // pred_check
          %p480 = pneg %p159
        $region86: #{tpu_custom_call.1} parent=63 // pred_check_branch
          %482 = sbr.rel (%p480) target = $region88
        $region87: #{tpu_custom_call.1} parent=63 // pred_region
          %483 = dma.done [#allocation12], 4096
        $region88: #{tpu_custom_call.1} parent=63 // pred_fallthru
          _
        // Predicated region
        $region89: #{tpu_custom_call.1} parent=63 // pred_check
          %p484 = pneg %p180
        $region90: #{tpu_custom_call.1} parent=63 // pred_check_branch
          %486 = sbr.rel (%p484) target = $region92
        $region91: #{tpu_custom_call.1} parent=63 // pred_region
          %487 = dma.done [#allocation12], 16
        $region92: #{tpu_custom_call.1} parent=63 // pred_fallthru
          _
        // Predicated region
        $region93: #{tpu_custom_call.1} parent=63 // pred_check
          %p488 = pneg %p201
        $region94: #{tpu_custom_call.1} parent=63 // pred_check_branch
          %490 = sbr.rel (%p488) target = $region96
        $region95: #{tpu_custom_call.1} parent=63 // pred_region
          %491 = dma.done [#allocation15], 2048
        $region96: #{tpu_custom_call.1} parent=63 // pred_fallthru
          _
        // Predicated region
        $region97: #{tpu_custom_call.1} parent=63 // pred_check
          %p492 = pneg %p222
        $region98: #{tpu_custom_call.1} parent=63 // pred_check_branch
          %494 = sbr.rel (%p492) target = $region100
        $region99: #{tpu_custom_call.1} parent=63 // pred_region
          %495 = dma.done [#allocation15], 16
        $region100: #{tpu_custom_call.1} parent=63 // pred_fallthru
          _
        // Predicated region
        $region101: #{tpu_custom_call.1} parent=63 // pred_check
          %p496 = pneg %p243
        $region102: #{tpu_custom_call.1} parent=63 // pred_check_branch
          %498 = sbr.rel (%p496) target = $region104
        $region103: #{tpu_custom_call.1} parent=63 // pred_region
          %499 = dma.done [#allocation18], 2048
        $region104: #{tpu_custom_call.1} parent=63 // pred_fallthru
          _
        // Predicated region
        $region105: #{tpu_custom_call.1} parent=63 // pred_check
          %p500 = pneg %p264
        $region106: #{tpu_custom_call.1} parent=63 // pred_check_branch
          %502 = sbr.rel (%p500) target = $region108
        $region107: #{tpu_custom_call.1} parent=63 // pred_region
          %503 = dma.done [#allocation18], 16
        $region108: #{tpu_custom_call.1} parent=63 // pred_fallthru
          _
        %s504 = sand.u32 %s41, 1
        %s505 = scalar_lea.sflag [#allocation3], %s504
        %s506 = sand.u32 %s41, 1
        %s507 = smul.addr %s506, 56
        %s508 = scalar_lea.vmem [#allocation2], %s507
        %p509 = pneg %p54
        %p510 = pneg %p51
        %p511 = pneg %p75
        %p512 = pneg %p72
        %p513 = pneg %p96
        %p514 = pneg %p93
        %p515 = pneg %p117
        %p516 = pneg %p114
        %p517 = pneg %p138
        %p518 = pneg %p135
        %p519 = pneg %p159
        %p520 = pneg %p156
        %p521 = pneg %p180
        %p522 = pneg %p177
        %p523 = pneg %p201
        %p524 = pneg %p198
        %p525 = pneg %p222
        %p526 = pneg %p219
        %p527 = pneg %p243
        %p528 = pneg %p240
        %p529 = pneg %p264
        %p530 = pneg %p261
        %p531 = pneg %p290
        %p532 = pneg %p287
        %s533 = sand.u32 %s277, 1
        %s534 = scalar_lea.sflag [#allocation4], %s533
        %s535 = sand.u32 %s277, 1
        %s536 = smul.addr %s535, 8
        %s537 = scalar_lea.vmem [#allocation20], %s536
        %v538 = vld [vmem:[%s459] sm:$0xff]
        %v539 = vld [vmem:[%s459 + $0x8] sm:$0xff]
        %v540 = vld [vmem:[%s459 + $0x10] sm:$0xff]
        %v541 = vld [vmem:[%s459 + $0x18] sm:$0xff]
        %v542 = vld [vmem:[%s459 + $0x20] sm:$0xff]
        %v543 = vld [vmem:[%s459 + $0x28] sm:$0xff]
        %v544 = vld [vmem:[%s459 + $0x30] sm:$0xff]
        %v545 = vld [vmem:[#allocation5] sm:$0xff]
        %v546 = vld [vmem:[#allocation5 + $0x8] sm:$0xff]
        %v547 = vld [vmem:[#allocation5 + $0x10] sm:$0xff]
        %v548 = vld [vmem:[#allocation5 + $0x18] sm:$0xff]
        %v549 = vld [vmem:[#allocation5 + $0x20] sm:$0xff]
        %v550 = vld [vmem:[#allocation5 + $0x28] sm:$0xff]
        %v551 = vld [vmem:[#allocation5 + $0x30] sm:$0xff]
        %v552 = vld [vmem:[#allocation5 + $0x38] sm:$0xff]
        %v553 = vld [vmem:[#allocation5 + $0x40] sm:$0xff]
        %v554 = vld [vmem:[#allocation5 + $0x48] sm:$0xff]
        %v555 = vld [vmem:[#allocation5 + $0x50] sm:$0xff]
        %v556 = vld [vmem:[#allocation5 + $0x58] sm:$0xff]
        %v557 = vld [vmem:[#allocation5 + $0x60] sm:$0xff]
        %v558 = vld [vmem:[#allocation5 + $0x68] sm:$0xff]
        %v559 = vld [vmem:[#allocation5 + $0x70] sm:$0xff]
        %v560 = vld [vmem:[#allocation5 + $0x78] sm:$0xff]
        %v561 = vld [vmem:[#allocation5 + $0x80] sm:$0xff]
        %v562 = vld [vmem:[#allocation5 + $0x88] sm:$0xff]
        %v563 = vld [vmem:[#allocation5 + $0x90] sm:$0xff]
        %v564 = vld [vmem:[#allocation5 + $0x98] sm:$0xff]
        %v565 = vld [vmem:[#allocation5 + $0xa0] sm:$0xff]
        %v566 = vld [vmem:[#allocation5 + $0xa8] sm:$0xff]
        %v567 = vld [vmem:[#allocation5 + $0xb0] sm:$0xff]
        %v568 = vld [vmem:[#allocation5 + $0xb8] sm:$0xff]
        %v569 = vld [vmem:[#allocation5 + $0xc0] sm:$0xff]
        %v570 = vld [vmem:[#allocation5 + $0xc8] sm:$0xff]
        %v571 = vld [vmem:[#allocation5 + $0xd0] sm:$0xff]
        %v572 = vld [vmem:[#allocation5 + $0xd8] sm:$0xff]
        %v573 = vld [vmem:[#allocation5 + $0xe0] sm:$0xff]
        %v574 = vld [vmem:[#allocation5 + $0xe8] sm:$0xff]
        %v575 = vld [vmem:[#allocation5 + $0xf0] sm:$0xff]
        %v576 = vld [vmem:[#allocation5 + $0xf8] sm:$0xff]
        %v577 = vld [vmem:[#allocation5 + $0x100] sm:$0xff]
        %v578 = vld [vmem:[#allocation5 + $0x108] sm:$0xff]
        %v579 = vld [vmem:[#allocation5 + $0x110] sm:$0xff]
        %v580 = vld [vmem:[#allocation5 + $0x118] sm:$0xff]
        %v581 = vld [vmem:[#allocation5 + $0x120] sm:$0xff]
        %v582 = vld [vmem:[#allocation5 + $0x128] sm:$0xff]
        %v583 = vld [vmem:[#allocation5 + $0x130] sm:$0xff]
        %v584 = vld [vmem:[#allocation5 + $0x138] sm:$0xff]
        %v585 = vld [vmem:[#allocation5 + $0x140] sm:$0xff]
        %v586 = vld [vmem:[#allocation5 + $0x148] sm:$0xff]
        %v587 = vld [vmem:[#allocation5 + $0x150] sm:$0xff]
        %v588 = vld [vmem:[#allocation5 + $0x158] sm:$0xff]
        %v589 = vld [vmem:[#allocation5 + $0x160] sm:$0xff]
        %v590 = vld [vmem:[#allocation5 + $0x168] sm:$0xff]
        %v591 = vld [vmem:[#allocation5 + $0x170] sm:$0xff]
        %v592 = vld [vmem:[#allocation5 + $0x178] sm:$0xff]
        %v593 = vld [vmem:[#allocation5 + $0x180] sm:$0xff]
        %v594 = vld [vmem:[#allocation5 + $0x188] sm:$0xff]
        %v595 = vld [vmem:[#allocation5 + $0x190] sm:$0xff]
        %v596 = vld [vmem:[#allocation5 + $0x198] sm:$0xff]
        %v597 = vld [vmem:[#allocation5 + $0x1a0] sm:$0xff]
        %v598 = vld [vmem:[#allocation5 + $0x1a8] sm:$0xff]
        %v599 = vld [vmem:[#allocation5 + $0x1b0] sm:$0xff]
        %v600 = vld [vmem:[#allocation5 + $0x1b8] sm:$0xff]
        %v601 = vld [vmem:[#allocation5 + $0x1c0] sm:$0xff]
        %v602 = vld [vmem:[#allocation5 + $0x1c8] sm:$0xff]
        %v603 = vld [vmem:[#allocation5 + $0x1d0] sm:$0xff]
        %v604 = vld [vmem:[#allocation5 + $0x1d8] sm:$0xff]
        %v605 = vld [vmem:[#allocation5 + $0x1e0] sm:$0xff]
        %v606 = vld [vmem:[#allocation5 + $0x1e8] sm:$0xff]
        %v607 = vld [vmem:[#allocation5 + $0x1f0] sm:$0xff]
        %v608 = vld [vmem:[#allocation5 + $0x1f8] sm:$0xff]
        %v609 = vld [vmem:[#allocation5 + $0x200] sm:$0xff]
        %v610 = vld [vmem:[#allocation5 + $0x208] sm:$0xff]
        %v611 = vld [vmem:[#allocation5 + $0x210] sm:$0xff]
        %v612 = vld [vmem:[#allocation5 + $0x218] sm:$0xff]
        %v613 = vld [vmem:[#allocation5 + $0x220] sm:$0xff]
        %v614 = vld [vmem:[#allocation5 + $0x228] sm:$0xff]
        %v615 = vld [vmem:[#allocation5 + $0x230] sm:$0xff]
        %v616 = vld [vmem:[#allocation5 + $0x238] sm:$0xff]
        %v617 = vld [vmem:[#allocation5 + $0x240] sm:$0xff]
        %v618 = vld [vmem:[#allocation5 + $0x248] sm:$0xff]
        %v619 = vld [vmem:[#allocation5 + $0x250] sm:$0xff]
        %v620 = vld [vmem:[#allocation5 + $0x258] sm:$0xff]
        %v621 = vld [vmem:[#allocation5 + $0x260] sm:$0xff]
        %v622 = vld [vmem:[#allocation5 + $0x268] sm:$0xff]
        %v623 = vld [vmem:[#allocation5 + $0x270] sm:$0xff]
        %v624 = vld [vmem:[#allocation5 + $0x278] sm:$0xff]
        %v625 = vld [vmem:[#allocation5 + $0x280] sm:$0xff]
        %v626 = vld [vmem:[#allocation5 + $0x288] sm:$0xff]
        %v627 = vld [vmem:[#allocation5 + $0x290] sm:$0xff]
        %v628 = vld [vmem:[#allocation5 + $0x298] sm:$0xff]
        %v629 = vld [vmem:[#allocation5 + $0x2a0] sm:$0xff]
        %v630 = vld [vmem:[#allocation5 + $0x2a8] sm:$0xff]
        %v631 = vld [vmem:[#allocation5 + $0x2b0] sm:$0xff]
        %v632 = vld [vmem:[#allocation5 + $0x2b8] sm:$0xff]
        %v633 = vld [vmem:[#allocation5 + $0x2c0] sm:$0xff]
        %v634 = vld [vmem:[#allocation5 + $0x2c8] sm:$0xff]
        %v635 = vld [vmem:[#allocation5 + $0x2d0] sm:$0xff]
        %v636 = vld [vmem:[#allocation5 + $0x2d8] sm:$0xff]
        %v637 = vld [vmem:[#allocation5 + $0x2e0] sm:$0xff]
        %v638 = vld [vmem:[#allocation5 + $0x2e8] sm:$0xff]
        %v639 = vld [vmem:[#allocation5 + $0x2f0] sm:$0xff]
        %v640 = vld [vmem:[#allocation5 + $0x2f8] sm:$0xff]
        %v641 = vld [vmem:[#allocation5 + $0x300] sm:$0xff]
        %v642 = vld [vmem:[#allocation5 + $0x308] sm:$0xff]
        %v643 = vld [vmem:[#allocation5 + $0x310] sm:$0xff]
        %v644 = vld [vmem:[#allocation5 + $0x318] sm:$0xff]
        %v645 = vld [vmem:[#allocation5 + $0x320] sm:$0xff]
        %v646 = vld [vmem:[#allocation5 + $0x328] sm:$0xff]
        %v647 = vld [vmem:[#allocation5 + $0x330] sm:$0xff]
        %v648 = vld [vmem:[#allocation5 + $0x338] sm:$0xff]
        %v649 = vld [vmem:[#allocation5 + $0x340] sm:$0xff]
        %v650 = vld [vmem:[#allocation5 + $0x348] sm:$0xff]
        %v651 = vld [vmem:[#allocation5 + $0x350] sm:$0xff]
        %v652 = vld [vmem:[#allocation5 + $0x358] sm:$0xff]
        %v653 = vld [vmem:[#allocation5 + $0x360] sm:$0xff]
        %v654 = vld [vmem:[#allocation5 + $0x368] sm:$0xff]
        %v655 = vld [vmem:[#allocation5 + $0x370] sm:$0xff]
        %v656 = vld [vmem:[#allocation5 + $0x378] sm:$0xff]
        %v657 = vld [vmem:[#allocation5 + $0x380] sm:$0xff]
        %v658 = vld [vmem:[#allocation5 + $0x388] sm:$0xff]
        %v659 = vld [vmem:[#allocation5 + $0x390] sm:$0xff]
        %v660 = vld [vmem:[#allocation5 + $0x398] sm:$0xff]
        %v661 = vld [vmem:[#allocation5 + $0x3a0] sm:$0xff]
        %v662 = vld [vmem:[#allocation5 + $0x3a8] sm:$0xff]
        %v663 = vld [vmem:[#allocation5 + $0x3b0] sm:$0xff]
        %v664 = vld [vmem:[#allocation5 + $0x3b8] sm:$0xff]
        %v665 = vld [vmem:[#allocation5 + $0x3c0] sm:$0xff]
        %v666 = vld [vmem:[#allocation5 + $0x3c8] sm:$0xff]
        %v667 = vld [vmem:[#allocation5 + $0x3d0] sm:$0xff]
        %v668 = vld [vmem:[#allocation5 + $0x3d8] sm:$0xff]
        %v669 = vld [vmem:[#allocation5 + $0x3e0] sm:$0xff]
        %v670 = vld [vmem:[#allocation5 + $0x3e8] sm:$0xff]
        %v671 = vld [vmem:[#allocation5 + $0x3f0] sm:$0xff]
        %v672 = vld [vmem:[#allocation5 + $0x3f8] sm:$0xff]
        %v673 = vld [vmem:[#allocation5 + $0x400] sm:$0xff]
        %v674 = vld [vmem:[#allocation5 + $0x408] sm:$0xff]
        %v675 = vld [vmem:[#allocation5 + $0x410] sm:$0xff]
        %v676 = vld [vmem:[#allocation5 + $0x418] sm:$0xff]
        %v677 = vld [vmem:[#allocation5 + $0x420] sm:$0xff]
        %v678 = vld [vmem:[#allocation5 + $0x428] sm:$0xff]
        %v679 = vld [vmem:[#allocation5 + $0x430] sm:$0xff]
        %v680 = vld [vmem:[#allocation5 + $0x438] sm:$0xff]
        %v681 = vld [vmem:[#allocation5 + $0x440] sm:$0xff]
        %v682 = vld [vmem:[#allocation5 + $0x448] sm:$0xff]
        %v683 = vld [vmem:[#allocation5 + $0x450] sm:$0xff]
        %v684 = vld [vmem:[#allocation5 + $0x458] sm:$0xff]
        %v685 = vld [vmem:[#allocation5 + $0x460] sm:$0xff]
        %v686 = vld [vmem:[#allocation5 + $0x468] sm:$0xff]
        %v687 = vld [vmem:[#allocation5 + $0x470] sm:$0xff]
        %v688 = vld [vmem:[#allocation5 + $0x478] sm:$0xff]
        %v689 = vld [vmem:[#allocation5 + $0x480] sm:$0xff]
        %v690 = vld [vmem:[#allocation5 + $0x488] sm:$0xff]
        %v691 = vld [vmem:[#allocation5 + $0x490] sm:$0xff]
        %v692 = vld [vmem:[#allocation5 + $0x498] sm:$0xff]
        %v693 = vld [vmem:[#allocation5 + $0x4a0] sm:$0xff]
        %v694 = vld [vmem:[#allocation5 + $0x4a8] sm:$0xff]
        %v695 = vld [vmem:[#allocation5 + $0x4b0] sm:$0xff]
        %v696 = vld [vmem:[#allocation5 + $0x4b8] sm:$0xff]
        %v697 = vld [vmem:[#allocation5 + $0x4c0] sm:$0xff]
        %v698 = vld [vmem:[#allocation5 + $0x4c8] sm:$0xff]
        %v699 = vld [vmem:[#allocation5 + $0x4d0] sm:$0xff]
        %v700 = vld [vmem:[#allocation5 + $0x4d8] sm:$0xff]
        %v701 = vld [vmem:[#allocation5 + $0x4e0] sm:$0xff]
        %v702 = vld [vmem:[#allocation5 + $0x4e8] sm:$0xff]
        %v703 = vld [vmem:[#allocation5 + $0x4f0] sm:$0xff]
        %v704 = vld [vmem:[#allocation5 + $0x4f8] sm:$0xff]
        %v705 = vld [vmem:[#allocation5 + $0x500] sm:$0xff]
        %v706 = vld [vmem:[#allocation5 + $0x508] sm:$0xff]
        %v707 = vld [vmem:[#allocation5 + $0x510] sm:$0xff]
        %v708 = vld [vmem:[#allocation5 + $0x518] sm:$0xff]
        %v709 = vld [vmem:[#allocation5 + $0x520] sm:$0xff]
        %v710 = vld [vmem:[#allocation5 + $0x528] sm:$0xff]
        %v711 = vld [vmem:[#allocation5 + $0x530] sm:$0xff]
        %v712 = vld [vmem:[#allocation5 + $0x538] sm:$0xff]
        %v713 = vld [vmem:[#allocation5 + $0x540] sm:$0xff]
        %v714 = vld [vmem:[#allocation5 + $0x548] sm:$0xff]
        %v715 = vld [vmem:[#allocation5 + $0x550] sm:$0xff]
        %v716 = vld [vmem:[#allocation5 + $0x558] sm:$0xff]
        %v717 = vld [vmem:[#allocation5 + $0x560] sm:$0xff]
        %v718 = vld [vmem:[#allocation5 + $0x568] sm:$0xff]
        %v719 = vld [vmem:[#allocation5 + $0x570] sm:$0xff]
        %v720 = vld [vmem:[#allocation5 + $0x578] sm:$0xff]
        %v721 = vld [vmem:[#allocation5 + $0x580] sm:$0xff]
        %v722 = vld [vmem:[#allocation5 + $0x588] sm:$0xff]
        %v723 = vld [vmem:[#allocation5 + $0x590] sm:$0xff]
        %v724 = vld [vmem:[#allocation5 + $0x598] sm:$0xff]
        %v725 = vld [vmem:[#allocation5 + $0x5a0] sm:$0xff]
        %v726 = vld [vmem:[#allocation5 + $0x5a8] sm:$0xff]
        %v727 = vld [vmem:[#allocation5 + $0x5b0] sm:$0xff]
        %v728 = vld [vmem:[#allocation5 + $0x5b8] sm:$0xff]
        %v729 = vld [vmem:[#allocation5 + $0x5c0] sm:$0xff]
        %v730 = vld [vmem:[#allocation5 + $0x5c8] sm:$0xff]
        %v731 = vld [vmem:[#allocation5 + $0x5d0] sm:$0xff]
        %v732 = vld [vmem:[#allocation5 + $0x5d8] sm:$0xff]
        %v733 = vld [vmem:[#allocation5 + $0x5e0] sm:$0xff]
        %v734 = vld [vmem:[#allocation5 + $0x5e8] sm:$0xff]
        %v735 = vld [vmem:[#allocation5 + $0x5f0] sm:$0xff]
        %v736 = vld [vmem:[#allocation5 + $0x5f8] sm:$0xff]
        %v737 = vld [vmem:[#allocation5 + $0x600] sm:$0xff]
        %v738 = vld [vmem:[#allocation5 + $0x608] sm:$0xff]
        %v739 = vld [vmem:[#allocation5 + $0x610] sm:$0xff]
        %v740 = vld [vmem:[#allocation5 + $0x618] sm:$0xff]
        %v741 = vld [vmem:[#allocation5 + $0x620] sm:$0xff]
        %v742 = vld [vmem:[#allocation5 + $0x628] sm:$0xff]
        %v743 = vld [vmem:[#allocation5 + $0x630] sm:$0xff]
        %v744 = vld [vmem:[#allocation5 + $0x638] sm:$0xff]
        %v745 = vld [vmem:[#allocation5 + $0x640] sm:$0xff]
        %v746 = vld [vmem:[#allocation5 + $0x648] sm:$0xff]
        %v747 = vld [vmem:[#allocation5 + $0x650] sm:$0xff]
        %v748 = vld [vmem:[#allocation5 + $0x658] sm:$0xff]
        %v749 = vld [vmem:[#allocation5 + $0x660] sm:$0xff]
        %v750 = vld [vmem:[#allocation5 + $0x668] sm:$0xff]
        %v751 = vld [vmem:[#allocation5 + $0x670] sm:$0xff]
        %v752 = vld [vmem:[#allocation5 + $0x678] sm:$0xff]
        %v753 = vld [vmem:[#allocation5 + $0x680] sm:$0xff]
        %v754 = vld [vmem:[#allocation5 + $0x688] sm:$0xff]
        %v755 = vld [vmem:[#allocation5 + $0x690] sm:$0xff]
        %v756 = vld [vmem:[#allocation5 + $0x698] sm:$0xff]
        %v757 = vld [vmem:[#allocation5 + $0x6a0] sm:$0xff]
        %v758 = vld [vmem:[#allocation5 + $0x6a8] sm:$0xff]
        %v759 = vld [vmem:[#allocation5 + $0x6b0] sm:$0xff]
        %v760 = vld [vmem:[#allocation5 + $0x6b8] sm:$0xff]
        %v761 = vld [vmem:[#allocation5 + $0x6c0] sm:$0xff]
        %v762 = vld [vmem:[#allocation5 + $0x6c8] sm:$0xff]
        %v763 = vld [vmem:[#allocation5 + $0x6d0] sm:$0xff]
        %v764 = vld [vmem:[#allocation5 + $0x6d8] sm:$0xff]
        %v765 = vld [vmem:[#allocation5 + $0x6e0] sm:$0xff]
        %v766 = vld [vmem:[#allocation5 + $0x6e8] sm:$0xff]
        %v767 = vld [vmem:[#allocation5 + $0x6f0] sm:$0xff]
        %v768 = vld [vmem:[#allocation5 + $0x6f8] sm:$0xff]
        %v769 = vld [vmem:[#allocation5 + $0x700] sm:$0xff]
        %v770 = vld [vmem:[#allocation5 + $0x708] sm:$0xff]
        %v771 = vld [vmem:[#allocation5 + $0x710] sm:$0xff]
        %v772 = vld [vmem:[#allocation5 + $0x718] sm:$0xff]
        %v773 = vld [vmem:[#allocation5 + $0x720] sm:$0xff]
        %v774 = vld [vmem:[#allocation5 + $0x728] sm:$0xff]
        %v775 = vld [vmem:[#allocation5 + $0x730] sm:$0xff]
        %v776 = vld [vmem:[#allocation5 + $0x738] sm:$0xff]
        %v777 = vld [vmem:[#allocation5 + $0x740] sm:$0xff]
        %v778 = vld [vmem:[#allocation5 + $0x748] sm:$0xff]
        %v779 = vld [vmem:[#allocation5 + $0x750] sm:$0xff]
        %v780 = vld [vmem:[#allocation5 + $0x758] sm:$0xff]
        %v781 = vld [vmem:[#allocation5 + $0x760] sm:$0xff]
        %v782 = vld [vmem:[#allocation5 + $0x768] sm:$0xff]
        %v783 = vld [vmem:[#allocation5 + $0x770] sm:$0xff]
        %v784 = vld [vmem:[#allocation5 + $0x778] sm:$0xff]
        %v785 = vld [vmem:[#allocation5 + $0x780] sm:$0xff]
        %v786 = vld [vmem:[#allocation5 + $0x788] sm:$0xff]
        %v787 = vld [vmem:[#allocation5 + $0x790] sm:$0xff]
        %v788 = vld [vmem:[#allocation5 + $0x798] sm:$0xff]
        %v789 = vld [vmem:[#allocation5 + $0x7a0] sm:$0xff]
        %v790 = vld [vmem:[#allocation5 + $0x7a8] sm:$0xff]
        %v791 = vld [vmem:[#allocation5 + $0x7b0] sm:$0xff]
        %v792 = vld [vmem:[#allocation5 + $0x7b8] sm:$0xff]
        %v793 = vld [vmem:[#allocation5 + $0x7c0] sm:$0xff]
        %v794 = vld [vmem:[#allocation5 + $0x7c8] sm:$0xff]
        %v795 = vld [vmem:[#allocation5 + $0x7d0] sm:$0xff]
        %v796 = vld [vmem:[#allocation5 + $0x7d8] sm:$0xff]
        %v797 = vld [vmem:[#allocation5 + $0x7e0] sm:$0xff]
        %v798 = vld [vmem:[#allocation5 + $0x7e8] sm:$0xff]
        %v799 = vld [vmem:[#allocation5 + $0x7f0] sm:$0xff]
        %v800 = vld [vmem:[#allocation5 + $0x7f8] sm:$0xff]
        %v801 = vld [vmem:[#allocation5 + $0x800] sm:$0xff]
        %v802 = vld [vmem:[#allocation5 + $0x808] sm:$0xff]
        %v803 = vld [vmem:[#allocation5 + $0x810] sm:$0xff]
        %v804 = vld [vmem:[#allocation5 + $0x818] sm:$0xff]
        %v805 = vld [vmem:[#allocation5 + $0x820] sm:$0xff]
        %v806 = vld [vmem:[#allocation5 + $0x828] sm:$0xff]
        %v807 = vld [vmem:[#allocation5 + $0x830] sm:$0xff]
        %v808 = vld [vmem:[#allocation5 + $0x838] sm:$0xff]
        %v809 = vld [vmem:[#allocation5 + $0x840] sm:$0xff]
        %v810 = vld [vmem:[#allocation5 + $0x848] sm:$0xff]
        %v811 = vld [vmem:[#allocation5 + $0x850] sm:$0xff]
        %v812 = vld [vmem:[#allocation5 + $0x858] sm:$0xff]
        %v813 = vld [vmem:[#allocation5 + $0x860] sm:$0xff]
        %v814 = vld [vmem:[#allocation5 + $0x868] sm:$0xff]
        %v815 = vld [vmem:[#allocation5 + $0x870] sm:$0xff]
        %v816 = vld [vmem:[#allocation5 + $0x878] sm:$0xff]
        %v817 = vld [vmem:[#allocation5 + $0x880] sm:$0xff]
        %v818 = vld [vmem:[#allocation5 + $0x888] sm:$0xff]
        %v819 = vld [vmem:[#allocation5 + $0x890] sm:$0xff]
        %v820 = vld [vmem:[#allocation5 + $0x898] sm:$0xff]
        %v821 = vld [vmem:[#allocation5 + $0x8a0] sm:$0xff]
        %v822 = vld [vmem:[#allocation5 + $0x8a8] sm:$0xff]
        %v823 = vld [vmem:[#allocation5 + $0x8b0] sm:$0xff]
        %v824 = vld [vmem:[#allocation5 + $0x8b8] sm:$0xff]
        %v825 = vld [vmem:[#allocation5 + $0x8c0] sm:$0xff]
        %v826 = vld [vmem:[#allocation5 + $0x8c8] sm:$0xff]
        %v827 = vld [vmem:[#allocation5 + $0x8d0] sm:$0xff]
        %v828 = vld [vmem:[#allocation5 + $0x8d8] sm:$0xff]
        %v829 = vld [vmem:[#allocation5 + $0x8e0] sm:$0xff]
        %v830 = vld [vmem:[#allocation5 + $0x8e8] sm:$0xff]
        %v831 = vld [vmem:[#allocation5 + $0x8f0] sm:$0xff]
        %v832 = vld [vmem:[#allocation5 + $0x8f8] sm:$0xff]
        %v833 = vld [vmem:[#allocation5 + $0x900] sm:$0xff]
        %v834 = vld [vmem:[#allocation5 + $0x908] sm:$0xff]
        %v835 = vld [vmem:[#allocation5 + $0x910] sm:$0xff]
        %v836 = vld [vmem:[#allocation5 + $0x918] sm:$0xff]
        %v837 = vld [vmem:[#allocation5 + $0x920] sm:$0xff]
        %v838 = vld [vmem:[#allocation5 + $0x928] sm:$0xff]
        %v839 = vld [vmem:[#allocation5 + $0x930] sm:$0xff]
        %v840 = vld [vmem:[#allocation5 + $0x938] sm:$0xff]
        %v841 = vld [vmem:[#allocation5 + $0x940] sm:$0xff]
        %v842 = vld [vmem:[#allocation5 + $0x948] sm:$0xff]
        %v843 = vld [vmem:[#allocation5 + $0x950] sm:$0xff]
        %v844 = vld [vmem:[#allocation5 + $0x958] sm:$0xff]
        %v845 = vld [vmem:[#allocation5 + $0x960] sm:$0xff]
        %v846 = vld [vmem:[#allocation5 + $0x968] sm:$0xff]
        %v847 = vld [vmem:[#allocation5 + $0x970] sm:$0xff]
        %v848 = vld [vmem:[#allocation5 + $0x978] sm:$0xff]
        %v849 = vld [vmem:[#allocation5 + $0x980] sm:$0xff]
        %v850 = vld [vmem:[#allocation5 + $0x988] sm:$0xff]
        %v851 = vld [vmem:[#allocation5 + $0x990] sm:$0xff]
        %v852 = vld [vmem:[#allocation5 + $0x998] sm:$0xff]
        %v853 = vld [vmem:[#allocation5 + $0x9a0] sm:$0xff]
        %v854 = vld [vmem:[#allocation5 + $0x9a8] sm:$0xff]
        %v855 = vld [vmem:[#allocation5 + $0x9b0] sm:$0xff]
        %v856 = vld [vmem:[#allocation5 + $0x9b8] sm:$0xff]
        %v857 = vld [vmem:[#allocation5 + $0x9c0] sm:$0xff]
        %v858 = vld [vmem:[#allocation5 + $0x9c8] sm:$0xff]
        %v859 = vld [vmem:[#allocation5 + $0x9d0] sm:$0xff]
        %v860 = vld [vmem:[#allocation5 + $0x9d8] sm:$0xff]
        %v861 = vld [vmem:[#allocation5 + $0x9e0] sm:$0xff]
        %v862 = vld [vmem:[#allocation5 + $0x9e8] sm:$0xff]
        %v863 = vld [vmem:[#allocation5 + $0x9f0] sm:$0xff]
        %v864 = vld [vmem:[#allocation5 + $0x9f8] sm:$0xff]
        %v865 = vld [vmem:[#allocation5 + $0xa00] sm:$0xff]
        %v866 = vld [vmem:[#allocation5 + $0xa08] sm:$0xff]
        %v867 = vld [vmem:[#allocation5 + $0xa10] sm:$0xff]
        %v868 = vld [vmem:[#allocation5 + $0xa18] sm:$0xff]
        %v869 = vld [vmem:[#allocation5 + $0xa20] sm:$0xff]
        %v870 = vld [vmem:[#allocation5 + $0xa28] sm:$0xff]
        %v871 = vld [vmem:[#allocation5 + $0xa30] sm:$0xff]
        %v872 = vld [vmem:[#allocation5 + $0xa38] sm:$0xff]
        %v873 = vld [vmem:[#allocation5 + $0xa40] sm:$0xff]
        %v874 = vld [vmem:[#allocation5 + $0xa48] sm:$0xff]
        %v875 = vld [vmem:[#allocation5 + $0xa50] sm:$0xff]
        %v876 = vld [vmem:[#allocation5 + $0xa58] sm:$0xff]
        %v877 = vld [vmem:[#allocation5 + $0xa60] sm:$0xff]
        %v878 = vld [vmem:[#allocation5 + $0xa68] sm:$0xff]
        %v879 = vld [vmem:[#allocation5 + $0xa70] sm:$0xff]
        %v880 = vld [vmem:[#allocation5 + $0xa78] sm:$0xff]
        %v881 = vld [vmem:[#allocation5 + $0xa80] sm:$0xff]
        %v882 = vld [vmem:[#allocation5 + $0xa88] sm:$0xff]
        %v883 = vld [vmem:[#allocation5 + $0xa90] sm:$0xff]
        %v884 = vld [vmem:[#allocation5 + $0xa98] sm:$0xff]
        %v885 = vld [vmem:[#allocation5 + $0xaa0] sm:$0xff]
        %v886 = vld [vmem:[#allocation5 + $0xaa8] sm:$0xff]
        %v887 = vld [vmem:[#allocation5 + $0xab0] sm:$0xff]
        %v888 = vld [vmem:[#allocation5 + $0xab8] sm:$0xff]
        %v889 = vld [vmem:[#allocation5 + $0xac0] sm:$0xff]
        %v890 = vld [vmem:[#allocation5 + $0xac8] sm:$0xff]
        %v891 = vld [vmem:[#allocation5 + $0xad0] sm:$0xff]
        %v892 = vld [vmem:[#allocation5 + $0xad8] sm:$0xff]
        %v893 = vld [vmem:[#allocation5 + $0xae0] sm:$0xff]
        %v894 = vld [vmem:[#allocation5 + $0xae8] sm:$0xff]
        %v895 = vld [vmem:[#allocation5 + $0xaf0] sm:$0xff]
        %v896 = vld [vmem:[#allocation5 + $0xaf8] sm:$0xff]
        %v897 = vld [vmem:[#allocation5 + $0xb00] sm:$0xff]
        %v898 = vld [vmem:[#allocation5 + $0xb08] sm:$0xff]
        %v899 = vld [vmem:[#allocation5 + $0xb10] sm:$0xff]
        %v900 = vld [vmem:[#allocation5 + $0xb18] sm:$0xff]
        %v901 = vld [vmem:[#allocation5 + $0xb20] sm:$0xff]
        %v902 = vld [vmem:[#allocation5 + $0xb28] sm:$0xff]
        %v903 = vld [vmem:[#allocation5 + $0xb30] sm:$0xff]
        %v904 = vld [vmem:[#allocation5 + $0xb38] sm:$0xff]
        %v905 = vld [vmem:[#allocation5 + $0xb40] sm:$0xff]
        %v906 = vld [vmem:[#allocation5 + $0xb48] sm:$0xff]
        %v907 = vld [vmem:[#allocation5 + $0xb50] sm:$0xff]
        %v908 = vld [vmem:[#allocation5 + $0xb58] sm:$0xff]
        %v909 = vld [vmem:[#allocation5 + $0xb60] sm:$0xff]
        %v910 = vld [vmem:[#allocation5 + $0xb68] sm:$0xff]
        %v911 = vld [vmem:[#allocation5 + $0xb70] sm:$0xff]
        %v912 = vld [vmem:[#allocation5 + $0xb78] sm:$0xff]
        %v913 = vld [vmem:[#allocation5 + $0xb80] sm:$0xff]
        %v914 = vld [vmem:[#allocation5 + $0xb88] sm:$0xff]
        %v915 = vld [vmem:[#allocation5 + $0xb90] sm:$0xff]
        %v916 = vld [vmem:[#allocation5 + $0xb98] sm:$0xff]
        %v917 = vld [vmem:[#allocation5 + $0xba0] sm:$0xff]
        %v918 = vld [vmem:[#allocation5 + $0xba8] sm:$0xff]
        %v919 = vld [vmem:[#allocation5 + $0xbb0] sm:$0xff]
        %v920 = vld [vmem:[#allocation5 + $0xbb8] sm:$0xff]
        %v921 = vld [vmem:[#allocation5 + $0xbc0] sm:$0xff]
        %v922 = vld [vmem:[#allocation5 + $0xbc8] sm:$0xff]
        %v923 = vld [vmem:[#allocation5 + $0xbd0] sm:$0xff]
        %v924 = vld [vmem:[#allocation5 + $0xbd8] sm:$0xff]
        %v925 = vld [vmem:[#allocation5 + $0xbe0] sm:$0xff]
        %v926 = vld [vmem:[#allocation5 + $0xbe8] sm:$0xff]
        %v927 = vld [vmem:[#allocation5 + $0xbf0] sm:$0xff]
        %v928 = vld [vmem:[#allocation5 + $0xbf8] sm:$0xff]
        %v929 = vld [vmem:[#allocation5 + $0xc00] sm:$0xff]
        %v930 = vld [vmem:[#allocation5 + $0xc08] sm:$0xff]
        %v931 = vld [vmem:[#allocation5 + $0xc10] sm:$0xff]
        %v932 = vld [vmem:[#allocation5 + $0xc18] sm:$0xff]
        %v933 = vld [vmem:[#allocation5 + $0xc20] sm:$0xff]
        %v934 = vld [vmem:[#allocation5 + $0xc28] sm:$0xff]
        %v935 = vld [vmem:[#allocation5 + $0xc30] sm:$0xff]
        %v936 = vld [vmem:[#allocation5 + $0xc38] sm:$0xff]
        %v937 = vld [vmem:[#allocation7] sm:$0xf]
        %v939 = vlaneseq
        %v940 = vshrl.u32 %v939, 7
        %v941 = vsub.s32 0, %v940
        %v942 = vrot.slane %v937, %v941
        %v943 = vlaneseq
        %v944 = vshrl.u32 %v943, 7
        %v945 = vsub.s32 1, %v944
        %v946 = vrot.slane %v937, %v945
        %v947 = vlaneseq
        %v948 = vshrl.u32 %v947, 7
        %v949 = vsub.s32 2, %v948
        %v950 = vrot.slane %v937, %v949
        %v951 = vlaneseq
        %v952 = vshrl.u32 %v951, 7
        %v953 = vsub.s32 3, %v952
        %v954 = vrot.slane %v937, %v953
        %vm959 = vcmask 130048
        %v961 = vsel %vm959, %v544, 0
        %963 = vmatprep.subr.mxu0 %v546
        %964 = vmatpush1.msra.mxu0 %v545
        %965 = vmatprep.subr.mxu0 %v550
        %966 = vmatpush1.msra.mxu0 %v549
        %967 = vmatprep.subr.mxu0 %v554
        %968 = vmatpush1.msra.mxu0 %v553
        %969 = vmatprep.subr.mxu0 %v558
        %970 = vmatpush1.msra.mxu0 %v557
        %971 = vmatprep.subr.mxu0 %v562
        %972 = vmatpush1.msra.mxu0 %v561
        %973 = vmatprep.subr.mxu0 %v566
        %974 = vmatpush1.msra.mxu0 %v565
        %975 = vmatprep.subr.mxu0 %v570
        %976 = vmatpush1.msra.mxu0 %v569
        %977 = vmatprep.subr.mxu0 %v574
        %978 = vmatpush1.msra.mxu0 %v573
        %979 = vmatprep.subr.mxu0 %v578
        %980 = vmatpush1.msra.mxu0 %v577
        %981 = vmatprep.subr.mxu0 %v582
        %982 = vmatpush1.msra.mxu0 %v581
        %983 = vmatprep.subr.mxu0 %v586
        %984 = vmatpush1.msra.mxu0 %v585
        %985 = vmatprep.subr.mxu0 %v590
        %986 = vmatpush1.msra.mxu0 %v589
        %987 = vmatprep.subr.mxu0 %v594
        %988 = vmatpush1.msra.mxu0 %v593
        %989 = vmatprep.subr.mxu0 %v598
        %990 = vmatpush1.msra.mxu0 %v597
        %991 = vmatprep.subr.mxu0 %v602
        %992 = vmatpush1.msra.mxu0 %v601
        %993 = vmatprep.subr.mxu0 %v606
        %994 = vmatpush1.msra.mxu0 %v605
        %995 = vmatprep.subr.mxu0 %v610
        %996 = vmatpush1.msra.mxu0 %v609
        %997 = vmatprep.subr.mxu0 %v614
        %998 = vmatpush1.msra.mxu0 %v613
        %999 = vmatprep.subr.mxu0 %v618
        %1000 = vmatpush1.msra.mxu0 %v617
        %1001 = vmatprep.subr.mxu0 %v622
        %1002 = vmatpush1.msra.mxu0 %v621
        %1003 = vmatprep.subr.mxu0 %v626
        %1004 = vmatpush1.msra.mxu0 %v625
        %1005 = vmatprep.subr.mxu0 %v630
        %1006 = vmatpush1.msra.mxu0 %v629
        %1007 = vmatprep.subr.mxu0 %v634
        %1008 = vmatpush1.msra.mxu0 %v633
        %1009 = vmatprep.subr.mxu0 %v638
        %1010 = vmatpush1.msra.mxu0 %v637
        %1011 = vmatprep.subr.mxu0 %v642
        %1012 = vmatpush1.msra.mxu0 %v641
        %1013 = vmatprep.subr.mxu0 %v646
        %1014 = vmatpush1.msra.mxu0 %v645
        %1015 = vmatprep.subr.mxu0 %v650
        %1016 = vmatpush1.msra.mxu0 %v649
        %1017 = vmatprep.subr.mxu0 %v654
        %1018 = vmatpush1.msra.mxu0 %v653
        %1019 = vmatprep.subr.mxu0 %v658
        %1020 = vmatpush1.msra.mxu0 %v657
        %1021 = vmatprep.subr.mxu0 %v662
        %1022 = vmatpush1.msra.mxu0 %v661
        %1023 = vmatprep.subr.mxu0 %v666
        %1024 = vmatpush1.msra.mxu0 %v665
        %1025 = vmatprep.subr.mxu0 %v670
        %1026 = vmatpush1.msra.mxu0 %v669
        %1027 = vmatprep.mubr.f32.mxu0 %v539
        %1028 = vmatmul.mubr.f32.gmra.mrb[0].mxu0 %v538
        %v1029 = vpop.f32.mrb[0].mxu0
        %v1030 = vadd.f32 %v942, %v1029
        %v1031 = vpop.f32.mrb[0].mxu0
        %v1032 = vadd.f32 %v946, %v1031
        %1033 = vdwg.mxu0
        %1034 = vmatprep.subr.mxu0 %v674
        %1035 = vmatpush1.msra.mxu0 %v673
        %1036 = vmatprep.subr.mxu0 %v678
        %1037 = vmatpush1.msra.mxu0 %v677
        %1038 = vmatprep.subr.mxu0 %v682
        %1039 = vmatpush1.msra.mxu0 %v681
        %1040 = vmatprep.subr.mxu0 %v686
        %1041 = vmatpush1.msra.mxu0 %v685
        %1042 = vmatprep.subr.mxu0 %v690
        %1043 = vmatpush1.msra.mxu0 %v689
        %1044 = vmatprep.subr.mxu0 %v694
        %1045 = vmatpush1.msra.mxu0 %v693
        %1046 = vmatprep.subr.mxu0 %v698
        %1047 = vmatpush1.msra.mxu0 %v697
        %1048 = vmatprep.subr.mxu0 %v702
        %1049 = vmatpush1.msra.mxu0 %v701
        %1050 = vmatprep.subr.mxu0 %v706
        %1051 = vmatpush1.msra.mxu0 %v705
        %1052 = vmatprep.subr.mxu0 %v710
        %1053 = vmatpush1.msra.mxu0 %v709
        %1054 = vmatprep.subr.mxu0 %v714
        %1055 = vmatpush1.msra.mxu0 %v713
        %1056 = vmatprep.subr.mxu0 %v718
        %1057 = vmatpush1.msra.mxu0 %v717
        %1058 = vmatprep.subr.mxu0 %v722
        %1059 = vmatpush1.msra.mxu0 %v721
        %1060 = vmatprep.subr.mxu0 %v726
        %1061 = vmatpush1.msra.mxu0 %v725
        %1062 = vmatprep.subr.mxu0 %v730
        %1063 = vmatpush1.msra.mxu0 %v729
        %1064 = vmatprep.subr.mxu0 %v734
        %1065 = vmatpush1.msra.mxu0 %v733
        %1066 = vmatprep.subr.mxu0 %v738
        %1067 = vmatpush1.msra.mxu0 %v737
        %1068 = vmatprep.subr.mxu0 %v742
        %1069 = vmatpush1.msra.mxu0 %v741
        %1070 = vmatprep.subr.mxu0 %v746
        %1071 = vmatpush1.msra.mxu0 %v745
        %1072 = vmatprep.subr.mxu0 %v750
        %1073 = vmatpush1.msra.mxu0 %v749
        %1074 = vmatprep.subr.mxu0 %v754
        %1075 = vmatpush1.msra.mxu0 %v753
        %1076 = vmatprep.subr.mxu0 %v758
        %1077 = vmatpush1.msra.mxu0 %v757
        %1078 = vmatprep.subr.mxu0 %v762
        %1079 = vmatpush1.msra.mxu0 %v761
        %1080 = vmatprep.subr.mxu0 %v766
        %1081 = vmatpush1.msra.mxu0 %v765
        %1082 = vmatprep.subr.mxu0 %v770
        %1083 = vmatpush1.msra.mxu0 %v769
        %1084 = vmatprep.subr.mxu0 %v774
        %1085 = vmatpush1.msra.mxu0 %v773
        %1086 = vmatprep.subr.mxu0 %v778
        %1087 = vmatpush1.msra.mxu0 %v777
        %1088 = vmatprep.subr.mxu0 %v782
        %1089 = vmatpush1.msra.mxu0 %v781
        %1090 = vmatprep.subr.mxu0 %v786
        %1091 = vmatpush1.msra.mxu0 %v785
        %1092 = vmatprep.subr.mxu0 %v790
        %1093 = vmatpush1.msra.mxu0 %v789
        %1094 = vmatprep.subr.mxu0 %v794
        %1095 = vmatpush1.msra.mxu0 %v793
        %1096 = vmatprep.subr.mxu0 %v798
        %1097 = vmatpush1.msra.mxu0 %v797
        %1098 = vmatprep.mubr.f32.mxu0 %v541
        %1099 = vmatmul.mubr.f32.gmra.mrb[0].mxu0 %v540
        %v1100 = vpop.f32.mrb[0].mxu0
        %v1101 = vadd.f32 %v1030, %v1100
        %v1102 = vpop.f32.mrb[0].mxu0
        %v1103 = vadd.f32 %v1032, %v1102
        %1104 = vdwg.mxu0
        %1105 = vmatprep.subr.mxu0 %v802
        %1106 = vmatpush1.msra.mxu0 %v801
        %1107 = vmatprep.subr.mxu0 %v806
        %1108 = vmatpush1.msra.mxu0 %v805
        %1109 = vmatprep.subr.mxu0 %v810
        %1110 = vmatpush1.msra.mxu0 %v809
        %1111 = vmatprep.subr.mxu0 %v814
        %1112 = vmatpush1.msra.mxu0 %v813
        %1113 = vmatprep.subr.mxu0 %v818
        %1114 = vmatpush1.msra.mxu0 %v817
        %1115 = vmatprep.subr.mxu0 %v822
        %1116 = vmatpush1.msra.mxu0 %v821
        %1117 = vmatprep.subr.mxu0 %v826
        %1118 = vmatpush1.msra.mxu0 %v825
        %1119 = vmatprep.subr.mxu0 %v830
        %1120 = vmatpush1.msra.mxu0 %v829
        %1121 = vmatprep.subr.mxu0 %v834
        %1122 = vmatpush1.msra.mxu0 %v833
        %1123 = vmatprep.subr.mxu0 %v838
        %1124 = vmatpush1.msra.mxu0 %v837
        %1125 = vmatprep.subr.mxu0 %v842
        %1126 = vmatpush1.msra.mxu0 %v841
        %1127 = vmatprep.subr.mxu0 %v846
        %1128 = vmatpush1.msra.mxu0 %v845
        %1129 = vmatprep.subr.mxu0 %v850
        %1130 = vmatpush1.msra.mxu0 %v849
        %1131 = vmatprep.subr.mxu0 %v854
        %1132 = vmatpush1.msra.mxu0 %v853
        %1133 = vmatprep.subr.mxu0 %v858
        %1134 = vmatpush1.msra.mxu0 %v857
        %1135 = vmatprep.subr.mxu0 %v862
        %1136 = vmatpush1.msra.mxu0 %v861
        %1137 = vmatprep.subr.mxu0 %v866
        %1138 = vmatpush1.msra.mxu0 %v865
        %1139 = vmatprep.subr.mxu0 %v870
        %1140 = vmatpush1.msra.mxu0 %v869
        %1141 = vmatprep.subr.mxu0 %v874
        %1142 = vmatpush1.msra.mxu0 %v873
        %1143 = vmatprep.subr.mxu0 %v878
        %1144 = vmatpush1.msra.mxu0 %v877
        %1145 = vmatprep.subr.mxu0 %v882
        %1146 = vmatpush1.msra.mxu0 %v881
        %1147 = vmatprep.subr.mxu0 %v886
        %1148 = vmatpush1.msra.mxu0 %v885
        %1149 = vmatprep.subr.mxu0 %v890
        %1150 = vmatpush1.msra.mxu0 %v889
        %1151 = vmatprep.subr.mxu0 %v894
        %1152 = vmatpush1.msra.mxu0 %v893
        %1153 = vmatprep.subr.mxu0 %v898
        %1154 = vmatpush1.msra.mxu0 %v897
        %1155 = vmatprep.subr.mxu0 %v902
        %1156 = vmatpush1.msra.mxu0 %v901
        %1157 = vmatprep.subr.mxu0 %v906
        %1158 = vmatpush1.msra.mxu0 %v905
        %1159 = vmatprep.subr.mxu0 %v910
        %1160 = vmatpush1.msra.mxu0 %v909
        %1161 = vmatprep.subr.mxu0 %v914
        %1162 = vmatpush1.msra.mxu0 %v913
        %1163 = vmatprep.subr.mxu0 %v918
        %1164 = vmatpush1.msra.mxu0 %v917
        %1165 = vmatprep.subr.mxu0 %v922
        %1166 = vmatpush1.msra.mxu0 %v921
        %1167 = vmatprep.subr.mxu0 %v926
        %1168 = vmatpush1.msra.mxu0 %v925
        %1169 = vmatprep.mubr.f32.mxu0 %v543
        %1170 = vmatmul.mubr.f32.gmra.mrb[0].mxu0 %v542
        %v1171 = vpop.f32.mrb[0].mxu0
        %v1172 = vadd.f32 %v1101, %v1171
        %v1173 = vpop.f32.mrb[0].mxu0
        %v1174 = vadd.f32 %v1103, %v1173
        %1175 = vdwg.mxu0
        %1176 = vmatprep.subr.mxu0 %v930
        %1177 = vmatpush1.msra.mxu0 %v929
        %1178 = vmatprep.subr.mxu0 %v934
        %1179 = vmatpush1.msra.mxu0 %v933
        %1180 = vmatprep.subr.mxu0 0.0
        %1181 = vmatpush1.msra.mxu0 0.0
        %1182 = vmatprep.subr.mxu0 0.0
        %1183 = vmatpush1.msra.mxu0 0.0
        %1184 = vmatprep.subr.mxu0 0.0
        %1185 = vmatpush1.msra.mxu0 0.0
        %1186 = vmatprep.subr.mxu0 0.0
        %1187 = vmatpush1.msra.mxu0 0.0
        %1188 = vmatprep.subr.mxu0 0.0
        %1189 = vmatpush1.msra.mxu0 0.0
        %1190 = vmatprep.subr.mxu0 0.0
        %1191 = vmatpush1.msra.mxu0 0.0
        %1192 = vmatprep.subr.mxu0 0.0
        %1193 = vmatpush1.msra.mxu0 0.0
        %1194 = vmatprep.subr.mxu0 0.0
        %1195 = vmatpush1.msra.mxu0 0.0
        %1196 = vmatprep.subr.mxu0 0.0
        %1197 = vmatpush1.msra.mxu0 0.0
        %1198 = vmatprep.subr.mxu0 0.0
        %1199 = vmatpush1.msra.mxu0 0.0
        %1200 = vmatprep.subr.mxu0 0.0
        %1201 = vmatpush1.msra.mxu0 0.0
        %1202 = vmatprep.subr.mxu0 0.0
        %1203 = vmatpush1.msra.mxu0 0.0
        %1204 = vmatprep.subr.mxu0 0.0
        %1205 = vmatpush1.msra.mxu0 0.0
        %1206 = vmatprep.subr.mxu0 0.0
        %1207 = vmatpush1.msra.mxu0 0.0
        %1208 = vmatprep.subr.mxu0 0.0
        %1209 = vmatpush1.msra.mxu0 0.0
        %1210 = vmatprep.subr.mxu0 0.0
        %1211 = vmatpush1.msra.mxu0 0.0
        %1212 = vmatprep.subr.mxu0 0.0
        %1213 = vmatpush1.msra.mxu0 0.0
        %1214 = vmatprep.subr.mxu0 0.0
        %1215 = vmatpush1.msra.mxu0 0.0
        %1216 = vmatprep.subr.mxu0 0.0
        %1217 = vmatpush1.msra.mxu0 0.0
        %1218 = vmatprep.subr.mxu0 0.0
        %1219 = vmatpush1.msra.mxu0 0.0
        %1220 = vmatprep.subr.mxu0 0.0
        %1221 = vmatpush1.msra.mxu0 0.0
        %1222 = vmatprep.subr.mxu0 0.0
        %1223 = vmatpush1.msra.mxu0 0.0
        %1224 = vmatprep.subr.mxu0 0.0
        %1225 = vmatpush1.msra.mxu0 0.0
        %1226 = vmatprep.subr.mxu0 0.0
        %1227 = vmatpush1.msra.mxu0 0.0
        %1228 = vmatprep.subr.mxu0 0.0
        %1229 = vmatpush1.msra.mxu0 0.0
        %1230 = vmatprep.subr.mxu0 0.0
        %1231 = vmatpush1.msra.mxu0 0.0
        %1232 = vmatprep.subr.mxu0 0.0
        %1233 = vmatpush1.msra.mxu0 0.0
        %1234 = vmatprep.subr.mxu0 0.0
        %1235 = vmatpush1.msra.mxu0 0.0
        %1236 = vmatprep.subr.mxu0 0.0
        %1237 = vmatpush1.msra.mxu0 0.0
        %1238 = vmatprep.subr.mxu0 0.0
        %1239 = vmatpush1.msra.mxu0 0.0
        %1240 = vmatprep.mubr.f32.mxu0 0.0
        %1241 = vmatmul.mubr.f32.gmra.mrb[0].mxu0 %v961
        %v1242 = vpop.f32.mrb[0].mxu0
        %v1243 = vadd.f32 %v1172, %v1242
        %v1244 = vpop.f32.mrb[0].mxu0
        %v1245 = vadd.f32 %v1174, %v1244
        %1246 = vdwg.mxu0
        %1247 = vmatprep.subr.mxu0 %v548
        %1248 = vmatpush1.msra.mxu0 %v547
        %1249 = vmatprep.subr.mxu0 %v552
        %1250 = vmatpush1.msra.mxu0 %v551
        %1251 = vmatprep.subr.mxu0 %v556
        %1252 = vmatpush1.msra.mxu0 %v555
        %1253 = vmatprep.subr.mxu0 %v560
        %1254 = vmatpush1.msra.mxu0 %v559
        %1255 = vmatprep.subr.mxu0 %v564
        %1256 = vmatpush1.msra.mxu0 %v563
        %1257 = vmatprep.subr.mxu0 %v568
        %1258 = vmatpush1.msra.mxu0 %v567
        %1259 = vmatprep.subr.mxu0 %v572
        %1260 = vmatpush1.msra.mxu0 %v571
        %1261 = vmatprep.subr.mxu0 %v576
        %1262 = vmatpush1.msra.mxu0 %v575
        %1263 = vmatprep.subr.mxu0 %v580
        %1264 = vmatpush1.msra.mxu0 %v579
        %1265 = vmatprep.subr.mxu0 %v584
        %1266 = vmatpush1.msra.mxu0 %v583
        %1267 = vmatprep.subr.mxu0 %v588
        %1268 = vmatpush1.msra.mxu0 %v587
        %1269 = vmatprep.subr.mxu0 %v592
        %1270 = vmatpush1.msra.mxu0 %v591
        %1271 = vmatprep.subr.mxu0 %v596
        %1272 = vmatpush1.msra.mxu0 %v595
        %1273 = vmatprep.subr.mxu0 %v600
        %1274 = vmatpush1.msra.mxu0 %v599
        %1275 = vmatprep.subr.mxu0 %v604
        %1276 = vmatpush1.msra.mxu0 %v603
        %1277 = vmatprep.subr.mxu0 %v608
        %1278 = vmatpush1.msra.mxu0 %v607
        %1279 = vmatprep.subr.mxu0 %v612
        %1280 = vmatpush1.msra.mxu0 %v611
        %1281 = vmatprep.subr.mxu0 %v616
        %1282 = vmatpush1.msra.mxu0 %v615
        %1283 = vmatprep.subr.mxu0 %v620
        %1284 = vmatpush1.msra.mxu0 %v619
        %1285 = vmatprep.subr.mxu0 %v624
        %1286 = vmatpush1.msra.mxu0 %v623
        %1287 = vmatprep.subr.mxu0 %v628
        %1288 = vmatpush1.msra.mxu0 %v627
        %1289 = vmatprep.subr.mxu0 %v632
        %1290 = vmatpush1.msra.mxu0 %v631
        %1291 = vmatprep.subr.mxu0 %v636
        %1292 = vmatpush1.msra.mxu0 %v635
        %1293 = vmatprep.subr.mxu0 %v640
        %1294 = vmatpush1.msra.mxu0 %v639
        %1295 = vmatprep.subr.mxu0 %v644
        %1296 = vmatpush1.msra.mxu0 %v643
        %1297 = vmatprep.subr.mxu0 %v648
        %1298 = vmatpush1.msra.mxu0 %v647
        %1299 = vmatprep.subr.mxu0 %v652
        %1300 = vmatpush1.msra.mxu0 %v651
        %1301 = vmatprep.subr.mxu0 %v656
        %1302 = vmatpush1.msra.mxu0 %v655
        %1303 = vmatprep.subr.mxu0 %v660
        %1304 = vmatpush1.msra.mxu0 %v659
        %1305 = vmatprep.subr.mxu0 %v664
        %1306 = vmatpush1.msra.mxu0 %v663
        %1307 = vmatprep.subr.mxu0 %v668
        %1308 = vmatpush1.msra.mxu0 %v667
        %1309 = vmatprep.subr.mxu0 %v672
        %1310 = vmatpush1.msra.mxu0 %v671
        %1311 = vmatprep.mubr.f32.mxu0 %v539
        %1312 = vmatmul.mubr.f32.gmra.mrb[0].mxu0 %v538
        %v1313 = vpop.f32.mrb[0].mxu0
        %v1314 = vadd.f32 %v950, %v1313
        %v1315 = vpop.f32.mrb[0].mxu0
        %v1316 = vadd.f32 %v954, %v1315
        %1317 = vdwg.mxu0
        %1318 = vmatprep.subr.mxu0 %v676
        %1319 = vmatpush1.msra.mxu0 %v675
        %1320 = vmatprep.subr.mxu0 %v680
        %1321 = vmatpush1.msra.mxu0 %v679
        %1322 = vmatprep.subr.mxu0 %v684
        %1323 = vmatpush1.msra.mxu0 %v683
        %1324 = vmatprep.subr.mxu0 %v688
        %1325 = vmatpush1.msra.mxu0 %v687
        %1326 = vmatprep.subr.mxu0 %v692
        %1327 = vmatpush1.msra.mxu0 %v691
        %1328 = vmatprep.subr.mxu0 %v696
        %1329 = vmatpush1.msra.mxu0 %v695
        %1330 = vmatprep.subr.mxu0 %v700
        %1331 = vmatpush1.msra.mxu0 %v699
        %1332 = vmatprep.subr.mxu0 %v704
        %1333 = vmatpush1.msra.mxu0 %v703
        %1334 = vmatprep.subr.mxu0 %v708
        %1335 = vmatpush1.msra.mxu0 %v707
        %1336 = vmatprep.subr.mxu0 %v712
        %1337 = vmatpush1.msra.mxu0 %v711
        %1338 = vmatprep.subr.mxu0 %v716
        %1339 = vmatpush1.msra.mxu0 %v715
        %1340 = vmatprep.subr.mxu0 %v720
        %1341 = vmatpush1.msra.mxu0 %v719
        %1342 = vmatprep.subr.mxu0 %v724
        %1343 = vmatpush1.msra.mxu0 %v723
        %1344 = vmatprep.subr.mxu0 %v728
        %1345 = vmatpush1.msra.mxu0 %v727
        %1346 = vmatprep.subr.mxu0 %v732
        %1347 = vmatpush1.msra.mxu0 %v731
        %1348 = vmatprep.subr.mxu0 %v736
        %1349 = vmatpush1.msra.mxu0 %v735
        %1350 = vmatprep.subr.mxu0 %v740
        %1351 = vmatpush1.msra.mxu0 %v739
        %1352 = vmatprep.subr.mxu0 %v744
        %1353 = vmatpush1.msra.mxu0 %v743
        %1354 = vmatprep.subr.mxu0 %v748
        %1355 = vmatpush1.msra.mxu0 %v747
        %1356 = vmatprep.subr.mxu0 %v752
        %1357 = vmatpush1.msra.mxu0 %v751
        %1358 = vmatprep.subr.mxu0 %v756
        %1359 = vmatpush1.msra.mxu0 %v755
        %1360 = vmatprep.subr.mxu0 %v760
        %1361 = vmatpush1.msra.mxu0 %v759
        %1362 = vmatprep.subr.mxu0 %v764
        %1363 = vmatpush1.msra.mxu0 %v763
        %1364 = vmatprep.subr.mxu0 %v768
        %1365 = vmatpush1.msra.mxu0 %v767
        %1366 = vmatprep.subr.mxu0 %v772
        %1367 = vmatpush1.msra.mxu0 %v771
        %1368 = vmatprep.subr.mxu0 %v776
        %1369 = vmatpush1.msra.mxu0 %v775
        %1370 = vmatprep.subr.mxu0 %v780
        %1371 = vmatpush1.msra.mxu0 %v779
        %1372 = vmatprep.subr.mxu0 %v784
        %1373 = vmatpush1.msra.mxu0 %v783
        %1374 = vmatprep.subr.mxu0 %v788
        %1375 = vmatpush1.msra.mxu0 %v787
        %1376 = vmatprep.subr.mxu0 %v792
        %1377 = vmatpush1.msra.mxu0 %v791
        %1378 = vmatprep.subr.mxu0 %v796
        %1379 = vmatpush1.msra.mxu0 %v795
        %1380 = vmatprep.subr.mxu0 %v800
        %1381 = vmatpush1.msra.mxu0 %v799
        %1382 = vmatprep.mubr.f32.mxu0 %v541
        %1383 = vmatmul.mubr.f32.gmra.mrb[0].mxu0 %v540
        %v1384 = vpop.f32.mrb[0].mxu0
        %v1385 = vadd.f32 %v1314, %v1384
        %v1386 = vpop.f32.mrb[0].mxu0
        %v1387 = vadd.f32 %v1316, %v1386
        %1388 = vdwg.mxu0
        %1389 = vmatprep.subr.mxu0 %v804
        %1390 = vmatpush1.msra.mxu0 %v803
        %1391 = vmatprep.subr.mxu0 %v808
        %1392 = vmatpush1.msra.mxu0 %v807
        %1393 = vmatprep.subr.mxu0 %v812
        %1394 = vmatpush1.msra.mxu0 %v811
        %1395 = vmatprep.subr.mxu0 %v816
        %1396 = vmatpush1.msra.mxu0 %v815
        %1397 = vmatprep.subr.mxu0 %v820
        %1398 = vmatpush1.msra.mxu0 %v819
        %1399 = vmatprep.subr.mxu0 %v824
        %1400 = vmatpush1.msra.mxu0 %v823
        %1401 = vmatprep.subr.mxu0 %v828
        %1402 = vmatpush1.msra.mxu0 %v827
        %1403 = vmatprep.subr.mxu0 %v832
        %1404 = vmatpush1.msra.mxu0 %v831
        %1405 = vmatprep.subr.mxu0 %v836
        %1406 = vmatpush1.msra.mxu0 %v835
        %1407 = vmatprep.subr.mxu0 %v840
        %1408 = vmatpush1.msra.mxu0 %v839
        %1409 = vmatprep.subr.mxu0 %v844
        %1410 = vmatpush1.msra.mxu0 %v843
        %1411 = vmatprep.subr.mxu0 %v848
        %1412 = vmatpush1.msra.mxu0 %v847
        %1413 = vmatprep.subr.mxu0 %v852
        %1414 = vmatpush1.msra.mxu0 %v851
        %1415 = vmatprep.subr.mxu0 %v856
        %1416 = vmatpush1.msra.mxu0 %v855
        %1417 = vmatprep.subr.mxu0 %v860
        %1418 = vmatpush1.msra.mxu0 %v859
        %1419 = vmatprep.subr.mxu0 %v864
        %1420 = vmatpush1.msra.mxu0 %v863
        %1421 = vmatprep.subr.mxu0 %v868
        %1422 = vmatpush1.msra.mxu0 %v867
        %1423 = vmatprep.subr.mxu0 %v872
        %1424 = vmatpush1.msra.mxu0 %v871
        %1425 = vmatprep.subr.mxu0 %v876
        %1426 = vmatpush1.msra.mxu0 %v875
        %1427 = vmatprep.subr.mxu0 %v880
        %1428 = vmatpush1.msra.mxu0 %v879
        %1429 = vmatprep.subr.mxu0 %v884
        %1430 = vmatpush1.msra.mxu0 %v883
        %1431 = vmatprep.subr.mxu0 %v888
        %1432 = vmatpush1.msra.mxu0 %v887
        %1433 = vmatprep.subr.mxu0 %v892
        %1434 = vmatpush1.msra.mxu0 %v891
        %1435 = vmatprep.subr.mxu0 %v896
        %1436 = vmatpush1.msra.mxu0 %v895
        %1437 = vmatprep.subr.mxu0 %v900
        %1438 = vmatpush1.msra.mxu0 %v899
        %1439 = vmatprep.subr.mxu0 %v904
        %1440 = vmatpush1.msra.mxu0 %v903
        %1441 = vmatprep.subr.mxu0 %v908
        %1442 = vmatpush1.msra.mxu0 %v907
        %1443 = vmatprep.subr.mxu0 %v912
        %1444 = vmatpush1.msra.mxu0 %v911
        %1445 = vmatprep.subr.mxu0 %v916
        %1446 = vmatpush1.msra.mxu0 %v915
        %1447 = vmatprep.subr.mxu0 %v920
        %1448 = vmatpush1.msra.mxu0 %v919
        %1449 = vmatprep.subr.mxu0 %v924
        %1450 = vmatpush1.msra.mxu0 %v923
        %1451 = vmatprep.subr.mxu0 %v928
        %1452 = vmatpush1.msra.mxu0 %v927
        %1453 = vmatprep.mubr.f32.mxu0 %v543
        %1454 = vmatmul.mubr.f32.gmra.mrb[0].mxu0 %v542
        %v1455 = vpop.f32.mrb[0].mxu0
        %v1456 = vadd.f32 %v1385, %v1455
        %v1457 = vpop.f32.mrb[0].mxu0
        %v1458 = vadd.f32 %v1387, %v1457
        %1459 = vdwg.mxu0
        %1460 = vmatprep.subr.mxu0 %v932
        %1461 = vmatpush1.msra.mxu0 %v931
        %1462 = vmatprep.subr.mxu0 %v936
        %1463 = vmatpush1.msra.mxu0 %v935
        %1464 = vmatprep.subr.mxu0 0.0
        %1465 = vmatpush1.msra.mxu0 0.0
        %1466 = vmatprep.subr.mxu0 0.0
        %1467 = vmatpush1.msra.mxu0 0.0
        %1468 = vmatprep.subr.mxu0 0.0
        %1469 = vmatpush1.msra.mxu0 0.0
        %1470 = vmatprep.subr.mxu0 0.0
        %1471 = vmatpush1.msra.mxu0 0.0
        %1472 = vmatprep.subr.mxu0 0.0
        %1473 = vmatpush1.msra.mxu0 0.0
        %1474 = vmatprep.subr.mxu0 0.0
        %1475 = vmatpush1.msra.mxu0 0.0
        %1476 = vmatprep.subr.mxu0 0.0
        %1477 = vmatpush1.msra.mxu0 0.0
        %1478 = vmatprep.subr.mxu0 0.0
        %1479 = vmatpush1.msra.mxu0 0.0
        %1480 = vmatprep.subr.mxu0 0.0
        %1481 = vmatpush1.msra.mxu0 0.0
        %1482 = vmatprep.subr.mxu0 0.0
        %1483 = vmatpush1.msra.mxu0 0.0
        %1484 = vmatprep.subr.mxu0 0.0
        %1485 = vmatpush1.msra.mxu0 0.0
        %1486 = vmatprep.subr.mxu0 0.0
        %1487 = vmatpush1.msra.mxu0 0.0
        %1488 = vmatprep.subr.mxu0 0.0
        %1489 = vmatpush1.msra.mxu0 0.0
        %1490 = vmatprep.subr.mxu0 0.0
        %1491 = vmatpush1.msra.mxu0 0.0
        %1492 = vmatprep.subr.mxu0 0.0
        %1493 = vmatpush1.msra.mxu0 0.0
        %1494 = vmatprep.subr.mxu0 0.0
        %1495 = vmatpush1.msra.mxu0 0.0
        %1496 = vmatprep.subr.mxu0 0.0
        %1497 = vmatpush1.msra.mxu0 0.0
        %1498 = vmatprep.subr.mxu0 0.0
        %1499 = vmatpush1.msra.mxu0 0.0
        %1500 = vmatprep.subr.mxu0 0.0
        %1501 = vmatpush1.msra.mxu0 0.0
        %1502 = vmatprep.subr.mxu0 0.0
        %1503 = vmatpush1.msra.mxu0 0.0
        %1504 = vmatprep.subr.mxu0 0.0
        %1505 = vmatpush1.msra.mxu0 0.0
        %1506 = vmatprep.subr.mxu0 0.0
        %1507 = vmatpush1.msra.mxu0 0.0
        %1508 = vmatprep.subr.mxu0 0.0
        %1509 = vmatpush1.msra.mxu0 0.0
        %1510 = vmatprep.subr.mxu0 0.0
        %1511 = vmatpush1.msra.mxu0 0.0
        %1512 = vmatprep.subr.mxu0 0.0
        %1513 = vmatpush1.msra.mxu0 0.0
        %1514 = vmatprep.subr.mxu0 0.0
        %1515 = vmatpush1.msra.mxu0 0.0
        %1516 = vmatprep.subr.mxu0 0.0
        %1517 = vmatpush1.msra.mxu0 0.0
        %1518 = vmatprep.subr.mxu0 0.0
        %1519 = vmatpush1.msra.mxu0 0.0
        %1520 = vmatprep.subr.mxu0 0.0
        %1521 = vmatpush1.msra.mxu0 0.0
        %1522 = vmatprep.subr.mxu0 0.0
        %1523 = vmatpush1.msra.mxu0 0.0
        %1524 = vmatprep.mubr.f32.mxu0 0.0
        %1525 = vmatmul.mubr.f32.gmra.mrb[0].mxu0 %v961
        %v1526 = vpop.f32.mrb[0].mxu0
        %v1527 = vadd.f32 %v1456, %v1526
        %v1528 = vpop.f32.mrb[0].mxu0
        %v1529 = vadd.f32 %v1458, %v1528
        %1530 = vdwg.mxu0
        %v1531 = vmax.f32 %v1243, 0.0
        %v1532 = vmax.f32 %v1245, 0.0
        %v1533 = vmax.f32 %v1527, 0.0
        %v1534 = vmax.f32 %v1529, 0.0
        %v1535 = vld [vmem:[#allocation8] sm:$0xff]
        %v1536 = vld [vmem:[#allocation8 + $0x8] sm:$0xff]
        %v1537 = vld [vmem:[#allocation8 + $0x10] sm:$0xff]
        %v1538 = vld [vmem:[#allocation8 + $0x18] sm:$0xff]
        %v1539 = vld [vmem:[#allocation8 + $0x20] sm:$0xff]
        %v1540 = vld [vmem:[#allocation8 + $0x28] sm:$0xff]
        %v1541 = vld [vmem:[#allocation8 + $0x30] sm:$0xff]
        %v1542 = vld [vmem:[#allocation8 + $0x38] sm:$0xff]
        %v1543 = vld [vmem:[#allocation8 + $0x40] sm:$0xff]
        %v1544 = vld [vmem:[#allocation8 + $0x48] sm:$0xff]
        %v1545 = vld [vmem:[#allocation8 + $0x50] sm:$0xff]
        %v1546 = vld [vmem:[#allocation8 + $0x58] sm:$0xff]
        %v1547 = vld [vmem:[#allocation8 + $0x60] sm:$0xff]
        %v1548 = vld [vmem:[#allocation8 + $0x68] sm:$0xff]
        %v1549 = vld [vmem:[#allocation8 + $0x70] sm:$0xff]
        %v1550 = vld [vmem:[#allocation8 + $0x78] sm:$0xff]
        %v1551 = vld [vmem:[#allocation8 + $0x80] sm:$0xff]
        %v1552 = vld [vmem:[#allocation8 + $0x88] sm:$0xff]
        %v1553 = vld [vmem:[#allocation8 + $0x90] sm:$0xff]
        %v1554 = vld [vmem:[#allocation8 + $0x98] sm:$0xff]
        %v1555 = vld [vmem:[#allocation8 + $0xa0] sm:$0xff]
        %v1556 = vld [vmem:[#allocation8 + $0xa8] sm:$0xff]
        %v1557 = vld [vmem:[#allocation8 + $0xb0] sm:$0xff]
        %v1558 = vld [vmem:[#allocation8 + $0xb8] sm:$0xff]
        %v1559 = vld [vmem:[#allocation8 + $0xc0] sm:$0xff]
        %v1560 = vld [vmem:[#allocation8 + $0xc8] sm:$0xff]
        %v1561 = vld [vmem:[#allocation8 + $0xd0] sm:$0xff]
        %v1562 = vld [vmem:[#allocation8 + $0xd8] sm:$0xff]
        %v1563 = vld [vmem:[#allocation8 + $0xe0] sm:$0xff]
        %v1564 = vld [vmem:[#allocation8 + $0xe8] sm:$0xff]
        %v1565 = vld [vmem:[#allocation8 + $0xf0] sm:$0xff]
        %v1566 = vld [vmem:[#allocation8 + $0xf8] sm:$0xff]
        %v1567 = vld [vmem:[#allocation8 + $0x100] sm:$0xff]
        %v1568 = vld [vmem:[#allocation8 + $0x108] sm:$0xff]
        %v1569 = vld [vmem:[#allocation8 + $0x110] sm:$0xff]
        %v1570 = vld [vmem:[#allocation8 + $0x118] sm:$0xff]
        %v1571 = vld [vmem:[#allocation8 + $0x120] sm:$0xff]
        %v1572 = vld [vmem:[#allocation8 + $0x128] sm:$0xff]
        %v1573 = vld [vmem:[#allocation8 + $0x130] sm:$0xff]
        %v1574 = vld [vmem:[#allocation8 + $0x138] sm:$0xff]
        %v1575 = vld [vmem:[#allocation8 + $0x140] sm:$0xff]
        %v1576 = vld [vmem:[#allocation8 + $0x148] sm:$0xff]
        %v1577 = vld [vmem:[#allocation8 + $0x150] sm:$0xff]
        %v1578 = vld [vmem:[#allocation8 + $0x158] sm:$0xff]
        %v1579 = vld [vmem:[#allocation8 + $0x160] sm:$0xff]
        %v1580 = vld [vmem:[#allocation8 + $0x168] sm:$0xff]
        %v1581 = vld [vmem:[#allocation8 + $0x170] sm:$0xff]
        %v1582 = vld [vmem:[#allocation8 + $0x178] sm:$0xff]
        %v1583 = vld [vmem:[#allocation8 + $0x180] sm:$0xff]
        %v1584 = vld [vmem:[#allocation8 + $0x188] sm:$0xff]
        %v1585 = vld [vmem:[#allocation8 + $0x190] sm:$0xff]
        %v1586 = vld [vmem:[#allocation8 + $0x198] sm:$0xff]
        %v1587 = vld [vmem:[#allocation8 + $0x1a0] sm:$0xff]
        %v1588 = vld [vmem:[#allocation8 + $0x1a8] sm:$0xff]
        %v1589 = vld [vmem:[#allocation8 + $0x1b0] sm:$0xff]
        %v1590 = vld [vmem:[#allocation8 + $0x1b8] sm:$0xff]
        %v1591 = vld [vmem:[#allocation8 + $0x1c0] sm:$0xff]
        %v1592 = vld [vmem:[#allocation8 + $0x1c8] sm:$0xff]
        %v1593 = vld [vmem:[#allocation8 + $0x1d0] sm:$0xff]
        %v1594 = vld [vmem:[#allocation8 + $0x1d8] sm:$0xff]
        %v1595 = vld [vmem:[#allocation8 + $0x1e0] sm:$0xff]
        %v1596 = vld [vmem:[#allocation8 + $0x1e8] sm:$0xff]
        %v1597 = vld [vmem:[#allocation8 + $0x1f0] sm:$0xff]
        %v1598 = vld [vmem:[#allocation8 + $0x1f8] sm:$0xff]
        %v1599 = vld [vmem:[#allocation8 + $0x200] sm:$0xff]
        %v1600 = vld [vmem:[#allocation8 + $0x208] sm:$0xff]
        %v1601 = vld [vmem:[#allocation8 + $0x210] sm:$0xff]
        %v1602 = vld [vmem:[#allocation8 + $0x218] sm:$0xff]
        %v1603 = vld [vmem:[#allocation8 + $0x220] sm:$0xff]
        %v1604 = vld [vmem:[#allocation8 + $0x228] sm:$0xff]
        %v1605 = vld [vmem:[#allocation8 + $0x230] sm:$0xff]
        %v1606 = vld [vmem:[#allocation8 + $0x238] sm:$0xff]
        %v1607 = vld [vmem:[#allocation8 + $0x240] sm:$0xff]
        %v1608 = vld [vmem:[#allocation8 + $0x248] sm:$0xff]
        %v1609 = vld [vmem:[#allocation8 + $0x250] sm:$0xff]
        %v1610 = vld [vmem:[#allocation8 + $0x258] sm:$0xff]
        %v1611 = vld [vmem:[#allocation8 + $0x260] sm:$0xff]
        %v1612 = vld [vmem:[#allocation8 + $0x268] sm:$0xff]
        %v1613 = vld [vmem:[#allocation8 + $0x270] sm:$0xff]
        %v1614 = vld [vmem:[#allocation8 + $0x278] sm:$0xff]
        %v1615 = vld [vmem:[#allocation8 + $0x280] sm:$0xff]
        %v1616 = vld [vmem:[#allocation8 + $0x288] sm:$0xff]
        %v1617 = vld [vmem:[#allocation8 + $0x290] sm:$0xff]
        %v1618 = vld [vmem:[#allocation8 + $0x298] sm:$0xff]
        %v1619 = vld [vmem:[#allocation8 + $0x2a0] sm:$0xff]
        %v1620 = vld [vmem:[#allocation8 + $0x2a8] sm:$0xff]
        %v1621 = vld [vmem:[#allocation8 + $0x2b0] sm:$0xff]
        %v1622 = vld [vmem:[#allocation8 + $0x2b8] sm:$0xff]
        %v1623 = vld [vmem:[#allocation8 + $0x2c0] sm:$0xff]
        %v1624 = vld [vmem:[#allocation8 + $0x2c8] sm:$0xff]
        %v1625 = vld [vmem:[#allocation8 + $0x2d0] sm:$0xff]
        %v1626 = vld [vmem:[#allocation8 + $0x2d8] sm:$0xff]
        %v1627 = vld [vmem:[#allocation8 + $0x2e0] sm:$0xff]
        %v1628 = vld [vmem:[#allocation8 + $0x2e8] sm:$0xff]
        %v1629 = vld [vmem:[#allocation8 + $0x2f0] sm:$0xff]
        %v1630 = vld [vmem:[#allocation8 + $0x2f8] sm:$0xff]
        %v1631 = vld [vmem:[#allocation8 + $0x300] sm:$0xff]
        %v1632 = vld [vmem:[#allocation8 + $0x308] sm:$0xff]
        %v1633 = vld [vmem:[#allocation8 + $0x310] sm:$0xff]
        %v1634 = vld [vmem:[#allocation8 + $0x318] sm:$0xff]
        %v1635 = vld [vmem:[#allocation8 + $0x320] sm:$0xff]
        %v1636 = vld [vmem:[#allocation8 + $0x328] sm:$0xff]
        %v1637 = vld [vmem:[#allocation8 + $0x330] sm:$0xff]
        %v1638 = vld [vmem:[#allocation8 + $0x338] sm:$0xff]
        %v1639 = vld [vmem:[#allocation8 + $0x340] sm:$0xff]
        %v1640 = vld [vmem:[#allocation8 + $0x348] sm:$0xff]
        %v1641 = vld [vmem:[#allocation8 + $0x350] sm:$0xff]
        %v1642 = vld [vmem:[#allocation8 + $0x358] sm:$0xff]
        %v1643 = vld [vmem:[#allocation8 + $0x360] sm:$0xff]
        %v1644 = vld [vmem:[#allocation8 + $0x368] sm:$0xff]
        %v1645 = vld [vmem:[#allocation8 + $0x370] sm:$0xff]
        %v1646 = vld [vmem:[#allocation8 + $0x378] sm:$0xff]
        %v1647 = vld [vmem:[#allocation8 + $0x380] sm:$0xff]
        %v1648 = vld [vmem:[#allocation8 + $0x388] sm:$0xff]
        %v1649 = vld [vmem:[#allocation8 + $0x390] sm:$0xff]
        %v1650 = vld [vmem:[#allocation8 + $0x398] sm:$0xff]
        %v1651 = vld [vmem:[#allocation8 + $0x3a0] sm:$0xff]
        %v1652 = vld [vmem:[#allocation8 + $0x3a8] sm:$0xff]
        %v1653 = vld [vmem:[#allocation8 + $0x3b0] sm:$0xff]
        %v1654 = vld [vmem:[#allocation8 + $0x3b8] sm:$0xff]
        %v1655 = vld [vmem:[#allocation8 + $0x3c0] sm:$0xff]
        %v1656 = vld [vmem:[#allocation8 + $0x3c8] sm:$0xff]
        %v1657 = vld [vmem:[#allocation8 + $0x3d0] sm:$0xff]
        %v1658 = vld [vmem:[#allocation8 + $0x3d8] sm:$0xff]
        %v1659 = vld [vmem:[#allocation8 + $0x3e0] sm:$0xff]
        %v1660 = vld [vmem:[#allocation8 + $0x3e8] sm:$0xff]
        %v1661 = vld [vmem:[#allocation8 + $0x3f0] sm:$0xff]
        %v1662 = vld [vmem:[#allocation8 + $0x3f8] sm:$0xff]
        %v1663 = vld [vmem:[#allocation10] sm:$0x3]
        %v1665 = vlaneseq
        %v1666 = vshrl.u32 %v1665, 7
        %v1667 = vsub.s32 0, %v1666
        %v1668 = vrot.slane %v1663, %v1667
        %v1669 = vlaneseq
        %v1670 = vshrl.u32 %v1669, 7
        %v1671 = vsub.s32 1, %v1670
        %v1672 = vrot.slane %v1663, %v1671
        %1675 = vmatprep.subr.mxu0 %v1536
        %1676 = vmatpush1.msra.mxu0 %v1535
        %1677 = vmatprep.subr.mxu0 %v1538
        %1678 = vmatpush1.msra.mxu0 %v1537
        %1679 = vmatprep.subr.mxu0 %v1540
        %1680 = vmatpush1.msra.mxu0 %v1539
        %1681 = vmatprep.subr.mxu0 %v1542
        %1682 = vmatpush1.msra.mxu0 %v1541
        %1683 = vmatprep.subr.mxu0 %v1544
        %1684 = vmatpush1.msra.mxu0 %v1543
        %1685 = vmatprep.subr.mxu0 %v1546
        %1686 = vmatpush1.msra.mxu0 %v1545
        %1687 = vmatprep.subr.mxu0 %v1548
        %1688 = vmatpush1.msra.mxu0 %v1547
        %1689 = vmatprep.subr.mxu0 %v1550
        %1690 = vmatpush1.msra.mxu0 %v1549
        %1691 = vmatprep.subr.mxu0 %v1552
        %1692 = vmatpush1.msra.mxu0 %v1551
        %1693 = vmatprep.subr.mxu0 %v1554
        %1694 = vmatpush1.msra.mxu0 %v1553
        %1695 = vmatprep.subr.mxu0 %v1556
        %1696 = vmatpush1.msra.mxu0 %v1555
        %1697 = vmatprep.subr.mxu0 %v1558
        %1698 = vmatpush1.msra.mxu0 %v1557
        %1699 = vmatprep.subr.mxu0 %v1560
        %1700 = vmatpush1.msra.mxu0 %v1559
        %1701 = vmatprep.subr.mxu0 %v1562
        %1702 = vmatpush1.msra.mxu0 %v1561
        %1703 = vmatprep.subr.mxu0 %v1564
        %1704 = vmatpush1.msra.mxu0 %v1563
        %1705 = vmatprep.subr.mxu0 %v1566
        %1706 = vmatpush1.msra.mxu0 %v1565
        %1707 = vmatprep.subr.mxu0 %v1568
        %1708 = vmatpush1.msra.mxu0 %v1567
        %1709 = vmatprep.subr.mxu0 %v1570
        %1710 = vmatpush1.msra.mxu0 %v1569
        %1711 = vmatprep.subr.mxu0 %v1572
        %1712 = vmatpush1.msra.mxu0 %v1571
        %1713 = vmatprep.subr.mxu0 %v1574
        %1714 = vmatpush1.msra.mxu0 %v1573
        %1715 = vmatprep.subr.mxu0 %v1576
        %1716 = vmatpush1.msra.mxu0 %v1575
        %1717 = vmatprep.subr.mxu0 %v1578
        %1718 = vmatpush1.msra.mxu0 %v1577
        %1719 = vmatprep.subr.mxu0 %v1580
        %1720 = vmatpush1.msra.mxu0 %v1579
        %1721 = vmatprep.subr.mxu0 %v1582
        %1722 = vmatpush1.msra.mxu0 %v1581
        %1723 = vmatprep.subr.mxu0 %v1584
        %1724 = vmatpush1.msra.mxu0 %v1583
        %1725 = vmatprep.subr.mxu0 %v1586
        %1726 = vmatpush1.msra.mxu0 %v1585
        %1727 = vmatprep.subr.mxu0 %v1588
        %1728 = vmatpush1.msra.mxu0 %v1587
        %1729 = vmatprep.subr.mxu0 %v1590
        %1730 = vmatpush1.msra.mxu0 %v1589
        %1731 = vmatprep.subr.mxu0 %v1592
        %1732 = vmatpush1.msra.mxu0 %v1591
        %1733 = vmatprep.subr.mxu0 %v1594
        %1734 = vmatpush1.msra.mxu0 %v1593
        %1735 = vmatprep.subr.mxu0 %v1596
        %1736 = vmatpush1.msra.mxu0 %v1595
        %1737 = vmatprep.subr.mxu0 %v1598
        %1738 = vmatpush1.msra.mxu0 %v1597
        %1739 = vmatprep.mubr.f32.mxu0 %v1532
        %1740 = vmatmul.mubr.f32.gmra.mrb[0].mxu0 %v1531
        %v1741 = vpop.f32.mrb[0].mxu0
        %v1742 = vadd.f32 %v1668, %v1741
        %v1743 = vpop.f32.mrb[0].mxu0
        %v1744 = vadd.f32 %v1672, %v1743
        %1745 = vdwg.mxu0
        %1746 = vmatprep.subr.mxu0 %v1600
        %1747 = vmatpush1.msra.mxu0 %v1599
        %1748 = vmatprep.subr.mxu0 %v1602
        %1749 = vmatpush1.msra.mxu0 %v1601
        %1750 = vmatprep.subr.mxu0 %v1604
        %1751 = vmatpush1.msra.mxu0 %v1603
        %1752 = vmatprep.subr.mxu0 %v1606
        %1753 = vmatpush1.msra.mxu0 %v1605
        %1754 = vmatprep.subr.mxu0 %v1608
        %1755 = vmatpush1.msra.mxu0 %v1607
        %1756 = vmatprep.subr.mxu0 %v1610
        %1757 = vmatpush1.msra.mxu0 %v1609
        %1758 = vmatprep.subr.mxu0 %v1612
        %1759 = vmatpush1.msra.mxu0 %v1611
        %1760 = vmatprep.subr.mxu0 %v1614
        %1761 = vmatpush1.msra.mxu0 %v1613
        %1762 = vmatprep.subr.mxu0 %v1616
        %1763 = vmatpush1.msra.mxu0 %v1615
        %1764 = vmatprep.subr.mxu0 %v1618
        %1765 = vmatpush1.msra.mxu0 %v1617
        %1766 = vmatprep.subr.mxu0 %v1620
        %1767 = vmatpush1.msra.mxu0 %v1619
        %1768 = vmatprep.subr.mxu0 %v1622
        %1769 = vmatpush1.msra.mxu0 %v1621
        %1770 = vmatprep.subr.mxu0 %v1624
        %1771 = vmatpush1.msra.mxu0 %v1623
        %1772 = vmatprep.subr.mxu0 %v1626
        %1773 = vmatpush1.msra.mxu0 %v1625
        %1774 = vmatprep.subr.mxu0 %v1628
        %1775 = vmatpush1.msra.mxu0 %v1627
        %1776 = vmatprep.subr.mxu0 %v1630
        %1777 = vmatpush1.msra.mxu0 %v1629
        %1778 = vmatprep.subr.mxu0 %v1632
        %1779 = vmatpush1.msra.mxu0 %v1631
        %1780 = vmatprep.subr.mxu0 %v1634
        %1781 = vmatpush1.msra.mxu0 %v1633
        %1782 = vmatprep.subr.mxu0 %v1636
        %1783 = vmatpush1.msra.mxu0 %v1635
        %1784 = vmatprep.subr.mxu0 %v1638
        %1785 = vmatpush1.msra.mxu0 %v1637
        %1786 = vmatprep.subr.mxu0 %v1640
        %1787 = vmatpush1.msra.mxu0 %v1639
        %1788 = vmatprep.subr.mxu0 %v1642
        %1789 = vmatpush1.msra.mxu0 %v1641
        %1790 = vmatprep.subr.mxu0 %v1644
        %1791 = vmatpush1.msra.mxu0 %v1643
        %1792 = vmatprep.subr.mxu0 %v1646
        %1793 = vmatpush1.msra.mxu0 %v1645
        %1794 = vmatprep.subr.mxu0 %v1648
        %1795 = vmatpush1.msra.mxu0 %v1647
        %1796 = vmatprep.subr.mxu0 %v1650
        %1797 = vmatpush1.msra.mxu0 %v1649
        %1798 = vmatprep.subr.mxu0 %v1652
        %1799 = vmatpush1.msra.mxu0 %v1651
        %1800 = vmatprep.subr.mxu0 %v1654
        %1801 = vmatpush1.msra.mxu0 %v1653
        %1802 = vmatprep.subr.mxu0 %v1656
        %1803 = vmatpush1.msra.mxu0 %v1655
        %1804 = vmatprep.subr.mxu0 %v1658
        %1805 = vmatpush1.msra.mxu0 %v1657
        %1806 = vmatprep.subr.mxu0 %v1660
        %1807 = vmatpush1.msra.mxu0 %v1659
        %1808 = vmatprep.subr.mxu0 %v1662
        %1809 = vmatpush1.msra.mxu0 %v1661
        %1810 = vmatprep.mubr.f32.mxu0 %v1534
        %1811 = vmatmul.mubr.f32.gmra.mrb[0].mxu0 %v1533
        %v1812 = vpop.f32.mrb[0].mxu0
        %v1813 = vadd.f32 %v1742, %v1812
        %v1814 = vpop.f32.mrb[0].mxu0
        %v1815 = vadd.f32 %v1744, %v1814
        %1816 = vdwg.mxu0
        %v1817 = vmax.f32 %v1813, 0.0
        %v1818 = vmax.f32 %v1815, 0.0
        %v1819 = vld [vmem:[#allocation11] sm:$0xff]
        %v1820 = vld [vmem:[#allocation11 + $0x8] sm:$0xff]
        %v1821 = vld [vmem:[#allocation11 + $0x10] sm:$0xff]
        %v1822 = vld [vmem:[#allocation11 + $0x18] sm:$0xff]
        %v1823 = vld [vmem:[#allocation11 + $0x20] sm:$0xff]
        %v1824 = vld [vmem:[#allocation11 + $0x28] sm:$0xff]
        %v1825 = vld [vmem:[#allocation11 + $0x30] sm:$0xff]
        %v1826 = vld [vmem:[#allocation11 + $0x38] sm:$0xff]
        %v1827 = vld [vmem:[#allocation11 + $0x40] sm:$0xff]
        %v1828 = vld [vmem:[#allocation11 + $0x48] sm:$0xff]
        %v1829 = vld [vmem:[#allocation11 + $0x50] sm:$0xff]
        %v1830 = vld [vmem:[#allocation11 + $0x58] sm:$0xff]
        %v1831 = vld [vmem:[#allocation11 + $0x60] sm:$0xff]
        %v1832 = vld [vmem:[#allocation11 + $0x68] sm:$0xff]
        %v1833 = vld [vmem:[#allocation11 + $0x70] sm:$0xff]
        %v1834 = vld [vmem:[#allocation11 + $0x78] sm:$0xff]
        %v1835 = vld [vmem:[#allocation11 + $0x80] sm:$0xff]
        %v1836 = vld [vmem:[#allocation11 + $0x88] sm:$0xff]
        %v1837 = vld [vmem:[#allocation11 + $0x90] sm:$0xff]
        %v1838 = vld [vmem:[#allocation11 + $0x98] sm:$0xff]
        %v1839 = vld [vmem:[#allocation11 + $0xa0] sm:$0xff]
        %v1840 = vld [vmem:[#allocation11 + $0xa8] sm:$0xff]
        %v1841 = vld [vmem:[#allocation11 + $0xb0] sm:$0xff]
        %v1842 = vld [vmem:[#allocation11 + $0xb8] sm:$0xff]
        %v1843 = vld [vmem:[#allocation11 + $0xc0] sm:$0xff]
        %v1844 = vld [vmem:[#allocation11 + $0xc8] sm:$0xff]
        %v1845 = vld [vmem:[#allocation11 + $0xd0] sm:$0xff]
        %v1846 = vld [vmem:[#allocation11 + $0xd8] sm:$0xff]
        %v1847 = vld [vmem:[#allocation11 + $0xe0] sm:$0xff]
        %v1848 = vld [vmem:[#allocation11 + $0xe8] sm:$0xff]
        %v1849 = vld [vmem:[#allocation11 + $0xf0] sm:$0xff]
        %v1850 = vld [vmem:[#allocation11 + $0xf8] sm:$0xff]
        %v1851 = vld [vmem:[#allocation13] sm:$0x1]
        %v1853 = vlaneseq
        %v1854 = vshrl.u32 %v1853, 7
        %v1855 = vsub.s32 0, %v1854
        %v1856 = vrot.slane %v1851, %v1855
        %1858 = vmatprep.subr.mxu0 0.0
        %1859 = vmatpush1.msra.mxu0 %v1819
        %1860 = vmatprep.subr.mxu0 0.0
        %1861 = vmatpush1.msra.mxu0 %v1820
        %1862 = vmatprep.subr.mxu0 0.0
        %1863 = vmatpush1.msra.mxu0 %v1821
        %1864 = vmatprep.subr.mxu0 0.0
        %1865 = vmatpush1.msra.mxu0 %v1822
        %1866 = vmatprep.subr.mxu0 0.0
        %1867 = vmatpush1.msra.mxu0 %v1823
        %1868 = vmatprep.subr.mxu0 0.0
        %1869 = vmatpush1.msra.mxu0 %v1824
        %1870 = vmatprep.subr.mxu0 0.0
        %1871 = vmatpush1.msra.mxu0 %v1825
        %1872 = vmatprep.subr.mxu0 0.0
        %1873 = vmatpush1.msra.mxu0 %v1826
        %1874 = vmatprep.subr.mxu0 0.0
        %1875 = vmatpush1.msra.mxu0 %v1827
        %1876 = vmatprep.subr.mxu0 0.0
        %1877 = vmatpush1.msra.mxu0 %v1828
        %1878 = vmatprep.subr.mxu0 0.0
        %1879 = vmatpush1.msra.mxu0 %v1829
        %1880 = vmatprep.subr.mxu0 0.0
        %1881 = vmatpush1.msra.mxu0 %v1830
        %1882 = vmatprep.subr.mxu0 0.0
        %1883 = vmatpush1.msra.mxu0 %v1831
        %1884 = vmatprep.subr.mxu0 0.0
        %1885 = vmatpush1.msra.mxu0 %v1832
        %1886 = vmatprep.subr.mxu0 0.0
        %1887 = vmatpush1.msra.mxu0 %v1833
        %1888 = vmatprep.subr.mxu0 0.0
        %1889 = vmatpush1.msra.mxu0 %v1834
        %1890 = vmatprep.subr.mxu0 0.0
        %1891 = vmatpush1.msra.mxu0 %v1835
        %1892 = vmatprep.subr.mxu0 0.0
        %1893 = vmatpush1.msra.mxu0 %v1836
        %1894 = vmatprep.subr.mxu0 0.0
        %1895 = vmatpush1.msra.mxu0 %v1837
        %1896 = vmatprep.subr.mxu0 0.0
        %1897 = vmatpush1.msra.mxu0 %v1838
        %1898 = vmatprep.subr.mxu0 0.0
        %1899 = vmatpush1.msra.mxu0 %v1839
        %1900 = vmatprep.subr.mxu0 0.0
        %1901 = vmatpush1.msra.mxu0 %v1840
        %1902 = vmatprep.subr.mxu0 0.0
        %1903 = vmatpush1.msra.mxu0 %v1841
        %1904 = vmatprep.subr.mxu0 0.0
        %1905 = vmatpush1.msra.mxu0 %v1842
        %1906 = vmatprep.subr.mxu0 0.0
        %1907 = vmatpush1.msra.mxu0 %v1843
        %1908 = vmatprep.subr.mxu0 0.0
        %1909 = vmatpush1.msra.mxu0 %v1844
        %1910 = vmatprep.subr.mxu0 0.0
        %1911 = vmatpush1.msra.mxu0 %v1845
        %1912 = vmatprep.subr.mxu0 0.0
        %1913 = vmatpush1.msra.mxu0 %v1846
        %1914 = vmatprep.subr.mxu0 0.0
        %1915 = vmatpush1.msra.mxu0 %v1847
        %1916 = vmatprep.subr.mxu0 0.0
        %1917 = vmatpush1.msra.mxu0 %v1848
        %1918 = vmatprep.subr.mxu0 0.0
        %1919 = vmatpush1.msra.mxu0 %v1849
        %1920 = vmatprep.subr.mxu0 0.0
        %1921 = vmatpush1.msra.mxu0 %v1850
        %1922 = vmatprep.mubr.f32.mxu0 %v1818
        %1923 = vmatmul.mubr.f32.gmra.mrb[0].mxu0 %v1817
        %v1924 = vpop.f32.mrb[0].mxu0
        %v1925 = vadd.f32 %v1856, %v1924
        %v1926 = vpop.f32.mrb[0].mxu0
        %1927 = vdwg.mxu0
        %v1928 = vmax.f32 %v1925, 0.0
        %v1929 = vld [vmem:[#allocation14] sm:$0xff]
        %v1930 = vld [vmem:[#allocation14 + $0x8] sm:$0xff]
        %v1931 = vld [vmem:[#allocation14 + $0x10] sm:$0xff]
        %v1932 = vld [vmem:[#allocation14 + $0x18] sm:$0xff]
        %v1933 = vld [vmem:[#allocation14 + $0x20] sm:$0xff]
        %v1934 = vld [vmem:[#allocation14 + $0x28] sm:$0xff]
        %v1935 = vld [vmem:[#allocation14 + $0x30] sm:$0xff]
        %v1936 = vld [vmem:[#allocation14 + $0x38] sm:$0xff]
        %v1937 = vld [vmem:[#allocation14 + $0x40] sm:$0xff]
        %v1938 = vld [vmem:[#allocation14 + $0x48] sm:$0xff]
        %v1939 = vld [vmem:[#allocation14 + $0x50] sm:$0xff]
        %v1940 = vld [vmem:[#allocation14 + $0x58] sm:$0xff]
        %v1941 = vld [vmem:[#allocation14 + $0x60] sm:$0xff]
        %v1942 = vld [vmem:[#allocation14 + $0x68] sm:$0xff]
        %v1943 = vld [vmem:[#allocation14 + $0x70] sm:$0xff]
        %v1944 = vld [vmem:[#allocation14 + $0x78] sm:$0xff]
        %v1945 = vld [vmem:[#allocation16] sm:$0x1]
        %v1947 = vlaneseq
        %v1948 = vshrl.u32 %v1947, 7
        %v1949 = vsub.s32 0, %v1948
        %v1950 = vrot.slane %v1945, %v1949
        %1952 = vmatprep.subr.mxu0 0.0
        %1953 = vmatpush1.msra.mxu0 %v1929
        %1954 = vmatprep.subr.mxu0 0.0
        %1955 = vmatpush1.msra.mxu0 %v1930
        %1956 = vmatprep.subr.mxu0 0.0
        %1957 = vmatpush1.msra.mxu0 %v1931
        %1958 = vmatprep.subr.mxu0 0.0
        %1959 = vmatpush1.msra.mxu0 %v1932
        %1960 = vmatprep.subr.mxu0 0.0
        %1961 = vmatpush1.msra.mxu0 %v1933
        %1962 = vmatprep.subr.mxu0 0.0
        %1963 = vmatpush1.msra.mxu0 %v1934
        %1964 = vmatprep.subr.mxu0 0.0
        %1965 = vmatpush1.msra.mxu0 %v1935
        %1966 = vmatprep.subr.mxu0 0.0
        %1967 = vmatpush1.msra.mxu0 %v1936
        %1968 = vmatprep.subr.mxu0 0.0
        %1969 = vmatpush1.msra.mxu0 %v1937
        %1970 = vmatprep.subr.mxu0 0.0
        %1971 = vmatpush1.msra.mxu0 %v1938
        %1972 = vmatprep.subr.mxu0 0.0
        %1973 = vmatpush1.msra.mxu0 %v1939
        %1974 = vmatprep.subr.mxu0 0.0
        %1975 = vmatpush1.msra.mxu0 %v1940
        %1976 = vmatprep.subr.mxu0 0.0
        %1977 = vmatpush1.msra.mxu0 %v1941
        %1978 = vmatprep.subr.mxu0 0.0
        %1979 = vmatpush1.msra.mxu0 %v1942
        %1980 = vmatprep.subr.mxu0 0.0
        %1981 = vmatpush1.msra.mxu0 %v1943
        %1982 = vmatprep.subr.mxu0 0.0
        %1983 = vmatpush1.msra.mxu0 %v1944
        %1984 = vmatprep.subr.mxu0 0.0
        %1985 = vmatpush1.msra.mxu0 0.0
        %1986 = vmatprep.subr.mxu0 0.0
        %1987 = vmatpush1.msra.mxu0 0.0
        %1988 = vmatprep.subr.mxu0 0.0
        %1989 = vmatpush1.msra.mxu0 0.0
        %1990 = vmatprep.subr.mxu0 0.0
        %1991 = vmatpush1.msra.mxu0 0.0
        %1992 = vmatprep.subr.mxu0 0.0
        %1993 = vmatpush1.msra.mxu0 0.0
        %1994 = vmatprep.subr.mxu0 0.0
        %1995 = vmatpush1.msra.mxu0 0.0
        %1996 = vmatprep.subr.mxu0 0.0
        %1997 = vmatpush1.msra.mxu0 0.0
        %1998 = vmatprep.subr.mxu0 0.0
        %1999 = vmatpush1.msra.mxu0 0.0
        %2000 = vmatprep.subr.mxu0 0.0
        %2001 = vmatpush1.msra.mxu0 0.0
        %2002 = vmatprep.subr.mxu0 0.0
        %2003 = vmatpush1.msra.mxu0 0.0
        %2004 = vmatprep.subr.mxu0 0.0
        %2005 = vmatpush1.msra.mxu0 0.0
        %2006 = vmatprep.subr.mxu0 0.0
        %2007 = vmatpush1.msra.mxu0 0.0
        %2008 = vmatprep.subr.mxu0 0.0
        %2009 = vmatpush1.msra.mxu0 0.0
        %2010 = vmatprep.subr.mxu0 0.0
        %2011 = vmatpush1.msra.mxu0 0.0
        %2012 = vmatprep.subr.mxu0 0.0
        %2013 = vmatpush1.msra.mxu0 0.0
        %2014 = vmatprep.subr.mxu0 0.0
        %2015 = vmatpush1.msra.mxu0 0.0
        %2016 = vmatprep.mubr.f32.mxu0 0.0
        %2017 = vmatmul.mubr.f32.gmra.mrb[0].mxu0 %v1928
        %v2018 = vpop.f32.mrb[0].mxu0
        %v2019 = vadd.f32 %v1950, %v2018
        %v2020 = vpop.f32.mrb[0].mxu0
        %2021 = vdwg.mxu0
        %v2022 = vmax.f32 %v2019, 0.0
        %v2023 = vld [vmem:[#allocation17] sm:$0xff]
        %v2024 = vld [vmem:[#allocation17 + $0x8] sm:$0xff]
        %v2025 = vld [vmem:[#allocation17 + $0x10] sm:$0xff]
        %v2026 = vld [vmem:[#allocation17 + $0x18] sm:$0xff]
        %v2027 = vld [vmem:[#allocation17 + $0x20] sm:$0xff]
        %v2028 = vld [vmem:[#allocation17 + $0x28] sm:$0xff]
        %v2029 = vld [vmem:[#allocation17 + $0x30] sm:$0xff]
        %v2030 = vld [vmem:[#allocation17 + $0x38] sm:$0xff]
        %v2031 = vld [vmem:[#allocation17 + $0x40] sm:$0xff]
        %v2032 = vld [vmem:[#allocation17 + $0x48] sm:$0xff]
        %v2033 = vld [vmem:[#allocation17 + $0x50] sm:$0xff]
        %v2034 = vld [vmem:[#allocation17 + $0x58] sm:$0xff]
        %v2035 = vld [vmem:[#allocation17 + $0x60] sm:$0xff]
        %v2036 = vld [vmem:[#allocation17 + $0x68] sm:$0xff]
        %v2037 = vld [vmem:[#allocation17 + $0x70] sm:$0xff]
        %v2038 = vld [vmem:[#allocation17 + $0x78] sm:$0xff]
        %v2039 = vld [vmem:[#allocation19] sm:$0x1]
        %v2041 = vlaneseq
        %v2042 = vshrl.u32 %v2041, 7
        %v2043 = vsub.s32 0, %v2042
        %v2044 = vrot.slane %v2039, %v2043
        %2046 = vmatprep.subr.mxu0 0.0
        %2047 = vmatpush1.msra.mxu0 %v2023
        %2048 = vmatprep.subr.mxu0 0.0
        %2049 = vmatpush1.msra.mxu0 %v2024
        %2050 = vmatprep.subr.mxu0 0.0
        %2051 = vmatpush1.msra.mxu0 %v2025
        %2052 = vmatprep.subr.mxu0 0.0
        %2053 = vmatpush1.msra.mxu0 %v2026
        %2054 = vmatprep.subr.mxu0 0.0
        %2055 = vmatpush1.msra.mxu0 %v2027
        %2056 = vmatprep.subr.mxu0 0.0
        %2057 = vmatpush1.msra.mxu0 %v2028
        %2058 = vmatprep.subr.mxu0 0.0
        %2059 = vmatpush1.msra.mxu0 %v2029
        %2060 = vmatprep.subr.mxu0 0.0
        %2061 = vmatpush1.msra.mxu0 %v2030
        %2062 = vmatprep.subr.mxu0 0.0
        %2063 = vmatpush1.msra.mxu0 %v2031
        %2064 = vmatprep.subr.mxu0 0.0
        %2065 = vmatpush1.msra.mxu0 %v2032
        %2066 = vmatprep.subr.mxu0 0.0
        %2067 = vmatpush1.msra.mxu0 %v2033
        %2068 = vmatprep.subr.mxu0 0.0
        %2069 = vmatpush1.msra.mxu0 %v2034
        %2070 = vmatprep.subr.mxu0 0.0
        %2071 = vmatpush1.msra.mxu0 %v2035
        %2072 = vmatprep.subr.mxu0 0.0
        %2073 = vmatpush1.msra.mxu0 %v2036
        %2074 = vmatprep.subr.mxu0 0.0
        %2075 = vmatpush1.msra.mxu0 %v2037
        %2076 = vmatprep.subr.mxu0 0.0
        %2077 = vmatpush1.msra.mxu0 %v2038
        %2078 = vmatprep.subr.mxu0 0.0
        %2079 = vmatpush1.msra.mxu0 0.0
        %2080 = vmatprep.subr.mxu0 0.0
        %2081 = vmatpush1.msra.mxu0 0.0
        %2082 = vmatprep.subr.mxu0 0.0
        %2083 = vmatpush1.msra.mxu0 0.0
        %2084 = vmatprep.subr.mxu0 0.0
        %2085 = vmatpush1.msra.mxu0 0.0
        %2086 = vmatprep.subr.mxu0 0.0
        %2087 = vmatpush1.msra.mxu0 0.0
        %2088 = vmatprep.subr.mxu0 0.0
        %2089 = vmatpush1.msra.mxu0 0.0
        %2090 = vmatprep.subr.mxu0 0.0
        %2091 = vmatpush1.msra.mxu0 0.0
        %2092 = vmatprep.subr.mxu0 0.0
        %2093 = vmatpush1.msra.mxu0 0.0
        %2094 = vmatprep.subr.mxu0 0.0
        %2095 = vmatpush1.msra.mxu0 0.0
        %2096 = vmatprep.subr.mxu0 0.0
        %2097 = vmatpush1.msra.mxu0 0.0
        %2098 = vmatprep.subr.mxu0 0.0
        %2099 = vmatpush1.msra.mxu0 0.0
        %2100 = vmatprep.subr.mxu0 0.0
        %2101 = vmatpush1.msra.mxu0 0.0
        %2102 = vmatprep.subr.mxu0 0.0
        %2103 = vmatpush1.msra.mxu0 0.0
        %2104 = vmatprep.subr.mxu0 0.0
        %2105 = vmatpush1.msra.mxu0 0.0
        %2106 = vmatprep.subr.mxu0 0.0
        %2107 = vmatpush1.msra.mxu0 0.0
        %2108 = vmatprep.subr.mxu0 0.0
        %2109 = vmatpush1.msra.mxu0 0.0
        %2110 = vmatprep.mubr.f32.mxu0 0.0
        %2111 = vmatmul.mubr.f32.gmra.mrb[0].mxu0 %v2022
        %v2112 = vpop.f32.mrb[0].mxu0
        %v2113 = vadd.f32 %v2044, %v2112
        %v2114 = vpop.f32.mrb[0].mxu0
        %2115 = vdwg.mxu0
        %2116 = vst [vmem:[%s537] sm:$0xff] %v2113
        %s2117 = sand.u32 %s277, 1
        %s2118 = scalar_lea.sflag [#allocation4], %s2117
        %s2119 = sand.u32 %s277, 1
        %s2120 = smul.addr %s2119, 8
        %s2121 = scalar_lea.vmem [#allocation20], %s2120
        // Predicated region
        $region109: #{tpu_custom_call.1} parent=63 // pred_check
          %p2122 = pneg %p287
        $region110: #{tpu_custom_call.1} parent=63 // pred_check_branch
          %2124 = sbr.rel (%p2122) target = $region112
        $region111: #{tpu_custom_call.1} parent=63 // pred_region
          %s2126 = ssub.s32 128, 128
          %2127 = vsyncadd %s2118, %s2126
          %s2128 = smul.addr %s33, 128
          %s2129 = scalar_lea.hbm %s11, %s2128
          %s2131 = sshll.u32 %s2121, 4
          %s2132 = int_to_ptr.vmem [resolvable:$true] %s2131
          %2134 = dma.vmem_to_hbm [thread:$0]  %s2132, 128, %s2129, %s2118
        $region112: #{tpu_custom_call.1} parent=63 // pred_fallthru
          _
      $region64: #{tpu_custom_call.1} parent=5 // pred_fallthru
        _
      %p2135 = scmp.le.s32.totalorder 2, %s28
      // Predicated region
      $region113: #{tpu_custom_call.1} parent=5 // pred_check
        %p2136 = pneg %p2135
      $region114: #{tpu_custom_call.1} parent=5 // pred_check_branch
        %2138 = sbr.rel (%p2136) target = $region116
      $region115: #{tpu_custom_call.1} parent=5 // pred_region
        %s2139 = ssub.s32 %s28, 2
        // Predicated region
        $region117: #{tpu_custom_call.1} parent=115 // pred_check
          %p2140 = pneg %p293
        $region118: #{tpu_custom_call.1} parent=115 // pred_check_branch
          %2142 = sbr.rel (%p2140) target = $region120
        $region119: #{tpu_custom_call.1} parent=115 // pred_region
          %s2143 = sand.u32 %s278, 1
          %s2144 = scalar_lea.sflag [#allocation4], %s2143
          %s2145 = sand.u32 %s278, 1
          %s2146 = smul.addr %s2145, 8
          %s2147 = scalar_lea.vmem [#allocation20], %s2146
          %2148 = dma.done %s2144, 128
        $region120: #{tpu_custom_call.1} parent=115 // pred_fallthru
          _
      $region116: #{tpu_custom_call.1} parent=5 // pred_fallthru
        _
    $region6: #{tpu_custom_call.1} parent=1 // loop_footer
      %s32 = sadd.s32 1, %s28
    $region7: #{tpu_custom_call.1} parent=1 // loop_footer_branch
      %27 = sbr.rel target = $region3
    $region8: #{tpu_custom_call.1} parent=1 // loop_exit
      _
    %2149 = vsyncpa [#allocation3], 1
    %s2150 = scalar_lea.sflag [#allocation3], 1
    %2151 = vsyncpa %s2150, 1
    %2152 = vsyncpa [#allocation6], 1
    %2153 = vsyncpa [#allocation9], 1
    %2154 = vsyncpa [#allocation12], 1
    %2155 = vsyncpa [#allocation15], 1
    %2156 = vsyncpa [#allocation18], 1
    %2157 = vsyncpa [#allocation4], 1
    %s2158 = scalar_lea.sflag [#allocation4], 1
    %2159 = vsyncpa %s2158, 1

// kernel: tpu_custom_call.1
$region0: #{tpu_custom_call.1}
  #allocation0 [shape = 'u32[]', space=smem, size = 0x4, offset = 0x4, fixed_abs, tag = 'smem constant byte address 0x4 - core index']
  #allocation1 [shape = 'u32[144,128]{1,0:T(1,128)}', space=vmem, size = 0x12000, scoped, tag = 'internal scratch']
  %s0 = inlined_call_operand.hbm [shape: f32[16,784], index: 0, kind: input, shape index: {}]
  %s1 = inlined_call_operand.hbm [shape: f32[784,512], index: 1, kind: input, shape index: {}]
  %s2 = inlined_call_operand.hbm [shape: f32[1,512], index: 2, kind: input, shape index: {}]
  %s3 = inlined_call_operand.hbm [shape: f32[512,256], index: 3, kind: input, shape index: {}]
  %s4 = inlined_call_operand.hbm [shape: f32[1,256], index: 4, kind: input, shape index: {}]
  %s5 = inlined_call_operand.hbm [shape: f32[256,128], index: 5, kind: input, shape index: {}]
  %s6 = inlined_call_operand.hbm [shape: f32[1,128], index: 6, kind: input, shape index: {}]
  %s7 = inlined_call_operand.hbm [shape: f32[128,128], index: 7, kind: input, shape index: {}]
  %s8 = inlined_call_operand.hbm [shape: f32[1,128], index: 8, kind: input, shape index: {}]
  %s9 = inlined_call_operand.hbm [shape: f32[128,128], index: 9, kind: input, shape index: {}]
  %s10 = inlined_call_operand.hbm [shape: f32[1,128], index: 10, kind: input, shape index: {}]
  %s11 = inlined_call_operand.hbm [shape: f32[16,128], index: 11, kind: output, shape index: {}]
  %s12 = sld [smem:[#allocation0]]
  $region121: #{tpu_custom_call.1} parent=0
    _
  %s14 = ssub.s32 1, %s12
  %s15 = scalar_select 0, %s14, %s12
  $region1: #{tpu_custom_call.1} parent=0
    #allocation2 [shape = 'u8[57344]{0}', space=vmem, size = 0xe000, scoped, tag = 'input window, operand 0']
    #allocation3 [shape = 's32[2]{0}', space=sflag, size = 0x8, scoped, tag = 'scoped memory for tpu_custom_call.1']
    #allocation4 [shape = 's32[2]{0}', space=sflag, size = 0x8, scoped, tag = 'scoped memory for tpu_custom_call.1']
    #allocation5 [shape = 'u8[1605632]{0}', space=vmem, size = 0x188000, scoped, tag = 'input window, operand 1, single buffered']
    #allocation6 [shape = 's32[1]{0}', space=sflag, size = 0x4, scoped, tag = 'scoped memory for tpu_custom_call.1']
    #allocation7 [shape = 'u8[2048]{0}', space=vmem, size = 0x800, scoped, tag = 'input window, operand 2, single buffered']
    #allocation8 [shape = 'u8[524288]{0}', space=vmem, size = 0x80000, scoped, tag = 'input window, operand 3, single buffered']
    #allocation9 [shape = 's32[1]{0}', space=sflag, size = 0x4, scoped, tag = 'scoped memory for tpu_custom_call.1']
    #allocation10 [shape = 'u8[1024]{0}', space=vmem, size = 0x400, scoped, tag = 'input window, operand 4, single buffered']
    #allocation11 [shape = 'u8[131072]{0}', space=vmem, size = 0x20000, scoped, tag = 'input window, operand 5, single buffered']
    #allocation12 [shape = 's32[1]{0}', space=sflag, size = 0x4, scoped, tag = 'scoped memory for tpu_custom_call.1']
    #allocation13 [shape = 'u8[512]{0}', space=vmem, size = 0x400, scoped, tag = 'input window, operand 6, single buffered']
    #allocation14 [shape = 'u8[65536]{0}', space=vmem, size = 0x10000, scoped, tag = 'input window, operand 7, single buffered']
    #allocation15 [shape = 's32[1]{0}', space=sflag, size = 0x4, scoped, tag = 'scoped memory for tpu_custom_call.1']
    #allocation16 [shape = 'u8[512]{0}', space=vmem, size = 0x400, scoped, tag = 'input window, operand 8, single buffered']
    #allocation17 [shape = 'u8[65536]{0}', space=vmem, size = 0x10000, scoped, tag = 'input window, operand 9, single buffered']
    #allocation18 [shape = 's32[1]{0}', space=sflag, size = 0x4, scoped, tag = 'scoped memory for tpu_custom_call.1']
    #allocation19 [shape = 'u8[512]{0}', space=vmem, size = 0x400, scoped, tag = 'input window, operand 10, single buffered']
    #allocation20 [shape = 'u8[8192]{0}', space=vmem, size = 0x2000, scoped, tag = 'output window, operand 0']
    %16 = vsyncpa [#allocation3], 0
    %s17 = scalar_lea.sflag [#allocation3], 1
    %18 = vsyncpa %s17, 0
    %19 = vsyncpa [#allocation6], 0
    %20 = vsyncpa [#allocation9], 0
    %21 = vsyncpa [#allocation12], 0
    %22 = vsyncpa [#allocation15], 0
    %23 = vsyncpa [#allocation18], 0
    %24 = vsyncpa [#allocation4], 0
    %s25 = scalar_lea.sflag [#allocation4], 1
    %26 = vsyncpa %s25, 0
    loop: start=0, step=1, limit=4
    $region2: #{tpu_custom_call.1} parent=1 // loop_pre_header
      _
    $region3: #{tpu_custom_call.1} parent=1 // loop_header
      %s28 = sphi 0, %s32
      %p29 = scmp.ge.s32.totalorder %s28, 4
      %s38 = sphi 0, %s40
      %s41 = sphi 0, %s38
      %s42 = sphi 0, %s41
      %s58 = sphi 0, %s42
      %s62 = sphi 0, %s62
      %s64 = sphi 0, %s62
      %s65 = sphi 0, %s64
      %s79 = sphi 0, %s65
      %s83 = sphi 0, %s83
      %s85 = sphi 0, %s83
      %s86 = sphi 0, %s85
      %s100 = sphi 0, %s86
      %s104 = sphi 0, %s104
      %s106 = sphi 0, %s104
      %s107 = sphi 0, %s106
      %s121 = sphi 0, %s107
      %s125 = sphi 0, %s125
      %s127 = sphi 0, %s125
      %s128 = sphi 0, %s127
      %s142 = sphi 0, %s128
      %s146 = sphi 0, %s146
      %s148 = sphi 0, %s146
      %s149 = sphi 0, %s148
      %s163 = sphi 0, %s149
      %s167 = sphi 0, %s167
      %s169 = sphi 0, %s167
      %s170 = sphi 0, %s169
      %s184 = sphi 0, %s170
      %s188 = sphi 0, %s188
      %s190 = sphi 0, %s188
      %s191 = sphi 0, %s190
      %s205 = sphi 0, %s191
      %s209 = sphi 0, %s209
      %s211 = sphi 0, %s209
      %s212 = sphi 0, %s211
      %s226 = sphi 0, %s212
      %s230 = sphi 0, %s230
      %s232 = sphi 0, %s230
      %s233 = sphi 0, %s232
      %s247 = sphi 0, %s233
      %s251 = sphi 0, %s251
      %s253 = sphi 0, %s251
      %s254 = sphi 0, %s253
      %s268 = sphi 0, %s254
      %s274 = sphi 0, %s276
      %s277 = sphi 0, %s274
      %s278 = sphi 0, %s277
      %s294 = sphi 0, %s278
    $region4: #{tpu_custom_call.1} parent=1 // loop_header_branch
      %31 = sbr.rel (%p29) target = $region8
    $region5: #{tpu_custom_call.1} parent=1 // loop_body
      %s33 = ssub.s32 %s28, 1
      %s34 = ssub.s32 %s28, 2
      %s35 = sadd.s32 %s28, 1
      %s36 = ssub.s32 %s28, %s35
      %p37 = scmp.eq.s32.totalorder %s36, 0
      %s39 = sadd.s32 %s38, 1
      %s40 = scalar_select %p37, %s38, %s39
      %p43 = pneg %p37
      %p44 = scmp.eq.s32.totalorder %s28, 1
      %p45 = por %p43, %p44
      %p46 = scmp.ne.s32.totalorder %s38, %s41
      %p47 = scmp.eq.s32.totalorder %s28, 0
      %p48 = por %p46, %p47
      %p49 = scmp.ne.s32.totalorder %s38, %s41
      %p50 = scmp.eq.s32.totalorder %s33, 1
      %p51 = por %p49, %p50
      %p52 = scmp.ne.s32.totalorder %s41, %s42
      %p53 = scmp.eq.s32.totalorder %s33, 0
      %p54 = por %p52, %p53
      %p55 = scmp.ne.s32.totalorder %s41, %s42
      %p56 = scmp.eq.s32.totalorder %s34, 1
      %p57 = por %p55, %p56
      %p59 = scmp.ne.s32.totalorder %s42, %s58
      %p60 = scmp.eq.s32.totalorder %s34, 0
      %p61 = por %p59, %p60
      %s63 = sadd.s32 %s62, 1
      %p66 = scmp.eq.s32.totalorder %s28, 1
      %p67 = scmp.ne.s32.totalorder %s62, %s64
      %p68 = scmp.eq.s32.totalorder %s28, 0
      %p69 = por %p67, %p68
      %p70 = scmp.ne.s32.totalorder %s62, %s64
      %p71 = scmp.eq.s32.totalorder %s33, 1
      %p72 = por %p70, %p71
      %p73 = scmp.ne.s32.totalorder %s64, %s65
      %p74 = scmp.eq.s32.totalorder %s33, 0
      %p75 = por %p73, %p74
      %p76 = scmp.ne.s32.totalorder %s64, %s65
      %p77 = scmp.eq.s32.totalorder %s34, 1
      %p78 = por %p76, %p77
      %p80 = scmp.ne.s32.totalorder %s65, %s79
      %p81 = scmp.eq.s32.totalorder %s34, 0
      %p82 = por %p80, %p81
      %s84 = sadd.s32 %s83, 1
      %p87 = scmp.eq.s32.totalorder %s28, 1
      %p88 = scmp.ne.s32.totalorder %s83, %s85
      %p89 = scmp.eq.s32.totalorder %s28, 0
      %p90 = por %p88, %p89
      %p91 = scmp.ne.s32.totalorder %s83, %s85
      %p92 = scmp.eq.s32.totalorder %s33, 1
      %p93 = por %p91, %p92
      %p94 = scmp.ne.s32.totalorder %s85, %s86
      %p95 = scmp.eq.s32.totalorder %s33, 0
      %p96 = por %p94, %p95
      %p97 = scmp.ne.s32.totalorder %s85, %s86
      %p98 = scmp.eq.s32.totalorder %s34, 1
      %p99 = por %p97, %p98
      %p101 = scmp.ne.s32.totalorder %s86, %s100
      %p102 = scmp.eq.s32.totalorder %s34, 0
      %p103 = por %p101, %p102
      %s105 = sadd.s32 %s104, 1
      %p108 = scmp.eq.s32.totalorder %s28, 1
      %p109 = scmp.ne.s32.totalorder %s104, %s106
      %p110 = scmp.eq.s32.totalorder %s28, 0
      %p111 = por %p109, %p110
      %p112 = scmp.ne.s32.totalorder %s104, %s106
      %p113 = scmp.eq.s32.totalorder %s33, 1
      %p114 = por %p112, %p113
      %p115 = scmp.ne.s32.totalorder %s106, %s107
      %p116 = scmp.eq.s32.totalorder %s33, 0
      %p117 = por %p115, %p116
      %p118 = scmp.ne.s32.totalorder %s106, %s107
      %p119 = scmp.eq.s32.totalorder %s34, 1
      %p120 = por %p118, %p119
      %p122 = scmp.ne.s32.totalorder %s107, %s121
      %p123 = scmp.eq.s32.totalorder %s34, 0
      %p124 = por %p122, %p123
      %s126 = sadd.s32 %s125, 1
      %p129 = scmp.eq.s32.totalorder %s28, 1
      %p130 = scmp.ne.s32.totalorder %s125, %s127
      %p131 = scmp.eq.s32.totalorder %s28, 0
      %p132 = por %p130, %p131
      %p133 = scmp.ne.s32.totalorder %s125, %s127
      %p134 = scmp.eq.s32.totalorder %s33, 1
      %p135 = por %p133, %p134
      %p136 = scmp.ne.s32.totalorder %s127, %s128
      %p137 = scmp.eq.s32.totalorder %s33, 0
      %p138 = por %p136, %p137
      %p139 = scmp.ne.s32.totalorder %s127, %s128
      %p140 = scmp.eq.s32.totalorder %s34, 1
      %p141 = por %p139, %p140
      %p143 = scmp.ne.s32.totalorder %s128, %s142
      %p144 = scmp.eq.s32.totalorder %s34, 0
      %p145 = por %p143, %p144
      %s147 = sadd.s32 %s146, 1
      %p150 = scmp.eq.s32.totalorder %s28, 1
      %p151 = scmp.ne.s32.totalorder %s146, %s148
      %p152 = scmp.eq.s32.totalorder %s28, 0
      %p153 = por %p151, %p152
      %p154 = scmp.ne.s32.totalorder %s146, %s148
      %p155 = scmp.eq.s32.totalorder %s33, 1
      %p156 = por %p154, %p155
      %p157 = scmp.ne.s32.totalorder %s148, %s149
      %p158 = scmp.eq.s32.totalorder %s33, 0
      %p159 = por %p157, %p158
      %p160 = scmp.ne.s32.totalorder %s148, %s149
      %p161 = scmp.eq.s32.totalorder %s34, 1
      %p162 = por %p160, %p161
      %p164 = scmp.ne.s32.totalorder %s149, %s163
      %p165 = scmp.eq.s32.totalorder %s34, 0
      %p166 = por %p164, %p165
      %s168 = sadd.s32 %s167, 1
      %p171 = scmp.eq.s32.totalorder %s28, 1
      %p172 = scmp.ne.s32.totalorder %s167, %s169
      %p173 = scmp.eq.s32.totalorder %s28, 0
      %p174 = por %p172, %p173
      %p175 = scmp.ne.s32.totalorder %s167, %s169
      %p176 = scmp.eq.s32.totalorder %s33, 1
      %p177 = por %p175, %p176
      %p178 = scmp.ne.s32.totalorder %s169, %s170
      %p179 = scmp.eq.s32.totalorder %s33, 0
      %p180 = por %p178, %p179
      %p181 = scmp.ne.s32.totalorder %s169, %s170
      %p182 = scmp.eq.s32.totalorder %s34, 1
      %p183 = por %p181, %p182
      %p185 = scmp.ne.s32.totalorder %s170, %s184
      %p186 = scmp.eq.s32.totalorder %s34, 0
      %p187 = por %p185, %p186
      %s189 = sadd.s32 %s188, 1
      %p192 = scmp.eq.s32.totalorder %s28, 1
      %p193 = scmp.ne.s32.totalorder %s188, %s190
      %p194 = scmp.eq.s32.totalorder %s28, 0
      %p195 = por %p193, %p194
      %p196 = scmp.ne.s32.totalorder %s188, %s190
      %p197 = scmp.eq.s32.totalorder %s33, 1
      %p198 = por %p196, %p197
      %p199 = scmp.ne.s32.totalorder %s190, %s191
      %p200 = scmp.eq.s32.totalorder %s33, 0
      %p201 = por %p199, %p200
      %p202 = scmp.ne.s32.totalorder %s190, %s191
      %p203 = scmp.eq.s32.totalorder %s34, 1
      %p204 = por %p202, %p203
      %p206 = scmp.ne.s32.totalorder %s191, %s205
      %p207 = scmp.eq.s32.totalorder %s34, 0
      %p208 = por %p206, %p207
      %s210 = sadd.s32 %s209, 1
      %p213 = scmp.eq.s32.totalorder %s28, 1
      %p214 = scmp.ne.s32.totalorder %s209, %s211
      %p215 = scmp.eq.s32.totalorder %s28, 0
      %p216 = por %p214, %p215
      %p217 = scmp.ne.s32.totalorder %s209, %s211
      %p218 = scmp.eq.s32.totalorder %s33, 1
      %p219 = por %p217, %p218
      %p220 = scmp.ne.s32.totalorder %s211, %s212
      %p221 = scmp.eq.s32.totalorder %s33, 0
      %p222 = por %p220, %p221
      %p223 = scmp.ne.s32.totalorder %s211, %s212
      %p224 = scmp.eq.s32.totalorder %s34, 1
      %p225 = por %p223, %p224
      %p227 = scmp.ne.s32.totalorder %s212, %s226
      %p228 = scmp.eq.s32.totalorder %s34, 0
      %p229 = por %p227, %p228
      %s231 = sadd.s32 %s230, 1
      %p234 = scmp.eq.s32.totalorder %s28, 1
      %p235 = scmp.ne.s32.totalorder %s230, %s232
      %p236 = scmp.eq.s32.totalorder %s28, 0
      %p237 = por %p235, %p236
      %p238 = scmp.ne.s32.totalorder %s230, %s232
      %p239 = scmp.eq.s32.totalorder %s33, 1
      %p240 = por %p238, %p239
      %p241 = scmp.ne.s32.totalorder %s232, %s233
      %p242 = scmp.eq.s32.totalorder %s33, 0
      %p243 = por %p241, %p242
      %p244 = scmp.ne.s32.totalorder %s232, %s233
      %p245 = scmp.eq.s32.totalorder %s34, 1
      %p246 = por %p244, %p245
      %p248 = scmp.ne.s32.totalorder %s233, %s247
      %p249 = scmp.eq.s32.totalorder %s34, 0
      %p250 = por %p248, %p249
      %s252 = sadd.s32 %s251, 1
      %p255 = scmp.eq.s32.totalorder %s28, 1
      %p256 = scmp.ne.s32.totalorder %s251, %s253
      %p257 = scmp.eq.s32.totalorder %s28, 0
      %p258 = por %p256, %p257
      %p259 = scmp.ne.s32.totalorder %s251, %s253
      %p260 = scmp.eq.s32.totalorder %s33, 1
      %p261 = por %p259, %p260
      %p262 = scmp.ne.s32.totalorder %s253, %s254
      %p263 = scmp.eq.s32.totalorder %s33, 0
      %p264 = por %p262, %p263
      %p265 = scmp.ne.s32.totalorder %s253, %s254
      %p266 = scmp.eq.s32.totalorder %s34, 1
      %p267 = por %p265, %p266
      %p269 = scmp.ne.s32.totalorder %s254, %s268
      %p270 = scmp.eq.s32.totalorder %s34, 0
      %p271 = por %p269, %p270
      %s272 = ssub.s32 %s28, %s35
      %p273 = scmp.eq.s32.totalorder %s272, 0
      %s275 = sadd.s32 %s274, 1
      %s276 = scalar_select %p273, %s274, %s275
      %p279 = pneg %p273
      %p280 = scmp.eq.s32.totalorder %s28, 1
      %p281 = por %p279, %p280
      %p282 = scmp.ne.s32.totalorder %s274, %s277
      %p283 = scmp.eq.s32.totalorder %s28, 0
      %p284 = por %p282, %p283
      %p285 = scmp.ne.s32.totalorder %s274, %s277
      %p286 = scmp.eq.s32.totalorder %s33, 1
      %p287 = por %p285, %p286
      %p288 = scmp.ne.s32.totalorder %s277, %s278
      %p289 = scmp.eq.s32.totalorder %s33, 0
      %p290 = por %p288, %p289
      %p291 = scmp.ne.s32.totalorder %s277, %s278
      %p292 = scmp.eq.s32.totalorder %s34, 1
      %p293 = por %p291, %p292
      %p295 = scmp.ne.s32.totalorder %s278, %s294
      %p296 = scmp.eq.s32.totalorder %s34, 0
      %p297 = por %p295, %p296
      %p298 = scmp.le.s32.totalorder 1, %s28
      %p299 = scmp.lt.s32.totalorder %s28, 3
      %p300 = pnand %p298, %p299
      %p301 = pneg %p300
      // Predicated region
      $region9: #{tpu_custom_call.1} parent=5 // pred_check
        _
      $region10: #{tpu_custom_call.1} parent=5 // pred_check_branch
        %303 = sbr.rel (%p300) target = $region12
      $region11: #{tpu_custom_call.1} parent=5 // pred_region
        %s304 = ssub.s32 %s28, 1
        // Predicated region
        $region13: #{tpu_custom_call.1} parent=11 // pred_check
          %p305 = pneg %p75
        $region14: #{tpu_custom_call.1} parent=11 // pred_check_branch
          %307 = sbr.rel (%p305) target = $region16
        $region15: #{tpu_custom_call.1} parent=11 // pred_region
          %s309 = ssub.s32 50176, 50176
          %310 = vsyncadd [#allocation6], %s309
          %s311 = sshll.u32 [#allocation5], 4
          %s312 = int_to_ptr.vmem [resolvable:$true] %s311
          %317 = dma.hbm_to_vmem [thread:$0]  %s1, 50176, %s312, [#allocation6], 512, 512, 32
        $region16: #{tpu_custom_call.1} parent=11 // pred_fallthru
          _
        // Predicated region
        $region17: #{tpu_custom_call.1} parent=11 // pred_check
          %p318 = pneg %p96
        $region18: #{tpu_custom_call.1} parent=11 // pred_check_branch
          %320 = sbr.rel (%p318) target = $region20
        $region19: #{tpu_custom_call.1} parent=11 // pred_region
          %s322 = ssub.s32 64, 64
          %323 = vsyncadd [#allocation6], %s322
          %s325 = sshll.u32 [#allocation7], 4
          %s326 = int_to_ptr.vmem [resolvable:$true] %s325
          %328 = dma.hbm_to_vmem [thread:$0]  %s2, 64, %s326, [#allocation6]
        $region20: #{tpu_custom_call.1} parent=11 // pred_fallthru
          _
        // Predicated region
        $region21: #{tpu_custom_call.1} parent=11 // pred_check
          %p329 = pneg %p117
        $region22: #{tpu_custom_call.1} parent=11 // pred_check_branch
          %331 = sbr.rel (%p329) target = $region24
        $region23: #{tpu_custom_call.1} parent=11 // pred_region
          %s333 = ssub.s32 16384, 16384
          %334 = vsyncadd [#allocation9], %s333
          %s335 = sshll.u32 [#allocation8], 4
          %s336 = int_to_ptr.vmem [resolvable:$true] %s335
          %341 = dma.hbm_to_vmem [thread:$0]  %s3, 16384, %s336, [#allocation9], 256, 256, 16
        $region24: #{tpu_custom_call.1} parent=11 // pred_fallthru
          _
        // Predicated region
        $region25: #{tpu_custom_call.1} parent=11 // pred_check
          %p342 = pneg %p138
        $region26: #{tpu_custom_call.1} parent=11 // pred_check_branch
          %344 = sbr.rel (%p342) target = $region28
        $region27: #{tpu_custom_call.1} parent=11 // pred_region
          %s346 = ssub.s32 32, 32
          %347 = vsyncadd [#allocation9], %s346
          %s349 = sshll.u32 [#allocation10], 4
          %s350 = int_to_ptr.vmem [resolvable:$true] %s349
          %352 = dma.hbm_to_vmem [thread:$0]  %s4, 32, %s350, [#allocation9]
        $region28: #{tpu_custom_call.1} parent=11 // pred_fallthru
          _
        // Predicated region
        $region29: #{tpu_custom_call.1} parent=11 // pred_check
          %p353 = pneg %p159
        $region30: #{tpu_custom_call.1} parent=11 // pred_check_branch
          %355 = sbr.rel (%p353) target = $region32
        $region31: #{tpu_custom_call.1} parent=11 // pred_region
          %s357 = ssub.s32 4096, 4096
          %358 = vsyncadd [#allocation12], %s357
          %s359 = sshll.u32 [#allocation11], 4
          %s360 = int_to_ptr.vmem [resolvable:$true] %s359
          %365 = dma.hbm_to_vmem [thread:$0]  %s5, 4096, %s360, [#allocation12], 128, 128, 8
        $region32: #{tpu_custom_call.1} parent=11 // pred_fallthru
          _
        // Predicated region
        $region33: #{tpu_custom_call.1} parent=11 // pred_check
          %p366 = pneg %p180
        $region34: #{tpu_custom_call.1} parent=11 // pred_check_branch
          %368 = sbr.rel (%p366) target = $region36
        $region35: #{tpu_custom_call.1} parent=11 // pred_region
          %s370 = ssub.s32 16, 16
          %371 = vsyncadd [#allocation12], %s370
          %s373 = sshll.u32 [#allocation13], 4
          %s374 = int_to_ptr.vmem [resolvable:$true] %s373
          %376 = dma.hbm_to_vmem [thread:$0]  %s6, 16, %s374, [#allocation12]
        $region36: #{tpu_custom_call.1} parent=11 // pred_fallthru
          _
        // Predicated region
        $region37: #{tpu_custom_call.1} parent=11 // pred_check
          %p377 = pneg %p201
        $region38: #{tpu_custom_call.1} parent=11 // pred_check_branch
          %379 = sbr.rel (%p377) target = $region40
        $region39: #{tpu_custom_call.1} parent=11 // pred_region
          %s381 = ssub.s32 2048, 2048
          %382 = vsyncadd [#allocation15], %s381
          %s383 = sshll.u32 [#allocation14], 4
          %s384 = int_to_ptr.vmem [resolvable:$true] %s383
          %389 = dma.hbm_to_vmem [thread:$0]  %s7, 2048, %s384, [#allocation15], 128, 128, 8
        $region40: #{tpu_custom_call.1} parent=11 // pred_fallthru
          _
        // Predicated region
        $region41: #{tpu_custom_call.1} parent=11 // pred_check
          %p390 = pneg %p222
        $region42: #{tpu_custom_call.1} parent=11 // pred_check_branch
          %392 = sbr.rel (%p390) target = $region44
        $region43: #{tpu_custom_call.1} parent=11 // pred_region
          %s394 = ssub.s32 16, 16
          %395 = vsyncadd [#allocation15], %s394
          %s397 = sshll.u32 [#allocation16], 4
          %s398 = int_to_ptr.vmem [resolvable:$true] %s397
          %400 = dma.hbm_to_vmem [thread:$0]  %s8, 16, %s398, [#allocation15]
        $region44: #{tpu_custom_call.1} parent=11 // pred_fallthru
          _
        // Predicated region
        $region45: #{tpu_custom_call.1} parent=11 // pred_check
          %p401 = pneg %p243
        $region46: #{tpu_custom_call.1} parent=11 // pred_check_branch
          %403 = sbr.rel (%p401) target = $region48
        $region47: #{tpu_custom_call.1} parent=11 // pred_region
          %s405 = ssub.s32 2048, 2048
          %406 = vsyncadd [#allocation18], %s405
          %s407 = sshll.u32 [#allocation17], 4
          %s408 = int_to_ptr.vmem [resolvable:$true] %s407
          %413 = dma.hbm_to_vmem [thread:$0]  %s9, 2048, %s408, [#allocation18], 128, 128, 8
        $region48: #{tpu_custom_call.1} parent=11 // pred_fallthru
          _
        // Predicated region
        $region49: #{tpu_custom_call.1} parent=11 // pred_check
          %p414 = pneg %p264
        $region50: #{tpu_custom_call.1} parent=11 // pred_check_branch
          %416 = sbr.rel (%p414) target = $region52
        $region51: #{tpu_custom_call.1} parent=11 // pred_region
          %s418 = ssub.s32 16, 16
          %419 = vsyncadd [#allocation18], %s418
          %s421 = sshll.u32 [#allocation19], 4
          %s422 = int_to_ptr.vmem [resolvable:$true] %s421
          %424 = dma.hbm_to_vmem [thread:$0]  %s10, 16, %s422, [#allocation18]
        $region52: #{tpu_custom_call.1} parent=11 // pred_fallthru
          _
      $region12: #{tpu_custom_call.1} parent=5 // pred_fallthru
        _
      %p425 = scmp.lt.s32.totalorder %s28, 2
      // Predicated region
      $region53: #{tpu_custom_call.1} parent=5 // pred_check
        %p426 = pneg %p425
      $region54: #{tpu_custom_call.1} parent=5 // pred_check_branch
        %428 = sbr.rel (%p426) target = $region56
      $region55: #{tpu_custom_call.1} parent=5 // pred_region
        // Predicated region
        $region57: #{tpu_custom_call.1} parent=55 // pred_check
          %p429 = pneg %p48
        $region58: #{tpu_custom_call.1} parent=55 // pred_check_branch
          %431 = sbr.rel (%p429) target = $region60
        $region59: #{tpu_custom_call.1} parent=55 // pred_region
          %s432 = sand.u32 %s38, 1
          %s433 = scalar_lea.sflag [#allocation3], %s432
          %s434 = sand.u32 %s38, 1
          %s435 = smul.addr %s434, 56
          %s436 = scalar_lea.vmem [#allocation2], %s435
          %s438 = ssub.s32 896, 896
          %439 = vsyncadd %s433, %s438
          %s440 = smul.addr %s28, 7
          %s441 = smul.addr %s440, 128
          %s442 = scalar_lea.hbm %s0, %s441
          %s444 = sshll.u32 %s436, 4
          %s445 = int_to_ptr.vmem [resolvable:$true] %s444
          %447 = dma.hbm_to_vmem [thread:$0]  %s442, 896, %s445, %s433
        $region60: #{tpu_custom_call.1} parent=55 // pred_fallthru
          _
      $region56: #{tpu_custom_call.1} parent=5 // pred_fallthru
        _
      %p448 = scmp.le.s32.totalorder 1, %s28
      %p449 = scmp.lt.s32.totalorder %s28, 3
      %p450 = pnand %p448, %p449
      %p451 = pneg %p450
      // Predicated region
      $region61: #{tpu_custom_call.1} parent=5 // pred_check
        _
      $region62: #{tpu_custom_call.1} parent=5 // pred_check_branch
        %453 = sbr.rel (%p450) target = $region64
      $region63: #{tpu_custom_call.1} parent=5 // pred_region
        %s454 = ssub.s32 %s28, 1
        %s455 = sand.u32 %s41, 1
        %s456 = scalar_lea.sflag [#allocation3], %s455
        %s457 = sand.u32 %s41, 1
        %s458 = smul.addr %s457, 56
        %s459 = scalar_lea.vmem [#allocation2], %s458
        // Predicated region
        $region65: #{tpu_custom_call.1} parent=63 // pred_check
          %p460 = pneg %p54
        $region66: #{tpu_custom_call.1} parent=63 // pred_check_branch
          %462 = sbr.rel (%p460) target = $region68
        $region67: #{tpu_custom_call.1} parent=63 // pred_region
          %463 = dma.done %s456, 896
        $region68: #{tpu_custom_call.1} parent=63 // pred_fallthru
          _
        // Predicated region
        $region69: #{tpu_custom_call.1} parent=63 // pred_check
          %p464 = pneg %p75
        $region70: #{tpu_custom_call.1} parent=63 // pred_check_branch
          %466 = sbr.rel (%p464) target = $region72
        $region71: #{tpu_custom_call.1} parent=63 // pred_region
          %467 = dma.done [#allocation6], 50176
        $region72: #{tpu_custom_call.1} parent=63 // pred_fallthru
          _
        // Predicated region
        $region73: #{tpu_custom_call.1} parent=63 // pred_check
          %p468 = pneg %p96
        $region74: #{tpu_custom_call.1} parent=63 // pred_check_branch
          %470 = sbr.rel (%p468) target = $region76
        $region75: #{tpu_custom_call.1} parent=63 // pred_region
          %471 = dma.done [#allocation6], 64
        $region76: #{tpu_custom_call.1} parent=63 // pred_fallthru
          _
        // Predicated region
        $region77: #{tpu_custom_call.1} parent=63 // pred_check
          %p472 = pneg %p117
        $region78: #{tpu_custom_call.1} parent=63 // pred_check_branch
          %474 = sbr.rel (%p472) target = $region80
        $region79: #{tpu_custom_call.1} parent=63 // pred_region
          %475 = dma.done [#allocation9], 16384
        $region80: #{tpu_custom_call.1} parent=63 // pred_fallthru
          _
        // Predicated region
        $region81: #{tpu_custom_call.1} parent=63 // pred_check
          %p476 = pneg %p138
        $region82: #{tpu_custom_call.1} parent=63 // pred_check_branch
          %478 = sbr.rel (%p476) target = $region84
        $region83: #{tpu_custom_call.1} parent=63 // pred_region
          %479 = dma.done [#allocation9], 32
        $region84: #{tpu_custom_call.1} parent=63 // pred_fallthru
          _
        // Predicated region
        $region85: #{tpu_custom_call.1} parent=63 // pred_check
          %p480 = pneg %p159
        $region86: #{tpu_custom_call.1} parent=63 // pred_check_branch
          %482 = sbr.rel (%p480) target = $region88
        $region87: #{tpu_custom_call.1} parent=63 // pred_region
          %483 = dma.done [#allocation12], 4096
        $region88: #{tpu_custom_call.1} parent=63 // pred_fallthru
          _
        // Predicated region
        $region89: #{tpu_custom_call.1} parent=63 // pred_check
          %p484 = pneg %p180
        $region90: #{tpu_custom_call.1} parent=63 // pred_check_branch
          %486 = sbr.rel (%p484) target = $region92
        $region91: #{tpu_custom_call.1} parent=63 // pred_region
          %487 = dma.done [#allocation12], 16
        $region92: #{tpu_custom_call.1} parent=63 // pred_fallthru
          _
        // Predicated region
        $region93: #{tpu_custom_call.1} parent=63 // pred_check
          %p488 = pneg %p201
        $region94: #{tpu_custom_call.1} parent=63 // pred_check_branch
          %490 = sbr.rel (%p488) target = $region96
        $region95: #{tpu_custom_call.1} parent=63 // pred_region
          %491 = dma.done [#allocation15], 2048
        $region96: #{tpu_custom_call.1} parent=63 // pred_fallthru
          _
        // Predicated region
        $region97: #{tpu_custom_call.1} parent=63 // pred_check
          %p492 = pneg %p222
        $region98: #{tpu_custom_call.1} parent=63 // pred_check_branch
          %494 = sbr.rel (%p492) target = $region100
        $region99: #{tpu_custom_call.1} parent=63 // pred_region
          %495 = dma.done [#allocation15], 16
        $region100: #{tpu_custom_call.1} parent=63 // pred_fallthru
          _
        // Predicated region
        $region101: #{tpu_custom_call.1} parent=63 // pred_check
          %p496 = pneg %p243
        $region102: #{tpu_custom_call.1} parent=63 // pred_check_branch
          %498 = sbr.rel (%p496) target = $region104
        $region103: #{tpu_custom_call.1} parent=63 // pred_region
          %499 = dma.done [#allocation18], 2048
        $region104: #{tpu_custom_call.1} parent=63 // pred_fallthru
          _
        // Predicated region
        $region105: #{tpu_custom_call.1} parent=63 // pred_check
          %p500 = pneg %p264
        $region106: #{tpu_custom_call.1} parent=63 // pred_check_branch
          %502 = sbr.rel (%p500) target = $region108
        $region107: #{tpu_custom_call.1} parent=63 // pred_region
          %503 = dma.done [#allocation18], 16
        $region108: #{tpu_custom_call.1} parent=63 // pred_fallthru
          _
        %s504 = sand.u32 %s41, 1
        %s505 = scalar_lea.sflag [#allocation3], %s504
        %s506 = sand.u32 %s41, 1
        %s507 = smul.addr %s506, 56
        %s508 = scalar_lea.vmem [#allocation2], %s507
        %p509 = pneg %p54
        %p510 = pneg %p51
        %p511 = pneg %p75
        %p512 = pneg %p72
        %p513 = pneg %p96
        %p514 = pneg %p93
        %p515 = pneg %p117
        %p516 = pneg %p114
        %p517 = pneg %p138
        %p518 = pneg %p135
        %p519 = pneg %p159
        %p520 = pneg %p156
        %p521 = pneg %p180
        %p522 = pneg %p177
        %p523 = pneg %p201
        %p524 = pneg %p198
        %p525 = pneg %p222
        %p526 = pneg %p219
        %p527 = pneg %p243
        %p528 = pneg %p240
        %p529 = pneg %p264
        %p530 = pneg %p261
        %p531 = pneg %p290
        %p532 = pneg %p287
        %s533 = sand.u32 %s277, 1
        %s534 = scalar_lea.sflag [#allocation4], %s533
        %s535 = sand.u32 %s277, 1
        %s536 = smul.addr %s535, 8
        %s537 = scalar_lea.vmem [#allocation20], %s536
        %v538 = vld [vmem:[%s459] sm:$0xff]
        %v539 = vld [vmem:[%s459 + $0x8] sm:$0xff]
        %v540 = vld [vmem:[%s459 + $0x10] sm:$0xff]
        %v541 = vld [vmem:[%s459 + $0x18] sm:$0xff]
        %v542 = vld [vmem:[%s459 + $0x20] sm:$0xff]
        %v543 = vld [vmem:[%s459 + $0x28] sm:$0xff]
        %v544 = vld [vmem:[%s459 + $0x30] sm:$0xff]
        %v545 = vld [vmem:[#allocation5] sm:$0xff]
        %v546 = vld [vmem:[#allocation5 + $0x8] sm:$0xff]
        %v547 = vld [vmem:[#allocation5 + $0x10] sm:$0xff]
        %v548 = vld [vmem:[#allocation5 + $0x18] sm:$0xff]
        %v549 = vld [vmem:[#allocation5 + $0x20] sm:$0xff]
        %v550 = vld [vmem:[#allocation5 + $0x28] sm:$0xff]
        %v551 = vld [vmem:[#allocation5 + $0x30] sm:$0xff]
        %v552 = vld [vmem:[#allocation5 + $0x38] sm:$0xff]
        %v553 = vld [vmem:[#allocation5 + $0x40] sm:$0xff]
        %v554 = vld [vmem:[#allocation5 + $0x48] sm:$0xff]
        %v555 = vld [vmem:[#allocation5 + $0x50] sm:$0xff]
        %v556 = vld [vmem:[#allocation5 + $0x58] sm:$0xff]
        %v557 = vld [vmem:[#allocation5 + $0x60] sm:$0xff]
        %v558 = vld [vmem:[#allocation5 + $0x68] sm:$0xff]
        %v559 = vld [vmem:[#allocation5 + $0x70] sm:$0xff]
        %v560 = vld [vmem:[#allocation5 + $0x78] sm:$0xff]
        %v561 = vld [vmem:[#allocation5 + $0x80] sm:$0xff]
        %v562 = vld [vmem:[#allocation5 + $0x88] sm:$0xff]
        %v563 = vld [vmem:[#allocation5 + $0x90] sm:$0xff]
        %v564 = vld [vmem:[#allocation5 + $0x98] sm:$0xff]
        %v565 = vld [vmem:[#allocation5 + $0xa0] sm:$0xff]
        %v566 = vld [vmem:[#allocation5 + $0xa8] sm:$0xff]
        %v567 = vld [vmem:[#allocation5 + $0xb0] sm:$0xff]
        %v568 = vld [vmem:[#allocation5 + $0xb8] sm:$0xff]
        %v569 = vld [vmem:[#allocation5 + $0xc0] sm:$0xff]
        %v570 = vld [vmem:[#allocation5 + $0xc8] sm:$0xff]
        %v571 = vld [vmem:[#allocation5 + $0xd0] sm:$0xff]
        %v572 = vld [vmem:[#allocation5 + $0xd8] sm:$0xff]
        %v573 = vld [vmem:[#allocation5 + $0xe0] sm:$0xff]
        %v574 = vld [vmem:[#allocation5 + $0xe8] sm:$0xff]
        %v575 = vld [vmem:[#allocation5 + $0xf0] sm:$0xff]
        %v576 = vld [vmem:[#allocation5 + $0xf8] sm:$0xff]
        %v577 = vld [vmem:[#allocation5 + $0x100] sm:$0xff]
        %v578 = vld [vmem:[#allocation5 + $0x108] sm:$0xff]
        %v579 = vld [vmem:[#allocation5 + $0x110] sm:$0xff]
        %v580 = vld [vmem:[#allocation5 + $0x118] sm:$0xff]
        %v581 = vld [vmem:[#allocation5 + $0x120] sm:$0xff]
        %v582 = vld [vmem:[#allocation5 + $0x128] sm:$0xff]
        %v583 = vld [vmem:[#allocation5 + $0x130] sm:$0xff]
        %v584 = vld [vmem:[#allocation5 + $0x138] sm:$0xff]
        %v585 = vld [vmem:[#allocation5 + $0x140] sm:$0xff]
        %v586 = vld [vmem:[#allocation5 + $0x148] sm:$0xff]
        %v587 = vld [vmem:[#allocation5 + $0x150] sm:$0xff]
        %v588 = vld [vmem:[#allocation5 + $0x158] sm:$0xff]
        %v589 = vld [vmem:[#allocation5 + $0x160] sm:$0xff]
        %v590 = vld [vmem:[#allocation5 + $0x168] sm:$0xff]
        %v591 = vld [vmem:[#allocation5 + $0x170] sm:$0xff]
        %v592 = vld [vmem:[#allocation5 + $0x178] sm:$0xff]
        %v593 = vld [vmem:[#allocation5 + $0x180] sm:$0xff]
        %v594 = vld [vmem:[#allocation5 + $0x188] sm:$0xff]
        %v595 = vld [vmem:[#allocation5 + $0x190] sm:$0xff]
        %v596 = vld [vmem:[#allocation5 + $0x198] sm:$0xff]
        %v597 = vld [vmem:[#allocation5 + $0x1a0] sm:$0xff]
        %v598 = vld [vmem:[#allocation5 + $0x1a8] sm:$0xff]
        %v599 = vld [vmem:[#allocation5 + $0x1b0] sm:$0xff]
        %v600 = vld [vmem:[#allocation5 + $0x1b8] sm:$0xff]
        %v601 = vld [vmem:[#allocation5 + $0x1c0] sm:$0xff]
        %v602 = vld [vmem:[#allocation5 + $0x1c8] sm:$0xff]
        %v603 = vld [vmem:[#allocation5 + $0x1d0] sm:$0xff]
        %v604 = vld [vmem:[#allocation5 + $0x1d8] sm:$0xff]
        %v605 = vld [vmem:[#allocation5 + $0x1e0] sm:$0xff]
        %v606 = vld [vmem:[#allocation5 + $0x1e8] sm:$0xff]
        %v607 = vld [vmem:[#allocation5 + $0x1f0] sm:$0xff]
        %v608 = vld [vmem:[#allocation5 + $0x1f8] sm:$0xff]
        %v609 = vld [vmem:[#allocation5 + $0x200] sm:$0xff]
        %v610 = vld [vmem:[#allocation5 + $0x208] sm:$0xff]
        %v611 = vld [vmem:[#allocation5 + $0x210] sm:$0xff]
        %v612 = vld [vmem:[#allocation5 + $0x218] sm:$0xff]
        %v613 = vld [vmem:[#allocation5 + $0x220] sm:$0xff]
        %v614 = vld [vmem:[#allocation5 + $0x228] sm:$0xff]
        %v615 = vld [vmem:[#allocation5 + $0x230] sm:$0xff]
        %v616 = vld [vmem:[#allocation5 + $0x238] sm:$0xff]
        %v617 = vld [vmem:[#allocation5 + $0x240] sm:$0xff]
        %v618 = vld [vmem:[#allocation5 + $0x248] sm:$0xff]
        %v619 = vld [vmem:[#allocation5 + $0x250] sm:$0xff]
        %v620 = vld [vmem:[#allocation5 + $0x258] sm:$0xff]
        %v621 = vld [vmem:[#allocation5 + $0x260] sm:$0xff]
        %v622 = vld [vmem:[#allocation5 + $0x268] sm:$0xff]
        %v623 = vld [vmem:[#allocation5 + $0x270] sm:$0xff]
        %v624 = vld [vmem:[#allocation5 + $0x278] sm:$0xff]
        %v625 = vld [vmem:[#allocation5 + $0x280] sm:$0xff]
        %v626 = vld [vmem:[#allocation5 + $0x288] sm:$0xff]
        %v627 = vld [vmem:[#allocation5 + $0x290] sm:$0xff]
        %v628 = vld [vmem:[#allocation5 + $0x298] sm:$0xff]
        %v629 = vld [vmem:[#allocation5 + $0x2a0] sm:$0xff]
        %v630 = vld [vmem:[#allocation5 + $0x2a8] sm:$0xff]
        %v631 = vld [vmem:[#allocation5 + $0x2b0] sm:$0xff]
        %v632 = vld [vmem:[#allocation5 + $0x2b8] sm:$0xff]
        %v633 = vld [vmem:[#allocation5 + $0x2c0] sm:$0xff]
        %v634 = vld [vmem:[#allocation5 + $0x2c8] sm:$0xff]
        %v635 = vld [vmem:[#allocation5 + $0x2d0] sm:$0xff]
        %v636 = vld [vmem:[#allocation5 + $0x2d8] sm:$0xff]
        %v637 = vld [vmem:[#allocation5 + $0x2e0] sm:$0xff]
        %v638 = vld [vmem:[#allocation5 + $0x2e8] sm:$0xff]
        %v639 = vld [vmem:[#allocation5 + $0x2f0] sm:$0xff]
        %v640 = vld [vmem:[#allocation5 + $0x2f8] sm:$0xff]
        %v641 = vld [vmem:[#allocation5 + $0x300] sm:$0xff]
        %v642 = vld [vmem:[#allocation5 + $0x308] sm:$0xff]
        %v643 = vld [vmem:[#allocation5 + $0x310] sm:$0xff]
        %v644 = vld [vmem:[#allocation5 + $0x318] sm:$0xff]
        %v645 = vld [vmem:[#allocation5 + $0x320] sm:$0xff]
        %v646 = vld [vmem:[#allocation5 + $0x328] sm:$0xff]
        %v647 = vld [vmem:[#allocation5 + $0x330] sm:$0xff]
        %v648 = vld [vmem:[#allocation5 + $0x338] sm:$0xff]
        %v649 = vld [vmem:[#allocation5 + $0x340] sm:$0xff]
        %v650 = vld [vmem:[#allocation5 + $0x348] sm:$0xff]
        %v651 = vld [vmem:[#allocation5 + $0x350] sm:$0xff]
        %v652 = vld [vmem:[#allocation5 + $0x358] sm:$0xff]
        %v653 = vld [vmem:[#allocation5 + $0x360] sm:$0xff]
        %v654 = vld [vmem:[#allocation5 + $0x368] sm:$0xff]
        %v655 = vld [vmem:[#allocation5 + $0x370] sm:$0xff]
        %v656 = vld [vmem:[#allocation5 + $0x378] sm:$0xff]
        %v657 = vld [vmem:[#allocation5 + $0x380] sm:$0xff]
        %v658 = vld [vmem:[#allocation5 + $0x388] sm:$0xff]
        %v659 = vld [vmem:[#allocation5 + $0x390] sm:$0xff]
        %v660 = vld [vmem:[#allocation5 + $0x398] sm:$0xff]
        %v661 = vld [vmem:[#allocation5 + $0x3a0] sm:$0xff]
        %v662 = vld [vmem:[#allocation5 + $0x3a8] sm:$0xff]
        %v663 = vld [vmem:[#allocation5 + $0x3b0] sm:$0xff]
        %v664 = vld [vmem:[#allocation5 + $0x3b8] sm:$0xff]
        %v665 = vld [vmem:[#allocation5 + $0x3c0] sm:$0xff]
        %v666 = vld [vmem:[#allocation5 + $0x3c8] sm:$0xff]
        %v667 = vld [vmem:[#allocation5 + $0x3d0] sm:$0xff]
        %v668 = vld [vmem:[#allocation5 + $0x3d8] sm:$0xff]
        %v669 = vld [vmem:[#allocation5 + $0x3e0] sm:$0xff]
        %v670 = vld [vmem:[#allocation5 + $0x3e8] sm:$0xff]
        %v671 = vld [vmem:[#allocation5 + $0x3f0] sm:$0xff]
        %v672 = vld [vmem:[#allocation5 + $0x3f8] sm:$0xff]
        %v673 = vld [vmem:[#allocation5 + $0x400] sm:$0xff]
        %v674 = vld [vmem:[#allocation5 + $0x408] sm:$0xff]
        %v675 = vld [vmem:[#allocation5 + $0x410] sm:$0xff]
        %v676 = vld [vmem:[#allocation5 + $0x418] sm:$0xff]
        %v677 = vld [vmem:[#allocation5 + $0x420] sm:$0xff]
        %v678 = vld [vmem:[#allocation5 + $0x428] sm:$0xff]
        %v679 = vld [vmem:[#allocation5 + $0x430] sm:$0xff]
        %v680 = vld [vmem:[#allocation5 + $0x438] sm:$0xff]
        %v681 = vld [vmem:[#allocation5 + $0x440] sm:$0xff]
        %v682 = vld [vmem:[#allocation5 + $0x448] sm:$0xff]
        %v683 = vld [vmem:[#allocation5 + $0x450] sm:$0xff]
        %v684 = vld [vmem:[#allocation5 + $0x458] sm:$0xff]
        %v685 = vld [vmem:[#allocation5 + $0x460] sm:$0xff]
        %v686 = vld [vmem:[#allocation5 + $0x468] sm:$0xff]
        %v687 = vld [vmem:[#allocation5 + $0x470] sm:$0xff]
        %v688 = vld [vmem:[#allocation5 + $0x478] sm:$0xff]
        %v689 = vld [vmem:[#allocation5 + $0x480] sm:$0xff]
        %v690 = vld [vmem:[#allocation5 + $0x488] sm:$0xff]
        %v691 = vld [vmem:[#allocation5 + $0x490] sm:$0xff]
        %v692 = vld [vmem:[#allocation5 + $0x498] sm:$0xff]
        %v693 = vld [vmem:[#allocation5 + $0x4a0] sm:$0xff]
        %v694 = vld [vmem:[#allocation5 + $0x4a8] sm:$0xff]
        %v695 = vld [vmem:[#allocation5 + $0x4b0] sm:$0xff]
        %v696 = vld [vmem:[#allocation5 + $0x4b8] sm:$0xff]
        %v697 = vld [vmem:[#allocation5 + $0x4c0] sm:$0xff]
        %v698 = vld [vmem:[#allocation5 + $0x4c8] sm:$0xff]
        %v699 = vld [vmem:[#allocation5 + $0x4d0] sm:$0xff]
        %v700 = vld [vmem:[#allocation5 + $0x4d8] sm:$0xff]
        %v701 = vld [vmem:[#allocation5 + $0x4e0] sm:$0xff]
        %v702 = vld [vmem:[#allocation5 + $0x4e8] sm:$0xff]
        %v703 = vld [vmem:[#allocation5 + $0x4f0] sm:$0xff]
        %v704 = vld [vmem:[#allocation5 + $0x4f8] sm:$0xff]
        %v705 = vld [vmem:[#allocation5 + $0x500] sm:$0xff]
        %v706 = vld [vmem:[#allocation5 + $0x508] sm:$0xff]
        %v707 = vld [vmem:[#allocation5 + $0x510] sm:$0xff]
        %v708 = vld [vmem:[#allocation5 + $0x518] sm:$0xff]
        %v709 = vld [vmem:[#allocation5 + $0x520] sm:$0xff]
        %v710 = vld [vmem:[#allocation5 + $0x528] sm:$0xff]
        %v711 = vld [vmem:[#allocation5 + $0x530] sm:$0xff]
        %v712 = vld [vmem:[#allocation5 + $0x538] sm:$0xff]
        %v713 = vld [vmem:[#allocation5 + $0x540] sm:$0xff]
        %v714 = vld [vmem:[#allocation5 + $0x548] sm:$0xff]
        %v715 = vld [vmem:[#allocation5 + $0x550] sm:$0xff]
        %v716 = vld [vmem:[#allocation5 + $0x558] sm:$0xff]
        %v717 = vld [vmem:[#allocation5 + $0x560] sm:$0xff]
        %v718 = vld [vmem:[#allocation5 + $0x568] sm:$0xff]
        %v719 = vld [vmem:[#allocation5 + $0x570] sm:$0xff]
        %v720 = vld [vmem:[#allocation5 + $0x578] sm:$0xff]
        %v721 = vld [vmem:[#allocation5 + $0x580] sm:$0xff]
        %v722 = vld [vmem:[#allocation5 + $0x588] sm:$0xff]
        %v723 = vld [vmem:[#allocation5 + $0x590] sm:$0xff]
        %v724 = vld [vmem:[#allocation5 + $0x598] sm:$0xff]
        %v725 = vld [vmem:[#allocation5 + $0x5a0] sm:$0xff]
        %v726 = vld [vmem:[#allocation5 + $0x5a8] sm:$0xff]
        %v727 = vld [vmem:[#allocation5 + $0x5b0] sm:$0xff]
        %v728 = vld [vmem:[#allocation5 + $0x5b8] sm:$0xff]
        %v729 = vld [vmem:[#allocation5 + $0x5c0] sm:$0xff]
        %v730 = vld [vmem:[#allocation5 + $0x5c8] sm:$0xff]
        %v731 = vld [vmem:[#allocation5 + $0x5d0] sm:$0xff]
        %v732 = vld [vmem:[#allocation5 + $0x5d8] sm:$0xff]
        %v733 = vld [vmem:[#allocation5 + $0x5e0] sm:$0xff]
        %v734 = vld [vmem:[#allocation5 + $0x5e8] sm:$0xff]
        %v735 = vld [vmem:[#allocation5 + $0x5f0] sm:$0xff]
        %v736 = vld [vmem:[#allocation5 + $0x5f8] sm:$0xff]
        %v737 = vld [vmem:[#allocation5 + $0x600] sm:$0xff]
        %v738 = vld [vmem:[#allocation5 + $0x608] sm:$0xff]
        %v739 = vld [vmem:[#allocation5 + $0x610] sm:$0xff]
        %v740 = vld [vmem:[#allocation5 + $0x618] sm:$0xff]
        %v741 = vld [vmem:[#allocation5 + $0x620] sm:$0xff]
        %v742 = vld [vmem:[#allocation5 + $0x628] sm:$0xff]
        %v743 = vld [vmem:[#allocation5 + $0x630] sm:$0xff]
        %v744 = vld [vmem:[#allocation5 + $0x638] sm:$0xff]
        %v745 = vld [vmem:[#allocation5 + $0x640] sm:$0xff]
        %v746 = vld [vmem:[#allocation5 + $0x648] sm:$0xff]
        %v747 = vld [vmem:[#allocation5 + $0x650] sm:$0xff]
        %v748 = vld [vmem:[#allocation5 + $0x658] sm:$0xff]
        %v749 = vld [vmem:[#allocation5 + $0x660] sm:$0xff]
        %v750 = vld [vmem:[#allocation5 + $0x668] sm:$0xff]
        %v751 = vld [vmem:[#allocation5 + $0x670] sm:$0xff]
        %v752 = vld [vmem:[#allocation5 + $0x678] sm:$0xff]
        %v753 = vld [vmem:[#allocation5 + $0x680] sm:$0xff]
        %v754 = vld [vmem:[#allocation5 + $0x688] sm:$0xff]
        %v755 = vld [vmem:[#allocation5 + $0x690] sm:$0xff]
        %v756 = vld [vmem:[#allocation5 + $0x698] sm:$0xff]
        %v757 = vld [vmem:[#allocation5 + $0x6a0] sm:$0xff]
        %v758 = vld [vmem:[#allocation5 + $0x6a8] sm:$0xff]
        %v759 = vld [vmem:[#allocation5 + $0x6b0] sm:$0xff]
        %v760 = vld [vmem:[#allocation5 + $0x6b8] sm:$0xff]
        %v761 = vld [vmem:[#allocation5 + $0x6c0] sm:$0xff]
        %v762 = vld [vmem:[#allocation5 + $0x6c8] sm:$0xff]
        %v763 = vld [vmem:[#allocation5 + $0x6d0] sm:$0xff]
        %v764 = vld [vmem:[#allocation5 + $0x6d8] sm:$0xff]
        %v765 = vld [vmem:[#allocation5 + $0x6e0] sm:$0xff]
        %v766 = vld [vmem:[#allocation5 + $0x6e8] sm:$0xff]
        %v767 = vld [vmem:[#allocation5 + $0x6f0] sm:$0xff]
        %v768 = vld [vmem:[#allocation5 + $0x6f8] sm:$0xff]
        %v769 = vld [vmem:[#allocation5 + $0x700] sm:$0xff]
        %v770 = vld [vmem:[#allocation5 + $0x708] sm:$0xff]
        %v771 = vld [vmem:[#allocation5 + $0x710] sm:$0xff]
        %v772 = vld [vmem:[#allocation5 + $0x718] sm:$0xff]
        %v773 = vld [vmem:[#allocation5 + $0x720] sm:$0xff]
        %v774 = vld [vmem:[#allocation5 + $0x728] sm:$0xff]
        %v775 = vld [vmem:[#allocation5 + $0x730] sm:$0xff]
        %v776 = vld [vmem:[#allocation5 + $0x738] sm:$0xff]
        %v777 = vld [vmem:[#allocation5 + $0x740] sm:$0xff]
        %v778 = vld [vmem:[#allocation5 + $0x748] sm:$0xff]
        %v779 = vld [vmem:[#allocation5 + $0x750] sm:$0xff]
        %v780 = vld [vmem:[#allocation5 + $0x758] sm:$0xff]
        %v781 = vld [vmem:[#allocation5 + $0x760] sm:$0xff]
        %v782 = vld [vmem:[#allocation5 + $0x768] sm:$0xff]
        %v783 = vld [vmem:[#allocation5 + $0x770] sm:$0xff]
        %v784 = vld [vmem:[#allocation5 + $0x778] sm:$0xff]
        %v785 = vld [vmem:[#allocation5 + $0x780] sm:$0xff]
        %v786 = vld [vmem:[#allocation5 + $0x788] sm:$0xff]
        %v787 = vld [vmem:[#allocation5 + $0x790] sm:$0xff]
        %v788 = vld [vmem:[#allocation5 + $0x798] sm:$0xff]
        %v789 = vld [vmem:[#allocation5 + $0x7a0] sm:$0xff]
        %v790 = vld [vmem:[#allocation5 + $0x7a8] sm:$0xff]
        %v791 = vld [vmem:[#allocation5 + $0x7b0] sm:$0xff]
        %v792 = vld [vmem:[#allocation5 + $0x7b8] sm:$0xff]
        %v793 = vld [vmem:[#allocation5 + $0x7c0] sm:$0xff]
        %v794 = vld [vmem:[#allocation5 + $0x7c8] sm:$0xff]
        %v795 = vld [vmem:[#allocation5 + $0x7d0] sm:$0xff]
        %v796 = vld [vmem:[#allocation5 + $0x7d8] sm:$0xff]
        %v797 = vld [vmem:[#allocation5 + $0x7e0] sm:$0xff]
        %v798 = vld [vmem:[#allocation5 + $0x7e8] sm:$0xff]
        %v799 = vld [vmem:[#allocation5 + $0x7f0] sm:$0xff]
        %v800 = vld [vmem:[#allocation5 + $0x7f8] sm:$0xff]
        %v801 = vld [vmem:[#allocation5 + $0x800] sm:$0xff]
        %v802 = vld [vmem:[#allocation5 + $0x808] sm:$0xff]
        %v803 = vld [vmem:[#allocation5 + $0x810] sm:$0xff]
        %v804 = vld [vmem:[#allocation5 + $0x818] sm:$0xff]
        %v805 = vld [vmem:[#allocation5 + $0x820] sm:$0xff]
        %v806 = vld [vmem:[#allocation5 + $0x828] sm:$0xff]
        %v807 = vld [vmem:[#allocation5 + $0x830] sm:$0xff]
        %v808 = vld [vmem:[#allocation5 + $0x838] sm:$0xff]
        %v809 = vld [vmem:[#allocation5 + $0x840] sm:$0xff]
        %v810 = vld [vmem:[#allocation5 + $0x848] sm:$0xff]
        %v811 = vld [vmem:[#allocation5 + $0x850] sm:$0xff]
        %v812 = vld [vmem:[#allocation5 + $0x858] sm:$0xff]
        %v813 = vld [vmem:[#allocation5 + $0x860] sm:$0xff]
        %v814 = vld [vmem:[#allocation5 + $0x868] sm:$0xff]
        %v815 = vld [vmem:[#allocation5 + $0x870] sm:$0xff]
        %v816 = vld [vmem:[#allocation5 + $0x878] sm:$0xff]
        %v817 = vld [vmem:[#allocation5 + $0x880] sm:$0xff]
        %v818 = vld [vmem:[#allocation5 + $0x888] sm:$0xff]
        %v819 = vld [vmem:[#allocation5 + $0x890] sm:$0xff]
        %v820 = vld [vmem:[#allocation5 + $0x898] sm:$0xff]
        %v821 = vld [vmem:[#allocation5 + $0x8a0] sm:$0xff]
        %v822 = vld [vmem:[#allocation5 + $0x8a8] sm:$0xff]
        %v823 = vld [vmem:[#allocation5 + $0x8b0] sm:$0xff]
        %v824 = vld [vmem:[#allocation5 + $0x8b8] sm:$0xff]
        %v825 = vld [vmem:[#allocation5 + $0x8c0] sm:$0xff]
        %v826 = vld [vmem:[#allocation5 + $0x8c8] sm:$0xff]
        %v827 = vld [vmem:[#allocation5 + $0x8d0] sm:$0xff]
        %v828 = vld [vmem:[#allocation5 + $0x8d8] sm:$0xff]
        %v829 = vld [vmem:[#allocation5 + $0x8e0] sm:$0xff]
        %v830 = vld [vmem:[#allocation5 + $0x8e8] sm:$0xff]
        %v831 = vld [vmem:[#allocation5 + $0x8f0] sm:$0xff]
        %v832 = vld [vmem:[#allocation5 + $0x8f8] sm:$0xff]
        %v833 = vld [vmem:[#allocation5 + $0x900] sm:$0xff]
        %v834 = vld [vmem:[#allocation5 + $0x908] sm:$0xff]
        %v835 = vld [vmem:[#allocation5 + $0x910] sm:$0xff]
        %v836 = vld [vmem:[#allocation5 + $0x918] sm:$0xff]
        %v837 = vld [vmem:[#allocation5 + $0x920] sm:$0xff]
        %v838 = vld [vmem:[#allocation5 + $0x928] sm:$0xff]
        %v839 = vld [vmem:[#allocation5 + $0x930] sm:$0xff]
        %v840 = vld [vmem:[#allocation5 + $0x938] sm:$0xff]
        %v841 = vld [vmem:[#allocation5 + $0x940] sm:$0xff]
        %v842 = vld [vmem:[#allocation5 + $0x948] sm:$0xff]
        %v843 = vld [vmem:[#allocation5 + $0x950] sm:$0xff]
        %v844 = vld [vmem:[#allocation5 + $0x958] sm:$0xff]
        %v845 = vld [vmem:[#allocation5 + $0x960] sm:$0xff]
        %v846 = vld [vmem:[#allocation5 + $0x968] sm:$0xff]
        %v847 = vld [vmem:[#allocation5 + $0x970] sm:$0xff]
        %v848 = vld [vmem:[#allocation5 + $0x978] sm:$0xff]
        %v849 = vld [vmem:[#allocation5 + $0x980] sm:$0xff]
        %v850 = vld [vmem:[#allocation5 + $0x988] sm:$0xff]
        %v851 = vld [vmem:[#allocation5 + $0x990] sm:$0xff]
        %v852 = vld [vmem:[#allocation5 + $0x998] sm:$0xff]
        %v853 = vld [vmem:[#allocation5 + $0x9a0] sm:$0xff]
        %v854 = vld [vmem:[#allocation5 + $0x9a8] sm:$0xff]
        %v855 = vld [vmem:[#allocation5 + $0x9b0] sm:$0xff]
        %v856 = vld [vmem:[#allocation5 + $0x9b8] sm:$0xff]
        %v857 = vld [vmem:[#allocation5 + $0x9c0] sm:$0xff]
        %v858 = vld [vmem:[#allocation5 + $0x9c8] sm:$0xff]
        %v859 = vld [vmem:[#allocation5 + $0x9d0] sm:$0xff]
        %v860 = vld [vmem:[#allocation5 + $0x9d8] sm:$0xff]
        %v861 = vld [vmem:[#allocation5 + $0x9e0] sm:$0xff]
        %v862 = vld [vmem:[#allocation5 + $0x9e8] sm:$0xff]
        %v863 = vld [vmem:[#allocation5 + $0x9f0] sm:$0xff]
        %v864 = vld [vmem:[#allocation5 + $0x9f8] sm:$0xff]
        %v865 = vld [vmem:[#allocation5 + $0xa00] sm:$0xff]
        %v866 = vld [vmem:[#allocation5 + $0xa08] sm:$0xff]
        %v867 = vld [vmem:[#allocation5 + $0xa10] sm:$0xff]
        %v868 = vld [vmem:[#allocation5 + $0xa18] sm:$0xff]
        %v869 = vld [vmem:[#allocation5 + $0xa20] sm:$0xff]
        %v870 = vld [vmem:[#allocation5 + $0xa28] sm:$0xff]
        %v871 = vld [vmem:[#allocation5 + $0xa30] sm:$0xff]
        %v872 = vld [vmem:[#allocation5 + $0xa38] sm:$0xff]
        %v873 = vld [vmem:[#allocation5 + $0xa40] sm:$0xff]
        %v874 = vld [vmem:[#allocation5 + $0xa48] sm:$0xff]
        %v875 = vld [vmem:[#allocation5 + $0xa50] sm:$0xff]
        %v876 = vld [vmem:[#allocation5 + $0xa58] sm:$0xff]
        %v877 = vld [vmem:[#allocation5 + $0xa60] sm:$0xff]
        %v878 = vld [vmem:[#allocation5 + $0xa68] sm:$0xff]
        %v879 = vld [vmem:[#allocation5 + $0xa70] sm:$0xff]
        %v880 = vld [vmem:[#allocation5 + $0xa78] sm:$0xff]
        %v881 = vld [vmem:[#allocation5 + $0xa80] sm:$0xff]
        %v882 = vld [vmem:[#allocation5 + $0xa88] sm:$0xff]
        %v883 = vld [vmem:[#allocation5 + $0xa90] sm:$0xff]
        %v884 = vld [vmem:[#allocation5 + $0xa98] sm:$0xff]
        %v885 = vld [vmem:[#allocation5 + $0xaa0] sm:$0xff]
        %v886 = vld [vmem:[#allocation5 + $0xaa8] sm:$0xff]
        %v887 = vld [vmem:[#allocation5 + $0xab0] sm:$0xff]
        %v888 = vld [vmem:[#allocation5 + $0xab8] sm:$0xff]
        %v889 = vld [vmem:[#allocation5 + $0xac0] sm:$0xff]
        %v890 = vld [vmem:[#allocation5 + $0xac8] sm:$0xff]
        %v891 = vld [vmem:[#allocation5 + $0xad0] sm:$0xff]
        %v892 = vld [vmem:[#allocation5 + $0xad8] sm:$0xff]
        %v893 = vld [vmem:[#allocation5 + $0xae0] sm:$0xff]
        %v894 = vld [vmem:[#allocation5 + $0xae8] sm:$0xff]
        %v895 = vld [vmem:[#allocation5 + $0xaf0] sm:$0xff]
        %v896 = vld [vmem:[#allocation5 + $0xaf8] sm:$0xff]
        %v897 = vld [vmem:[#allocation5 + $0xb00] sm:$0xff]
        %v898 = vld [vmem:[#allocation5 + $0xb08] sm:$0xff]
        %v899 = vld [vmem:[#allocation5 + $0xb10] sm:$0xff]
        %v900 = vld [vmem:[#allocation5 + $0xb18] sm:$0xff]
        %v901 = vld [vmem:[#allocation5 + $0xb20] sm:$0xff]
        %v902 = vld [vmem:[#allocation5 + $0xb28] sm:$0xff]
        %v903 = vld [vmem:[#allocation5 + $0xb30] sm:$0xff]
        %v904 = vld [vmem:[#allocation5 + $0xb38] sm:$0xff]
        %v905 = vld [vmem:[#allocation5 + $0xb40] sm:$0xff]
        %v906 = vld [vmem:[#allocation5 + $0xb48] sm:$0xff]
        %v907 = vld [vmem:[#allocation5 + $0xb50] sm:$0xff]
        %v908 = vld [vmem:[#allocation5 + $0xb58] sm:$0xff]
        %v909 = vld [vmem:[#allocation5 + $0xb60] sm:$0xff]
        %v910 = vld [vmem:[#allocation5 + $0xb68] sm:$0xff]
        %v911 = vld [vmem:[#allocation5 + $0xb70] sm:$0xff]
        %v912 = vld [vmem:[#allocation5 + $0xb78] sm:$0xff]
        %v913 = vld [vmem:[#allocation5 + $0xb80] sm:$0xff]
        %v914 = vld [vmem:[#allocation5 + $0xb88] sm:$0xff]
        %v915 = vld [vmem:[#allocation5 + $0xb90] sm:$0xff]
        %v916 = vld [vmem:[#allocation5 + $0xb98] sm:$0xff]
        %v917 = vld [vmem:[#allocation5 + $0xba0] sm:$0xff]
        %v918 = vld [vmem:[#allocation5 + $0xba8] sm:$0xff]
        %v919 = vld [vmem:[#allocation5 + $0xbb0] sm:$0xff]
        %v920 = vld [vmem:[#allocation5 + $0xbb8] sm:$0xff]
        %v921 = vld [vmem:[#allocation5 + $0xbc0] sm:$0xff]
        %v922 = vld [vmem:[#allocation5 + $0xbc8] sm:$0xff]
        %v923 = vld [vmem:[#allocation5 + $0xbd0] sm:$0xff]
        %v924 = vld [vmem:[#allocation5 + $0xbd8] sm:$0xff]
        %v925 = vld [vmem:[#allocation5 + $0xbe0] sm:$0xff]
        %v926 = vld [vmem:[#allocation5 + $0xbe8] sm:$0xff]
        %v927 = vld [vmem:[#allocation5 + $0xbf0] sm:$0xff]
        %v928 = vld [vmem:[#allocation5 + $0xbf8] sm:$0xff]
        %v929 = vld [vmem:[#allocation5 + $0xc00] sm:$0xff]
        %v930 = vld [vmem:[#allocation5 + $0xc08] sm:$0xff]
        %v931 = vld [vmem:[#allocation5 + $0xc10] sm:$0xff]
        %v932 = vld [vmem:[#allocation5 + $0xc18] sm:$0xff]
        %v933 = vld [vmem:[#allocation5 + $0xc20] sm:$0xff]
        %v934 = vld [vmem:[#allocation5 + $0xc28] sm:$0xff]
        %v935 = vld [vmem:[#allocation5 + $0xc30] sm:$0xff]
        %v936 = vld [vmem:[#allocation5 + $0xc38] sm:$0xff]
        %v937 = vld [vmem:[#allocation7] sm:$0xf]
        %v939 = vlaneseq
        %v940 = vshrl.u32 %v939, 7
        %v941 = vsub.s32 0, %v940
        %v942 = vrot.slane %v937, %v941
        %v943 = vlaneseq
        %v944 = vshrl.u32 %v943, 7
        %v945 = vsub.s32 1, %v944
        %v946 = vrot.slane %v937, %v945
        %v947 = vlaneseq
        %v948 = vshrl.u32 %v947, 7
        %v949 = vsub.s32 2, %v948
        %v950 = vrot.slane %v937, %v949
        %v951 = vlaneseq
        %v952 = vshrl.u32 %v951, 7
        %v953 = vsub.s32 3, %v952
        %v954 = vrot.slane %v937, %v953
        %vm959 = vcmask 130048
        %v961 = vsel %vm959, %v544, 0
        %963 = vmatprep.subr.mxu0 %v546
        %964 = vmatpush1.msra.mxu0 %v545
        %965 = vmatprep.subr.mxu0 %v550
        %966 = vmatpush1.msra.mxu0 %v549
        %967 = vmatprep.subr.mxu0 %v554
        %968 = vmatpush1.msra.mxu0 %v553
        %969 = vmatprep.subr.mxu0 %v558
        %970 = vmatpush1.msra.mxu0 %v557
        %971 = vmatprep.subr.mxu0 %v562
        %972 = vmatpush1.msra.mxu0 %v561
        %973 = vmatprep.subr.mxu0 %v566
        %974 = vmatpush1.msra.mxu0 %v565
        %975 = vmatprep.subr.mxu0 %v570
        %976 = vmatpush1.msra.mxu0 %v569
        %977 = vmatprep.subr.mxu0 %v574
        %978 = vmatpush1.msra.mxu0 %v573
        %979 = vmatprep.subr.mxu0 %v578
        %980 = vmatpush1.msra.mxu0 %v577
        %981 = vmatprep.subr.mxu0 %v582
        %982 = vmatpush1.msra.mxu0 %v581
        %983 = vmatprep.subr.mxu0 %v586
        %984 = vmatpush1.msra.mxu0 %v585
        %985 = vmatprep.subr.mxu0 %v590
        %986 = vmatpush1.msra.mxu0 %v589
        %987 = vmatprep.subr.mxu0 %v594
        %988 = vmatpush1.msra.mxu0 %v593
        %989 = vmatprep.subr.mxu0 %v598
        %990 = vmatpush1.msra.mxu0 %v597
        %991 = vmatprep.subr.mxu0 %v602
        %992 = vmatpush1.msra.mxu0 %v601
        %993 = vmatprep.subr.mxu0 %v606
        %994 = vmatpush1.msra.mxu0 %v605
        %995 = vmatprep.subr.mxu0 %v610
        %996 = vmatpush1.msra.mxu0 %v609
        %997 = vmatprep.subr.mxu0 %v614
        %998 = vmatpush1.msra.mxu0 %v613
        %999 = vmatprep.subr.mxu0 %v618
        %1000 = vmatpush1.msra.mxu0 %v617
        %1001 = vmatprep.subr.mxu0 %v622
        %1002 = vmatpush1.msra.mxu0 %v621
        %1003 = vmatprep.subr.mxu0 %v626
        %1004 = vmatpush1.msra.mxu0 %v625
        %1005 = vmatprep.subr.mxu0 %v630
        %1006 = vmatpush1.msra.mxu0 %v629
        %1007 = vmatprep.subr.mxu0 %v634
        %1008 = vmatpush1.msra.mxu0 %v633
        %1009 = vmatprep.subr.mxu0 %v638
        %1010 = vmatpush1.msra.mxu0 %v637
        %1011 = vmatprep.subr.mxu0 %v642
        %1012 = vmatpush1.msra.mxu0 %v641
        %1013 = vmatprep.subr.mxu0 %v646
        %1014 = vmatpush1.msra.mxu0 %v645
        %1015 = vmatprep.subr.mxu0 %v650
        %1016 = vmatpush1.msra.mxu0 %v649
        %1017 = vmatprep.subr.mxu0 %v654
        %1018 = vmatpush1.msra.mxu0 %v653
        %1019 = vmatprep.subr.mxu0 %v658
        %1020 = vmatpush1.msra.mxu0 %v657
        %1021 = vmatprep.subr.mxu0 %v662
        %1022 = vmatpush1.msra.mxu0 %v661
        %1023 = vmatprep.subr.mxu0 %v666
        %1024 = vmatpush1.msra.mxu0 %v665
        %1025 = vmatprep.subr.mxu0 %v670
        %1026 = vmatpush1.msra.mxu0 %v669
        %1027 = vmatprep.mubr.f32.mxu0 %v539
        %1028 = vmatmul.mubr.f32.gmra.mrb[0].mxu0 %v538
        %v1029 = vpop.f32.mrb[0].mxu0
        %v1030 = vadd.f32 %v942, %v1029
        %v1031 = vpop.f32.mrb[0].mxu0
        %v1032 = vadd.f32 %v946, %v1031
        %1033 = vdwg.mxu0
        %1034 = vmatprep.subr.mxu0 %v674
        %1035 = vmatpush1.msra.mxu0 %v673
        %1036 = vmatprep.subr.mxu0 %v678
        %1037 = vmatpush1.msra.mxu0 %v677
        %1038 = vmatprep.subr.mxu0 %v682
        %1039 = vmatpush1.msra.mxu0 %v681
        %1040 = vmatprep.subr.mxu0 %v686
        %1041 = vmatpush1.msra.mxu0 %v685
        %1042 = vmatprep.subr.mxu0 %v690
        %1043 = vmatpush1.msra.mxu0 %v689
        %1044 = vmatprep.subr.mxu0 %v694
        %1045 = vmatpush1.msra.mxu0 %v693
        %1046 = vmatprep.subr.mxu0 %v698
        %1047 = vmatpush1.msra.mxu0 %v697
        %1048 = vmatprep.subr.mxu0 %v702
        %1049 = vmatpush1.msra.mxu0 %v701
        %1050 = vmatprep.subr.mxu0 %v706
        %1051 = vmatpush1.msra.mxu0 %v705
        %1052 = vmatprep.subr.mxu0 %v710
        %1053 = vmatpush1.msra.mxu0 %v709
        %1054 = vmatprep.subr.mxu0 %v714
        %1055 = vmatpush1.msra.mxu0 %v713
        %1056 = vmatprep.subr.mxu0 %v718
        %1057 = vmatpush1.msra.mxu0 %v717
        %1058 = vmatprep.subr.mxu0 %v722
        %1059 = vmatpush1.msra.mxu0 %v721
        %1060 = vmatprep.subr.mxu0 %v726
        %1061 = vmatpush1.msra.mxu0 %v725
        %1062 = vmatprep.subr.mxu0 %v730
        %1063 = vmatpush1.msra.mxu0 %v729
        %1064 = vmatprep.subr.mxu0 %v734
        %1065 = vmatpush1.msra.mxu0 %v733
        %1066 = vmatprep.subr.mxu0 %v738
        %1067 = vmatpush1.msra.mxu0 %v737
        %1068 = vmatprep.subr.mxu0 %v742
        %1069 = vmatpush1.msra.mxu0 %v741
        %1070 = vmatprep.subr.mxu0 %v746
        %1071 = vmatpush1.msra.mxu0 %v745
        %1072 = vmatprep.subr.mxu0 %v750
        %1073 = vmatpush1.msra.mxu0 %v749
        %1074 = vmatprep.subr.mxu0 %v754
        %1075 = vmatpush1.msra.mxu0 %v753
        %1076 = vmatprep.subr.mxu0 %v758
        %1077 = vmatpush1.msra.mxu0 %v757
        %1078 = vmatprep.subr.mxu0 %v762
        %1079 = vmatpush1.msra.mxu0 %v761
        %1080 = vmatprep.subr.mxu0 %v766
        %1081 = vmatpush1.msra.mxu0 %v765
        %1082 = vmatprep.subr.mxu0 %v770
        %1083 = vmatpush1.msra.mxu0 %v769
        %1084 = vmatprep.subr.mxu0 %v774
        %1085 = vmatpush1.msra.mxu0 %v773
        %1086 = vmatprep.subr.mxu0 %v778
        %1087 = vmatpush1.msra.mxu0 %v777
        %1088 = vmatprep.subr.mxu0 %v782
        %1089 = vmatpush1.msra.mxu0 %v781
        %1090 = vmatprep.subr.mxu0 %v786
        %1091 = vmatpush1.msra.mxu0 %v785
        %1092 = vmatprep.subr.mxu0 %v790
        %1093 = vmatpush1.msra.mxu0 %v789
        %1094 = vmatprep.subr.mxu0 %v794
        %1095 = vmatpush1.msra.mxu0 %v793
        %1096 = vmatprep.subr.mxu0 %v798
        %1097 = vmatpush1.msra.mxu0 %v797
        %1098 = vmatprep.mubr.f32.mxu0 %v541
        %1099 = vmatmul.mubr.f32.gmra.mrb[0].mxu0 %v540
        %v1100 = vpop.f32.mrb[0].mxu0
        %v1101 = vadd.f32 %v1030, %v1100
        %v1102 = vpop.f32.mrb[0].mxu0
        %v1103 = vadd.f32 %v1032, %v1102
        %1104 = vdwg.mxu0
        %1105 = vmatprep.subr.mxu0 %v802
        %1106 = vmatpush1.msra.mxu0 %v801
        %1107 = vmatprep.subr.mxu0 %v806
        %1108 = vmatpush1.msra.mxu0 %v805
        %1109 = vmatprep.subr.mxu0 %v810
        %1110 = vmatpush1.msra.mxu0 %v809
        %1111 = vmatprep.subr.mxu0 %v814
        %1112 = vmatpush1.msra.mxu0 %v813
        %1113 = vmatprep.subr.mxu0 %v818
        %1114 = vmatpush1.msra.mxu0 %v817
        %1115 = vmatprep.subr.mxu0 %v822
        %1116 = vmatpush1.msra.mxu0 %v821
        %1117 = vmatprep.subr.mxu0 %v826
        %1118 = vmatpush1.msra.mxu0 %v825
        %1119 = vmatprep.subr.mxu0 %v830
        %1120 = vmatpush1.msra.mxu0 %v829
        %1121 = vmatprep.subr.mxu0 %v834
        %1122 = vmatpush1.msra.mxu0 %v833
        %1123 = vmatprep.subr.mxu0 %v838
        %1124 = vmatpush1.msra.mxu0 %v837
        %1125 = vmatprep.subr.mxu0 %v842
        %1126 = vmatpush1.msra.mxu0 %v841
        %1127 = vmatprep.subr.mxu0 %v846
        %1128 = vmatpush1.msra.mxu0 %v845
        %1129 = vmatprep.subr.mxu0 %v850
        %1130 = vmatpush1.msra.mxu0 %v849
        %1131 = vmatprep.subr.mxu0 %v854
        %1132 = vmatpush1.msra.mxu0 %v853
        %1133 = vmatprep.subr.mxu0 %v858
        %1134 = vmatpush1.msra.mxu0 %v857
        %1135 = vmatprep.subr.mxu0 %v862
        %1136 = vmatpush1.msra.mxu0 %v861
        %1137 = vmatprep.subr.mxu0 %v866
        %1138 = vmatpush1.msra.mxu0 %v865
        %1139 = vmatprep.subr.mxu0 %v870
        %1140 = vmatpush1.msra.mxu0 %v869
        %1141 = vmatprep.subr.mxu0 %v874
        %1142 = vmatpush1.msra.mxu0 %v873
        %1143 = vmatprep.subr.mxu0 %v878
        %1144 = vmatpush1.msra.mxu0 %v877
        %1145 = vmatprep.subr.mxu0 %v882
        %1146 = vmatpush1.msra.mxu0 %v881
        %1147 = vmatprep.subr.mxu0 %v886
        %1148 = vmatpush1.msra.mxu0 %v885
        %1149 = vmatprep.subr.mxu0 %v890
        %1150 = vmatpush1.msra.mxu0 %v889
        %1151 = vmatprep.subr.mxu0 %v894
        %1152 = vmatpush1.msra.mxu0 %v893
        %1153 = vmatprep.subr.mxu0 %v898
        %1154 = vmatpush1.msra.mxu0 %v897
        %1155 = vmatprep.subr.mxu0 %v902
        %1156 = vmatpush1.msra.mxu0 %v901
        %1157 = vmatprep.subr.mxu0 %v906
        %1158 = vmatpush1.msra.mxu0 %v905
        %1159 = vmatprep.subr.mxu0 %v910
        %1160 = vmatpush1.msra.mxu0 %v909
        %1161 = vmatprep.subr.mxu0 %v914
        %1162 = vmatpush1.msra.mxu0 %v913
        %1163 = vmatprep.subr.mxu0 %v918
        %1164 = vmatpush1.msra.mxu0 %v917
        %1165 = vmatprep.subr.mxu0 %v922
        %1166 = vmatpush1.msra.mxu0 %v921
        %1167 = vmatprep.subr.mxu0 %v926
        %1168 = vmatpush1.msra.mxu0 %v925
        %1169 = vmatprep.mubr.f32.mxu0 %v543
        %1170 = vmatmul.mubr.f32.gmra.mrb[0].mxu0 %v542
        %v1171 = vpop.f32.mrb[0].mxu0
        %v1172 = vadd.f32 %v1101, %v1171
        %v1173 = vpop.f32.mrb[0].mxu0
        %v1174 = vadd.f32 %v1103, %v1173
        %1175 = vdwg.mxu0
        %1176 = vmatprep.subr.mxu0 %v930
        %1177 = vmatpush1.msra.mxu0 %v929
        %1178 = vmatprep.subr.mxu0 %v934
        %1179 = vmatpush1.msra.mxu0 %v933
        %1180 = vmatprep.subr.mxu0 0.0
        %1181 = vmatpush1.msra.mxu0 0.0
        %1182 = vmatprep.subr.mxu0 0.0
        %1183 = vmatpush1.msra.mxu0 0.0
        %1184 = vmatprep.subr.mxu0 0.0
        %1185 = vmatpush1.msra.mxu0 0.0
        %1186 = vmatprep.subr.mxu0 0.0
        %1187 = vmatpush1.msra.mxu0 0.0
        %1188 = vmatprep.subr.mxu0 0.0
        %1189 = vmatpush1.msra.mxu0 0.0
        %1190 = vmatprep.subr.mxu0 0.0
        %1191 = vmatpush1.msra.mxu0 0.0
        %1192 = vmatprep.subr.mxu0 0.0
        %1193 = vmatpush1.msra.mxu0 0.0
        %1194 = vmatprep.subr.mxu0 0.0
        %1195 = vmatpush1.msra.mxu0 0.0
        %1196 = vmatprep.subr.mxu0 0.0
        %1197 = vmatpush1.msra.mxu0 0.0
        %1198 = vmatprep.subr.mxu0 0.0
        %1199 = vmatpush1.msra.mxu0 0.0
        %1200 = vmatprep.subr.mxu0 0.0
        %1201 = vmatpush1.msra.mxu0 0.0
        %1202 = vmatprep.subr.mxu0 0.0
        %1203 = vmatpush1.msra.mxu0 0.0
        %1204 = vmatprep.subr.mxu0 0.0
        %1205 = vmatpush1.msra.mxu0 0.0
        %1206 = vmatprep.subr.mxu0 0.0
        %1207 = vmatpush1.msra.mxu0 0.0
        %1208 = vmatprep.subr.mxu0 0.0
        %1209 = vmatpush1.msra.mxu0 0.0
        %1210 = vmatprep.subr.mxu0 0.0
        %1211 = vmatpush1.msra.mxu0 0.0
        %1212 = vmatprep.subr.mxu0 0.0
        %1213 = vmatpush1.msra.mxu0 0.0
        %1214 = vmatprep.subr.mxu0 0.0
        %1215 = vmatpush1.msra.mxu0 0.0
        %1216 = vmatprep.subr.mxu0 0.0
        %1217 = vmatpush1.msra.mxu0 0.0
        %1218 = vmatprep.subr.mxu0 0.0
        %1219 = vmatpush1.msra.mxu0 0.0
        %1220 = vmatprep.subr.mxu0 0.0
        %1221 = vmatpush1.msra.mxu0 0.0
        %1222 = vmatprep.subr.mxu0 0.0
        %1223 = vmatpush1.msra.mxu0 0.0
        %1224 = vmatprep.subr.mxu0 0.0
        %1225 = vmatpush1.msra.mxu0 0.0
        %1226 = vmatprep.subr.mxu0 0.0
        %1227 = vmatpush1.msra.mxu0 0.0
        %1228 = vmatprep.subr.mxu0 0.0
        %1229 = vmatpush1.msra.mxu0 0.0
        %1230 = vmatprep.subr.mxu0 0.0
        %1231 = vmatpush1.msra.mxu0 0.0
        %1232 = vmatprep.subr.mxu0 0.0
        %1233 = vmatpush1.msra.mxu0 0.0
        %1234 = vmatprep.subr.mxu0 0.0
        %1235 = vmatpush1.msra.mxu0 0.0
        %1236 = vmatprep.subr.mxu0 0.0
        %1237 = vmatpush1.msra.mxu0 0.0
        %1238 = vmatprep.subr.mxu0 0.0
        %1239 = vmatpush1.msra.mxu0 0.0
        %1240 = vmatprep.mubr.f32.mxu0 0.0
        %1241 = vmatmul.mubr.f32.gmra.mrb[0].mxu0 %v961
        %v1242 = vpop.f32.mrb[0].mxu0
        %v1243 = vadd.f32 %v1172, %v1242
        %v1244 = vpop.f32.mrb[0].mxu0
        %v1245 = vadd.f32 %v1174, %v1244
        %1246 = vdwg.mxu0
        %1247 = vmatprep.subr.mxu0 %v548
        %1248 = vmatpush1.msra.mxu0 %v547
        %1249 = vmatprep.subr.mxu0 %v552
        %1250 = vmatpush1.msra.mxu0 %v551
        %1251 = vmatprep.subr.mxu0 %v556
        %1252 = vmatpush1.msra.mxu0 %v555
        %1253 = vmatprep.subr.mxu0 %v560
        %1254 = vmatpush1.msra.mxu0 %v559
        %1255 = vmatprep.subr.mxu0 %v564
        %1256 = vmatpush1.msra.mxu0 %v563
        %1257 = vmatprep.subr.mxu0 %v568
        %1258 = vmatpush1.msra.mxu0 %v567
        %1259 = vmatprep.subr.mxu0 %v572
        %1260 = vmatpush1.msra.mxu0 %v571
        %1261 = vmatprep.subr.mxu0 %v576
        %1262 = vmatpush1.msra.mxu0 %v575
        %1263 = vmatprep.subr.mxu0 %v580
        %1264 = vmatpush1.msra.mxu0 %v579
        %1265 = vmatprep.subr.mxu0 %v584
        %1266 = vmatpush1.msra.mxu0 %v583
        %1267 = vmatprep.subr.mxu0 %v588
        %1268 = vmatpush1.msra.mxu0 %v587
        %1269 = vmatprep.subr.mxu0 %v592
        %1270 = vmatpush1.msra.mxu0 %v591
        %1271 = vmatprep.subr.mxu0 %v596
        %1272 = vmatpush1.msra.mxu0 %v595
        %1273 = vmatprep.subr.mxu0 %v600
        %1274 = vmatpush1.msra.mxu0 %v599
        %1275 = vmatprep.subr.mxu0 %v604
        %1276 = vmatpush1.msra.mxu0 %v603
        %1277 = vmatprep.subr.mxu0 %v608
        %1278 = vmatpush1.msra.mxu0 %v607
        %1279 = vmatprep.subr.mxu0 %v612
        %1280 = vmatpush1.msra.mxu0 %v611
        %1281 = vmatprep.subr.mxu0 %v616
        %1282 = vmatpush1.msra.mxu0 %v615
        %1283 = vmatprep.subr.mxu0 %v620
        %1284 = vmatpush1.msra.mxu0 %v619
        %1285 = vmatprep.subr.mxu0 %v624
        %1286 = vmatpush1.msra.mxu0 %v623
        %1287 = vmatprep.subr.mxu0 %v628
        %1288 = vmatpush1.msra.mxu0 %v627
        %1289 = vmatprep.subr.mxu0 %v632
        %1290 = vmatpush1.msra.mxu0 %v631
        %1291 = vmatprep.subr.mxu0 %v636
        %1292 = vmatpush1.msra.mxu0 %v635
        %1293 = vmatprep.subr.mxu0 %v640
        %1294 = vmatpush1.msra.mxu0 %v639
        %1295 = vmatprep.subr.mxu0 %v644
        %1296 = vmatpush1.msra.mxu0 %v643
        %1297 = vmatprep.subr.mxu0 %v648
        %1298 = vmatpush1.msra.mxu0 %v647
        %1299 = vmatprep.subr.mxu0 %v652
        %1300 = vmatpush1.msra.mxu0 %v651
        %1301 = vmatprep.subr.mxu0 %v656
        %1302 = vmatpush1.msra.mxu0 %v655
        %1303 = vmatprep.subr.mxu0 %v660
        %1304 = vmatpush1.msra.mxu0 %v659
        %1305 = vmatprep.subr.mxu0 %v664
        %1306 = vmatpush1.msra.mxu0 %v663
        %1307 = vmatprep.subr.mxu0 %v668
        %1308 = vmatpush1.msra.mxu0 %v667
        %1309 = vmatprep.subr.mxu0 %v672
        %1310 = vmatpush1.msra.mxu0 %v671
        %1311 = vmatprep.mubr.f32.mxu0 %v539
        %1312 = vmatmul.mubr.f32.gmra.mrb[0].mxu0 %v538
        %v1313 = vpop.f32.mrb[0].mxu0
        %v1314 = vadd.f32 %v950, %v1313
        %v1315 = vpop.f32.mrb[0].mxu0
        %v1316 = vadd.f32 %v954, %v1315
        %1317 = vdwg.mxu0
        %1318 = vmatprep.subr.mxu0 %v676
        %1319 = vmatpush1.msra.mxu0 %v675
        %1320 = vmatprep.subr.mxu0 %v680
        %1321 = vmatpush1.msra.mxu0 %v679
        %1322 = vmatprep.subr.mxu0 %v684
        %1323 = vmatpush1.msra.mxu0 %v683
        %1324 = vmatprep.subr.mxu0 %v688
        %1325 = vmatpush1.msra.mxu0 %v687
        %1326 = vmatprep.subr.mxu0 %v692
        %1327 = vmatpush1.msra.mxu0 %v691
        %1328 = vmatprep.subr.mxu0 %v696
        %1329 = vmatpush1.msra.mxu0 %v695
        %1330 = vmatprep.subr.mxu0 %v700
        %1331 = vmatpush1.msra.mxu0 %v699
        %1332 = vmatprep.subr.mxu0 %v704
        %1333 = vmatpush1.msra.mxu0 %v703
        %1334 = vmatprep.subr.mxu0 %v708
        %1335 = vmatpush1.msra.mxu0 %v707
        %1336 = vmatprep.subr.mxu0 %v712
        %1337 = vmatpush1.msra.mxu0 %v711
        %1338 = vmatprep.subr.mxu0 %v716
        %1339 = vmatpush1.msra.mxu0 %v715
        %1340 = vmatprep.subr.mxu0 %v720
        %1341 = vmatpush1.msra.mxu0 %v719
        %1342 = vmatprep.subr.mxu0 %v724
        %1343 = vmatpush1.msra.mxu0 %v723
        %1344 = vmatprep.subr.mxu0 %v728
        %1345 = vmatpush1.msra.mxu0 %v727
        %1346 = vmatprep.subr.mxu0 %v732
        %1347 = vmatpush1.msra.mxu0 %v731
        %1348 = vmatprep.subr.mxu0 %v736
        %1349 = vmatpush1.msra.mxu0 %v735
        %1350 = vmatprep.subr.mxu0 %v740
        %1351 = vmatpush1.msra.mxu0 %v739
        %1352 = vmatprep.subr.mxu0 %v744
        %1353 = vmatpush1.msra.mxu0 %v743
        %1354 = vmatprep.subr.mxu0 %v748
        %1355 = vmatpush1.msra.mxu0 %v747
        %1356 = vmatprep.subr.mxu0 %v752
        %1357 = vmatpush1.msra.mxu0 %v751
        %1358 = vmatprep.subr.mxu0 %v756
        %1359 = vmatpush1.msra.mxu0 %v755
        %1360 = vmatprep.subr.mxu0 %v760
        %1361 = vmatpush1.msra.mxu0 %v759
        %1362 = vmatprep.subr.mxu0 %v764
        %1363 = vmatpush1.msra.mxu0 %v763
        %1364 = vmatprep.subr.mxu0 %v768
        %1365 = vmatpush1.msra.mxu0 %v767
        %1366 = vmatprep.subr.mxu0 %v772
        %1367 = vmatpush1.msra.mxu0 %v771
        %1368 = vmatprep.subr.mxu0 %v776
        %1369 = vmatpush1.msra.mxu0 %v775
        %1370 = vmatprep.subr.mxu0 %v780
        %1371 = vmatpush1.msra.mxu0 %v779
        %1372 = vmatprep.subr.mxu0 %v784
        %1373 = vmatpush1.msra.mxu0 %v783
        %1374 = vmatprep.subr.mxu0 %v788
        %1375 = vmatpush1.msra.mxu0 %v787
        %1376 = vmatprep.subr.mxu0 %v792
        %1377 = vmatpush1.msra.mxu0 %v791
        %1378 = vmatprep.subr.mxu0 %v796
        %1379 = vmatpush1.msra.mxu0 %v795
        %1380 = vmatprep.subr.mxu0 %v800
        %1381 = vmatpush1.msra.mxu0 %v799
        %1382 = vmatprep.mubr.f32.mxu0 %v541
        %1383 = vmatmul.mubr.f32.gmra.mrb[0].mxu0 %v540
        %v1384 = vpop.f32.mrb[0].mxu0
        %v1385 = vadd.f32 %v1314, %v1384
        %v1386 = vpop.f32.mrb[0].mxu0
        %v1387 = vadd.f32 %v1316, %v1386
        %1388 = vdwg.mxu0
        %1389 = vmatprep.subr.mxu0 %v804
        %1390 = vmatpush1.msra.mxu0 %v803
        %1391 = vmatprep.subr.mxu0 %v808
        %1392 = vmatpush1.msra.mxu0 %v807
        %1393 = vmatprep.subr.mxu0 %v812
        %1394 = vmatpush1.msra.mxu0 %v811
        %1395 = vmatprep.subr.mxu0 %v816
        %1396 = vmatpush1.msra.mxu0 %v815
        %1397 = vmatprep.subr.mxu0 %v820
        %1398 = vmatpush1.msra.mxu0 %v819
        %1399 = vmatprep.subr.mxu0 %v824
        %1400 = vmatpush1.msra.mxu0 %v823
        %1401 = vmatprep.subr.mxu0 %v828
        %1402 = vmatpush1.msra.mxu0 %v827
        %1403 = vmatprep.subr.mxu0 %v832
        %1404 = vmatpush1.msra.mxu0 %v831
        %1405 = vmatprep.subr.mxu0 %v836
        %1406 = vmatpush1.msra.mxu0 %v835
        %1407 = vmatprep.subr.mxu0 %v840
        %1408 = vmatpush1.msra.mxu0 %v839
        %1409 = vmatprep.subr.mxu0 %v844
        %1410 = vmatpush1.msra.mxu0 %v843
        %1411 = vmatprep.subr.mxu0 %v848
        %1412 = vmatpush1.msra.mxu0 %v847
        %1413 = vmatprep.subr.mxu0 %v852
        %1414 = vmatpush1.msra.mxu0 %v851
        %1415 = vmatprep.subr.mxu0 %v856
        %1416 = vmatpush1.msra.mxu0 %v855
        %1417 = vmatprep.subr.mxu0 %v860
        %1418 = vmatpush1.msra.mxu0 %v859
        %1419 = vmatprep.subr.mxu0 %v864
        %1420 = vmatpush1.msra.mxu0 %v863
        %1421 = vmatprep.subr.mxu0 %v868
        %1422 = vmatpush1.msra.mxu0 %v867
        %1423 = vmatprep.subr.mxu0 %v872
        %1424 = vmatpush1.msra.mxu0 %v871
        %1425 = vmatprep.subr.mxu0 %v876
        %1426 = vmatpush1.msra.mxu0 %v875
        %1427 = vmatprep.subr.mxu0 %v880
        %1428 = vmatpush1.msra.mxu0 %v879
        %1429 = vmatprep.subr.mxu0 %v884
        %1430 = vmatpush1.msra.mxu0 %v883
        %1431 = vmatprep.subr.mxu0 %v888
        %1432 = vmatpush1.msra.mxu0 %v887
        %1433 = vmatprep.subr.mxu0 %v892
        %1434 = vmatpush1.msra.mxu0 %v891
        %1435 = vmatprep.subr.mxu0 %v896
        %1436 = vmatpush1.msra.mxu0 %v895
        %1437 = vmatprep.subr.mxu0 %v900
        %1438 = vmatpush1.msra.mxu0 %v899
        %1439 = vmatprep.subr.mxu0 %v904
        %1440 = vmatpush1.msra.mxu0 %v903
        %1441 = vmatprep.subr.mxu0 %v908
        %1442 = vmatpush1.msra.mxu0 %v907
        %1443 = vmatprep.subr.mxu0 %v912
        %1444 = vmatpush1.msra.mxu0 %v911
        %1445 = vmatprep.subr.mxu0 %v916
        %1446 = vmatpush1.msra.mxu0 %v915
        %1447 = vmatprep.subr.mxu0 %v920
        %1448 = vmatpush1.msra.mxu0 %v919
        %1449 = vmatprep.subr.mxu0 %v924
        %1450 = vmatpush1.msra.mxu0 %v923
        %1451 = vmatprep.subr.mxu0 %v928
        %1452 = vmatpush1.msra.mxu0 %v927
        %1453 = vmatprep.mubr.f32.mxu0 %v543
        %1454 = vmatmul.mubr.f32.gmra.mrb[0].mxu0 %v542
        %v1455 = vpop.f32.mrb[0].mxu0
        %v1456 = vadd.f32 %v1385, %v1455
        %v1457 = vpop.f32.mrb[0].mxu0
        %v1458 = vadd.f32 %v1387, %v1457
        %1459 = vdwg.mxu0
        %1460 = vmatprep.subr.mxu0 %v932
        %1461 = vmatpush1.msra.mxu0 %v931
        %1462 = vmatprep.subr.mxu0 %v936
        %1463 = vmatpush1.msra.mxu0 %v935
        %1464 = vmatprep.subr.mxu0 0.0
        %1465 = vmatpush1.msra.mxu0 0.0
        %1466 = vmatprep.subr.mxu0 0.0
        %1467 = vmatpush1.msra.mxu0 0.0
        %1468 = vmatprep.subr.mxu0 0.0
        %1469 = vmatpush1.msra.mxu0 0.0
        %1470 = vmatprep.subr.mxu0 0.0
        %1471 = vmatpush1.msra.mxu0 0.0
        %1472 = vmatprep.subr.mxu0 0.0
        %1473 = vmatpush1.msra.mxu0 0.0
        %1474 = vmatprep.subr.mxu0 0.0
        %1475 = vmatpush1.msra.mxu0 0.0
        %1476 = vmatprep.subr.mxu0 0.0
        %1477 = vmatpush1.msra.mxu0 0.0
        %1478 = vmatprep.subr.mxu0 0.0
        %1479 = vmatpush1.msra.mxu0 0.0
        %1480 = vmatprep.subr.mxu0 0.0
        %1481 = vmatpush1.msra.mxu0 0.0
        %1482 = vmatprep.subr.mxu0 0.0
        %1483 = vmatpush1.msra.mxu0 0.0
        %1484 = vmatprep.subr.mxu0 0.0
        %1485 = vmatpush1.msra.mxu0 0.0
        %1486 = vmatprep.subr.mxu0 0.0
        %1487 = vmatpush1.msra.mxu0 0.0
        %1488 = vmatprep.subr.mxu0 0.0
        %1489 = vmatpush1.msra.mxu0 0.0
        %1490 = vmatprep.subr.mxu0 0.0
        %1491 = vmatpush1.msra.mxu0 0.0
        %1492 = vmatprep.subr.mxu0 0.0
        %1493 = vmatpush1.msra.mxu0 0.0
        %1494 = vmatprep.subr.mxu0 0.0
        %1495 = vmatpush1.msra.mxu0 0.0
        %1496 = vmatprep.subr.mxu0 0.0
        %1497 = vmatpush1.msra.mxu0 0.0
        %1498 = vmatprep.subr.mxu0 0.0
        %1499 = vmatpush1.msra.mxu0 0.0
        %1500 = vmatprep.subr.mxu0 0.0
        %1501 = vmatpush1.msra.mxu0 0.0
        %1502 = vmatprep.subr.mxu0 0.0
        %1503 = vmatpush1.msra.mxu0 0.0
        %1504 = vmatprep.subr.mxu0 0.0
        %1505 = vmatpush1.msra.mxu0 0.0
        %1506 = vmatprep.subr.mxu0 0.0
        %1507 = vmatpush1.msra.mxu0 0.0
        %1508 = vmatprep.subr.mxu0 0.0
        %1509 = vmatpush1.msra.mxu0 0.0
        %1510 = vmatprep.subr.mxu0 0.0
        %1511 = vmatpush1.msra.mxu0 0.0
        %1512 = vmatprep.subr.mxu0 0.0
        %1513 = vmatpush1.msra.mxu0 0.0
        %1514 = vmatprep.subr.mxu0 0.0
        %1515 = vmatpush1.msra.mxu0 0.0
        %1516 = vmatprep.subr.mxu0 0.0
        %1517 = vmatpush1.msra.mxu0 0.0
        %1518 = vmatprep.subr.mxu0 0.0
        %1519 = vmatpush1.msra.mxu0 0.0
        %1520 = vmatprep.subr.mxu0 0.0
        %1521 = vmatpush1.msra.mxu0 0.0
        %1522 = vmatprep.subr.mxu0 0.0
        %1523 = vmatpush1.msra.mxu0 0.0
        %1524 = vmatprep.mubr.f32.mxu0 0.0
        %1525 = vmatmul.mubr.f32.gmra.mrb[0].mxu0 %v961
        %v1526 = vpop.f32.mrb[0].mxu0
        %v1527 = vadd.f32 %v1456, %v1526
        %v1528 = vpop.f32.mrb[0].mxu0
        %v1529 = vadd.f32 %v1458, %v1528
        %1530 = vdwg.mxu0
        %v1531 = vmax.f32 %v1243, 0.0
        %v1532 = vmax.f32 %v1245, 0.0
        %v1533 = vmax.f32 %v1527, 0.0
        %v1534 = vmax.f32 %v1529, 0.0
        %v1535 = vld [vmem:[#allocation8] sm:$0xff]
        %v1536 = vld [vmem:[#allocation8 + $0x8] sm:$0xff]
        %v1537 = vld [vmem:[#allocation8 + $0x10] sm:$0xff]
        %v1538 = vld [vmem:[#allocation8 + $0x18] sm:$0xff]
        %v1539 = vld [vmem:[#allocation8 + $0x20] sm:$0xff]
        %v1540 = vld [vmem:[#allocation8 + $0x28] sm:$0xff]
        %v1541 = vld [vmem:[#allocation8 + $0x30] sm:$0xff]
        %v1542 = vld [vmem:[#allocation8 + $0x38] sm:$0xff]
        %v1543 = vld [vmem:[#allocation8 + $0x40] sm:$0xff]
        %v1544 = vld [vmem:[#allocation8 + $0x48] sm:$0xff]
        %v1545 = vld [vmem:[#allocation8 + $0x50] sm:$0xff]
        %v1546 = vld [vmem:[#allocation8 + $0x58] sm:$0xff]
        %v1547 = vld [vmem:[#allocation8 + $0x60] sm:$0xff]
        %v1548 = vld [vmem:[#allocation8 + $0x68] sm:$0xff]
        %v1549 = vld [vmem:[#allocation8 + $0x70] sm:$0xff]
        %v1550 = vld [vmem:[#allocation8 + $0x78] sm:$0xff]
        %v1551 = vld [vmem:[#allocation8 + $0x80] sm:$0xff]
        %v1552 = vld [vmem:[#allocation8 + $0x88] sm:$0xff]
        %v1553 = vld [vmem:[#allocation8 + $0x90] sm:$0xff]
        %v1554 = vld [vmem:[#allocation8 + $0x98] sm:$0xff]
        %v1555 = vld [vmem:[#allocation8 + $0xa0] sm:$0xff]
        %v1556 = vld [vmem:[#allocation8 + $0xa8] sm:$0xff]
        %v1557 = vld [vmem:[#allocation8 + $0xb0] sm:$0xff]
        %v1558 = vld [vmem:[#allocation8 + $0xb8] sm:$0xff]
        %v1559 = vld [vmem:[#allocation8 + $0xc0] sm:$0xff]
        %v1560 = vld [vmem:[#allocation8 + $0xc8] sm:$0xff]
        %v1561 = vld [vmem:[#allocation8 + $0xd0] sm:$0xff]
        %v1562 = vld [vmem:[#allocation8 + $0xd8] sm:$0xff]
        %v1563 = vld [vmem:[#allocation8 + $0xe0] sm:$0xff]
        %v1564 = vld [vmem:[#allocation8 + $0xe8] sm:$0xff]
        %v1565 = vld [vmem:[#allocation8 + $0xf0] sm:$0xff]
        %v1566 = vld [vmem:[#allocation8 + $0xf8] sm:$0xff]
        %v1567 = vld [vmem:[#allocation8 + $0x100] sm:$0xff]
        %v1568 = vld [vmem:[#allocation8 + $0x108] sm:$0xff]
        %v1569 = vld [vmem:[#allocation8 + $0x110] sm:$0xff]
        %v1570 = vld [vmem:[#allocation8 + $0x118] sm:$0xff]
        %v1571 = vld [vmem:[#allocation8 + $0x120] sm:$0xff]
        %v1572 = vld [vmem:[#allocation8 + $0x128] sm:$0xff]
        %v1573 = vld [vmem:[#allocation8 + $0x130] sm:$0xff]
        %v1574 = vld [vmem:[#allocation8 + $0x138] sm:$0xff]
        %v1575 = vld [vmem:[#allocation8 + $0x140] sm:$0xff]
        %v1576 = vld [vmem:[#allocation8 + $0x148] sm:$0xff]
        %v1577 = vld [vmem:[#allocation8 + $0x150] sm:$0xff]
        %v1578 = vld [vmem:[#allocation8 + $0x158] sm:$0xff]
        %v1579 = vld [vmem:[#allocation8 + $0x160] sm:$0xff]
        %v1580 = vld [vmem:[#allocation8 + $0x168] sm:$0xff]
        %v1581 = vld [vmem:[#allocation8 + $0x170] sm:$0xff]
        %v1582 = vld [vmem:[#allocation8 + $0x178] sm:$0xff]
        %v1583 = vld [vmem:[#allocation8 + $0x180] sm:$0xff]
        %v1584 = vld [vmem:[#allocation8 + $0x188] sm:$0xff]
        %v1585 = vld [vmem:[#allocation8 + $0x190] sm:$0xff]
        %v1586 = vld [vmem:[#allocation8 + $0x198] sm:$0xff]
        %v1587 = vld [vmem:[#allocation8 + $0x1a0] sm:$0xff]
        %v1588 = vld [vmem:[#allocation8 + $0x1a8] sm:$0xff]
        %v1589 = vld [vmem:[#allocation8 + $0x1b0] sm:$0xff]
        %v1590 = vld [vmem:[#allocation8 + $0x1b8] sm:$0xff]
        %v1591 = vld [vmem:[#allocation8 + $0x1c0] sm:$0xff]
        %v1592 = vld [vmem:[#allocation8 + $0x1c8] sm:$0xff]
        %v1593 = vld [vmem:[#allocation8 + $0x1d0] sm:$0xff]
        %v1594 = vld [vmem:[#allocation8 + $0x1d8] sm:$0xff]
        %v1595 = vld [vmem:[#allocation8 + $0x1e0] sm:$0xff]
        %v1596 = vld [vmem:[#allocation8 + $0x1e8] sm:$0xff]
        %v1597 = vld [vmem:[#allocation8 + $0x1f0] sm:$0xff]
        %v1598 = vld [vmem:[#allocation8 + $0x1f8] sm:$0xff]
        %v1599 = vld [vmem:[#allocation8 + $0x200] sm:$0xff]
        %v1600 = vld [vmem:[#allocation8 + $0x208] sm:$0xff]
        %v1601 = vld [vmem:[#allocation8 + $0x210] sm:$0xff]
        %v1602 = vld [vmem:[#allocation8 + $0x218] sm:$0xff]
        %v1603 = vld [vmem:[#allocation8 + $0x220] sm:$0xff]
        %v1604 = vld [vmem:[#allocation8 + $0x228] sm:$0xff]
        %v1605 = vld [vmem:[#allocation8 + $0x230] sm:$0xff]
        %v1606 = vld [vmem:[#allocation8 + $0x238] sm:$0xff]
        %v1607 = vld [vmem:[#allocation8 + $0x240] sm:$0xff]
        %v1608 = vld [vmem:[#allocation8 + $0x248] sm:$0xff]
        %v1609 = vld [vmem:[#allocation8 + $0x250] sm:$0xff]
        %v1610 = vld [vmem:[#allocation8 + $0x258] sm:$0xff]
        %v1611 = vld [vmem:[#allocation8 + $0x260] sm:$0xff]
        %v1612 = vld [vmem:[#allocation8 + $0x268] sm:$0xff]
        %v1613 = vld [vmem:[#allocation8 + $0x270] sm:$0xff]
        %v1614 = vld [vmem:[#allocation8 + $0x278] sm:$0xff]
        %v1615 = vld [vmem:[#allocation8 + $0x280] sm:$0xff]
        %v1616 = vld [vmem:[#allocation8 + $0x288] sm:$0xff]
        %v1617 = vld [vmem:[#allocation8 + $0x290] sm:$0xff]
        %v1618 = vld [vmem:[#allocation8 + $0x298] sm:$0xff]
        %v1619 = vld [vmem:[#allocation8 + $0x2a0] sm:$0xff]
        %v1620 = vld [vmem:[#allocation8 + $0x2a8] sm:$0xff]
        %v1621 = vld [vmem:[#allocation8 + $0x2b0] sm:$0xff]
        %v1622 = vld [vmem:[#allocation8 + $0x2b8] sm:$0xff]
        %v1623 = vld [vmem:[#allocation8 + $0x2c0] sm:$0xff]
        %v1624 = vld [vmem:[#allocation8 + $0x2c8] sm:$0xff]
        %v1625 = vld [vmem:[#allocation8 + $0x2d0] sm:$0xff]
        %v1626 = vld [vmem:[#allocation8 + $0x2d8] sm:$0xff]
        %v1627 = vld [vmem:[#allocation8 + $0x2e0] sm:$0xff]
        %v1628 = vld [vmem:[#allocation8 + $0x2e8] sm:$0xff]
        %v1629 = vld [vmem:[#allocation8 + $0x2f0] sm:$0xff]
        %v1630 = vld [vmem:[#allocation8 + $0x2f8] sm:$0xff]
        %v1631 = vld [vmem:[#allocation8 + $0x300] sm:$0xff]
        %v1632 = vld [vmem:[#allocation8 + $0x308] sm:$0xff]
        %v1633 = vld [vmem:[#allocation8 + $0x310] sm:$0xff]
        %v1634 = vld [vmem:[#allocation8 + $0x318] sm:$0xff]
        %v1635 = vld [vmem:[#allocation8 + $0x320] sm:$0xff]
        %v1636 = vld [vmem:[#allocation8 + $0x328] sm:$0xff]
        %v1637 = vld [vmem:[#allocation8 + $0x330] sm:$0xff]
        %v1638 = vld [vmem:[#allocation8 + $0x338] sm:$0xff]
        %v1639 = vld [vmem:[#allocation8 + $0x340] sm:$0xff]
        %v1640 = vld [vmem:[#allocation8 + $0x348] sm:$0xff]
        %v1641 = vld [vmem:[#allocation8 + $0x350] sm:$0xff]
        %v1642 = vld [vmem:[#allocation8 + $0x358] sm:$0xff]
        %v1643 = vld [vmem:[#allocation8 + $0x360] sm:$0xff]
        %v1644 = vld [vmem:[#allocation8 + $0x368] sm:$0xff]
        %v1645 = vld [vmem:[#allocation8 + $0x370] sm:$0xff]
        %v1646 = vld [vmem:[#allocation8 + $0x378] sm:$0xff]
        %v1647 = vld [vmem:[#allocation8 + $0x380] sm:$0xff]
        %v1648 = vld [vmem:[#allocation8 + $0x388] sm:$0xff]
        %v1649 = vld [vmem:[#allocation8 + $0x390] sm:$0xff]
        %v1650 = vld [vmem:[#allocation8 + $0x398] sm:$0xff]
        %v1651 = vld [vmem:[#allocation8 + $0x3a0] sm:$0xff]
        %v1652 = vld [vmem:[#allocation8 + $0x3a8] sm:$0xff]
        %v1653 = vld [vmem:[#allocation8 + $0x3b0] sm:$0xff]
        %v1654 = vld [vmem:[#allocation8 + $0x3b8] sm:$0xff]
        %v1655 = vld [vmem:[#allocation8 + $0x3c0] sm:$0xff]
        %v1656 = vld [vmem:[#allocation8 + $0x3c8] sm:$0xff]
        %v1657 = vld [vmem:[#allocation8 + $0x3d0] sm:$0xff]
        %v1658 = vld [vmem:[#allocation8 + $0x3d8] sm:$0xff]
        %v1659 = vld [vmem:[#allocation8 + $0x3e0] sm:$0xff]
        %v1660 = vld [vmem:[#allocation8 + $0x3e8] sm:$0xff]
        %v1661 = vld [vmem:[#allocation8 + $0x3f0] sm:$0xff]
        %v1662 = vld [vmem:[#allocation8 + $0x3f8] sm:$0xff]
        %v1663 = vld [vmem:[#allocation10] sm:$0x3]
        %v1665 = vlaneseq
        %v1666 = vshrl.u32 %v1665, 7
        %v1667 = vsub.s32 0, %v1666
        %v1668 = vrot.slane %v1663, %v1667
        %v1669 = vlaneseq
        %v1670 = vshrl.u32 %v1669, 7
        %v1671 = vsub.s32 1, %v1670
        %v1672 = vrot.slane %v1663, %v1671
        %1675 = vmatprep.subr.mxu0 %v1536
        %1676 = vmatpush1.msra.mxu0 %v1535
        %1677 = vmatprep.subr.mxu0 %v1538
        %1678 = vmatpush1.msra.mxu0 %v1537
        %1679 = vmatprep.subr.mxu0 %v1540
        %1680 = vmatpush1.msra.mxu0 %v1539
        %1681 = vmatprep.subr.mxu0 %v1542
        %1682 = vmatpush1.msra.mxu0 %v1541
        %1683 = vmatprep.subr.mxu0 %v1544
        %1684 = vmatpush1.msra.mxu0 %v1543
        %1685 = vmatprep.subr.mxu0 %v1546
        %1686 = vmatpush1.msra.mxu0 %v1545
        %1687 = vmatprep.subr.mxu0 %v1548
        %1688 = vmatpush1.msra.mxu0 %v1547
        %1689 = vmatprep.subr.mxu0 %v1550
        %1690 = vmatpush1.msra.mxu0 %v1549
        %1691 = vmatprep.subr.mxu0 %v1552
        %1692 = vmatpush1.msra.mxu0 %v1551
        %1693 = vmatprep.subr.mxu0 %v1554
        %1694 = vmatpush1.msra.mxu0 %v1553
        %1695 = vmatprep.subr.mxu0 %v1556
        %1696 = vmatpush1.msra.mxu0 %v1555
        %1697 = vmatprep.subr.mxu0 %v1558
        %1698 = vmatpush1.msra.mxu0 %v1557
        %1699 = vmatprep.subr.mxu0 %v1560
        %1700 = vmatpush1.msra.mxu0 %v1559
        %1701 = vmatprep.subr.mxu0 %v1562
        %1702 = vmatpush1.msra.mxu0 %v1561
        %1703 = vmatprep.subr.mxu0 %v1564
        %1704 = vmatpush1.msra.mxu0 %v1563
        %1705 = vmatprep.subr.mxu0 %v1566
        %1706 = vmatpush1.msra.mxu0 %v1565
        %1707 = vmatprep.subr.mxu0 %v1568
        %1708 = vmatpush1.msra.mxu0 %v1567
        %1709 = vmatprep.subr.mxu0 %v1570
        %1710 = vmatpush1.msra.mxu0 %v1569
        %1711 = vmatprep.subr.mxu0 %v1572
        %1712 = vmatpush1.msra.mxu0 %v1571
        %1713 = vmatprep.subr.mxu0 %v1574
        %1714 = vmatpush1.msra.mxu0 %v1573
        %1715 = vmatprep.subr.mxu0 %v1576
        %1716 = vmatpush1.msra.mxu0 %v1575
        %1717 = vmatprep.subr.mxu0 %v1578
        %1718 = vmatpush1.msra.mxu0 %v1577
        %1719 = vmatprep.subr.mxu0 %v1580
        %1720 = vmatpush1.msra.mxu0 %v1579
        %1721 = vmatprep.subr.mxu0 %v1582
        %1722 = vmatpush1.msra.mxu0 %v1581
        %1723 = vmatprep.subr.mxu0 %v1584
        %1724 = vmatpush1.msra.mxu0 %v1583
        %1725 = vmatprep.subr.mxu0 %v1586
        %1726 = vmatpush1.msra.mxu0 %v1585
        %1727 = vmatprep.subr.mxu0 %v1588
        %1728 = vmatpush1.msra.mxu0 %v1587
        %1729 = vmatprep.subr.mxu0 %v1590
        %1730 = vmatpush1.msra.mxu0 %v1589
        %1731 = vmatprep.subr.mxu0 %v1592
        %1732 = vmatpush1.msra.mxu0 %v1591
        %1733 = vmatprep.subr.mxu0 %v1594
        %1734 = vmatpush1.msra.mxu0 %v1593
        %1735 = vmatprep.subr.mxu0 %v1596
        %1736 = vmatpush1.msra.mxu0 %v1595
        %1737 = vmatprep.subr.mxu0 %v1598
        %1738 = vmatpush1.msra.mxu0 %v1597
        %1739 = vmatprep.mubr.f32.mxu0 %v1532
        %1740 = vmatmul.mubr.f32.gmra.mrb[0].mxu0 %v1531
        %v1741 = vpop.f32.mrb[0].mxu0
        %v1742 = vadd.f32 %v1668, %v1741
        %v1743 = vpop.f32.mrb[0].mxu0
        %v1744 = vadd.f32 %v1672, %v1743
        %1745 = vdwg.mxu0
        %1746 = vmatprep.subr.mxu0 %v1600
        %1747 = vmatpush1.msra.mxu0 %v1599
        %1748 = vmatprep.subr.mxu0 %v1602
        %1749 = vmatpush1.msra.mxu0 %v1601
        %1750 = vmatprep.subr.mxu0 %v1604
        %1751 = vmatpush1.msra.mxu0 %v1603
        %1752 = vmatprep.subr.mxu0 %v1606
        %1753 = vmatpush1.msra.mxu0 %v1605
        %1754 = vmatprep.subr.mxu0 %v1608
        %1755 = vmatpush1.msra.mxu0 %v1607
        %1756 = vmatprep.subr.mxu0 %v1610
        %1757 = vmatpush1.msra.mxu0 %v1609
        %1758 = vmatprep.subr.mxu0 %v1612
        %1759 = vmatpush1.msra.mxu0 %v1611
        %1760 = vmatprep.subr.mxu0 %v1614
        %1761 = vmatpush1.msra.mxu0 %v1613
        %1762 = vmatprep.subr.mxu0 %v1616
        %1763 = vmatpush1.msra.mxu0 %v1615
        %1764 = vmatprep.subr.mxu0 %v1618
        %1765 = vmatpush1.msra.mxu0 %v1617
        %1766 = vmatprep.subr.mxu0 %v1620
        %1767 = vmatpush1.msra.mxu0 %v1619
        %1768 = vmatprep.subr.mxu0 %v1622
        %1769 = vmatpush1.msra.mxu0 %v1621
        %1770 = vmatprep.subr.mxu0 %v1624
        %1771 = vmatpush1.msra.mxu0 %v1623
        %1772 = vmatprep.subr.mxu0 %v1626
        %1773 = vmatpush1.msra.mxu0 %v1625
        %1774 = vmatprep.subr.mxu0 %v1628
        %1775 = vmatpush1.msra.mxu0 %v1627
        %1776 = vmatprep.subr.mxu0 %v1630
        %1777 = vmatpush1.msra.mxu0 %v1629
        %1778 = vmatprep.subr.mxu0 %v1632
        %1779 = vmatpush1.msra.mxu0 %v1631
        %1780 = vmatprep.subr.mxu0 %v1634
        %1781 = vmatpush1.msra.mxu0 %v1633
        %1782 = vmatprep.subr.mxu0 %v1636
        %1783 = vmatpush1.msra.mxu0 %v1635
        %1784 = vmatprep.subr.mxu0 %v1638
        %1785 = vmatpush1.msra.mxu0 %v1637
        %1786 = vmatprep.subr.mxu0 %v1640
        %1787 = vmatpush1.msra.mxu0 %v1639
        %1788 = vmatprep.subr.mxu0 %v1642
        %1789 = vmatpush1.msra.mxu0 %v1641
        %1790 = vmatprep.subr.mxu0 %v1644
        %1791 = vmatpush1.msra.mxu0 %v1643
        %1792 = vmatprep.subr.mxu0 %v1646
        %1793 = vmatpush1.msra.mxu0 %v1645
        %1794 = vmatprep.subr.mxu0 %v1648
        %1795 = vmatpush1.msra.mxu0 %v1647
        %1796 = vmatprep.subr.mxu0 %v1650
        %1797 = vmatpush1.msra.mxu0 %v1649
        %1798 = vmatprep.subr.mxu0 %v1652
        %1799 = vmatpush1.msra.mxu0 %v1651
        %1800 = vmatprep.subr.mxu0 %v1654
        %1801 = vmatpush1.msra.mxu0 %v1653
        %1802 = vmatprep.subr.mxu0 %v1656
        %1803 = vmatpush1.msra.mxu0 %v1655
        %1804 = vmatprep.subr.mxu0 %v1658
        %1805 = vmatpush1.msra.mxu0 %v1657
        %1806 = vmatprep.subr.mxu0 %v1660
        %1807 = vmatpush1.msra.mxu0 %v1659
        %1808 = vmatprep.subr.mxu0 %v1662
        %1809 = vmatpush1.msra.mxu0 %v1661
        %1810 = vmatprep.mubr.f32.mxu0 %v1534
        %1811 = vmatmul.mubr.f32.gmra.mrb[0].mxu0 %v1533
        %v1812 = vpop.f32.mrb[0].mxu0
        %v1813 = vadd.f32 %v1742, %v1812
        %v1814 = vpop.f32.mrb[0].mxu0
        %v1815 = vadd.f32 %v1744, %v1814
        %1816 = vdwg.mxu0
        %v1817 = vmax.f32 %v1813, 0.0
        %v1818 = vmax.f32 %v1815, 0.0
        %v1819 = vld [vmem:[#allocation11] sm:$0xff]
        %v1820 = vld [vmem:[#allocation11 + $0x8] sm:$0xff]
        %v1821 = vld [vmem:[#allocation11 + $0x10] sm:$0xff]
        %v1822 = vld [vmem:[#allocation11 + $0x18] sm:$0xff]
        %v1823 = vld [vmem:[#allocation11 + $0x20] sm:$0xff]
        %v1824 = vld [vmem:[#allocation11 + $0x28] sm:$0xff]
        %v1825 = vld [vmem:[#allocation11 + $0x30] sm:$0xff]
        %v1826 = vld [vmem:[#allocation11 + $0x38] sm:$0xff]
        %v1827 = vld [vmem:[#allocation11 + $0x40] sm:$0xff]
        %v1828 = vld [vmem:[#allocation11 + $0x48] sm:$0xff]
        %v1829 = vld [vmem:[#allocation11 + $0x50] sm:$0xff]
        %v1830 = vld [vmem:[#allocation11 + $0x58] sm:$0xff]
        %v1831 = vld [vmem:[#allocation11 + $0x60] sm:$0xff]
        %v1832 = vld [vmem:[#allocation11 + $0x68] sm:$0xff]
        %v1833 = vld [vmem:[#allocation11 + $0x70] sm:$0xff]
        %v1834 = vld [vmem:[#allocation11 + $0x78] sm:$0xff]
        %v1835 = vld [vmem:[#allocation11 + $0x80] sm:$0xff]
        %v1836 = vld [vmem:[#allocation11 + $0x88] sm:$0xff]
        %v1837 = vld [vmem:[#allocation11 + $0x90] sm:$0xff]
        %v1838 = vld [vmem:[#allocation11 + $0x98] sm:$0xff]
        %v1839 = vld [vmem:[#allocation11 + $0xa0] sm:$0xff]
        %v1840 = vld [vmem:[#allocation11 + $0xa8] sm:$0xff]
        %v1841 = vld [vmem:[#allocation11 + $0xb0] sm:$0xff]
        %v1842 = vld [vmem:[#allocation11 + $0xb8] sm:$0xff]
        %v1843 = vld [vmem:[#allocation11 + $0xc0] sm:$0xff]
        %v1844 = vld [vmem:[#allocation11 + $0xc8] sm:$0xff]
        %v1845 = vld [vmem:[#allocation11 + $0xd0] sm:$0xff]
        %v1846 = vld [vmem:[#allocation11 + $0xd8] sm:$0xff]
        %v1847 = vld [vmem:[#allocation11 + $0xe0] sm:$0xff]
        %v1848 = vld [vmem:[#allocation11 + $0xe8] sm:$0xff]
        %v1849 = vld [vmem:[#allocation11 + $0xf0] sm:$0xff]
        %v1850 = vld [vmem:[#allocation11 + $0xf8] sm:$0xff]
        %v1851 = vld [vmem:[#allocation13] sm:$0x1]
        %v1853 = vlaneseq
        %v1854 = vshrl.u32 %v1853, 7
        %v1855 = vsub.s32 0, %v1854
        %v1856 = vrot.slane %v1851, %v1855
        %1858 = vmatprep.subr.mxu0 0.0
        %1859 = vmatpush1.msra.mxu0 %v1819
        %1860 = vmatprep.subr.mxu0 0.0
        %1861 = vmatpush1.msra.mxu0 %v1820
        %1862 = vmatprep.subr.mxu0 0.0
        %1863 = vmatpush1.msra.mxu0 %v1821
        %1864 = vmatprep.subr.mxu0 0.0
        %1865 = vmatpush1.msra.mxu0 %v1822
        %1866 = vmatprep.subr.mxu0 0.0
        %1867 = vmatpush1.msra.mxu0 %v1823
        %1868 = vmatprep.subr.mxu0 0.0
        %1869 = vmatpush1.msra.mxu0 %v1824
        %1870 = vmatprep.subr.mxu0 0.0
        %1871 = vmatpush1.msra.mxu0 %v1825
        %1872 = vmatprep.subr.mxu0 0.0
        %1873 = vmatpush1.msra.mxu0 %v1826
        %1874 = vmatprep.subr.mxu0 0.0
        %1875 = vmatpush1.msra.mxu0 %v1827
        %1876 = vmatprep.subr.mxu0 0.0
        %1877 = vmatpush1.msra.mxu0 %v1828
        %1878 = vmatprep.subr.mxu0 0.0
        %1879 = vmatpush1.msra.mxu0 %v1829
        %1880 = vmatprep.subr.mxu0 0.0
        %1881 = vmatpush1.msra.mxu0 %v1830
        %1882 = vmatprep.subr.mxu0 0.0
        %1883 = vmatpush1.msra.mxu0 %v1831
        %1884 = vmatprep.subr.mxu0 0.0
        %1885 = vmatpush1.msra.mxu0 %v1832
        %1886 = vmatprep.subr.mxu0 0.0
        %1887 = vmatpush1.msra.mxu0 %v1833
        %1888 = vmatprep.subr.mxu0 0.0
        %1889 = vmatpush1.msra.mxu0 %v1834
        %1890 = vmatprep.subr.mxu0 0.0
        %1891 = vmatpush1.msra.mxu0 %v1835
        %1892 = vmatprep.subr.mxu0 0.0
        %1893 = vmatpush1.msra.mxu0 %v1836
        %1894 = vmatprep.subr.mxu0 0.0
        %1895 = vmatpush1.msra.mxu0 %v1837
        %1896 = vmatprep.subr.mxu0 0.0
        %1897 = vmatpush1.msra.mxu0 %v1838
        %1898 = vmatprep.subr.mxu0 0.0
        %1899 = vmatpush1.msra.mxu0 %v1839
        %1900 = vmatprep.subr.mxu0 0.0
        %1901 = vmatpush1.msra.mxu0 %v1840
        %1902 = vmatprep.subr.mxu0 0.0
        %1903 = vmatpush1.msra.mxu0 %v1841
        %1904 = vmatprep.subr.mxu0 0.0
        %1905 = vmatpush1.msra.mxu0 %v1842
        %1906 = vmatprep.subr.mxu0 0.0
        %1907 = vmatpush1.msra.mxu0 %v1843
        %1908 = vmatprep.subr.mxu0 0.0
        %1909 = vmatpush1.msra.mxu0 %v1844
        %1910 = vmatprep.subr.mxu0 0.0
        %1911 = vmatpush1.msra.mxu0 %v1845
        %1912 = vmatprep.subr.mxu0 0.0
        %1913 = vmatpush1.msra.mxu0 %v1846
        %1914 = vmatprep.subr.mxu0 0.0
        %1915 = vmatpush1.msra.mxu0 %v1847
        %1916 = vmatprep.subr.mxu0 0.0
        %1917 = vmatpush1.msra.mxu0 %v1848
        %1918 = vmatprep.subr.mxu0 0.0
        %1919 = vmatpush1.msra.mxu0 %v1849
        %1920 = vmatprep.subr.mxu0 0.0
        %1921 = vmatpush1.msra.mxu0 %v1850
        %1922 = vmatprep.mubr.f32.mxu0 %v1818
        %1923 = vmatmul.mubr.f32.gmra.mrb[0].mxu0 %v1817
        %v1924 = vpop.f32.mrb[0].mxu0
        %v1925 = vadd.f32 %v1856, %v1924
        %v1926 = vpop.f32.mrb[0].mxu0
        %1927 = vdwg.mxu0
        %v1928 = vmax.f32 %v1925, 0.0
        %v1929 = vld [vmem:[#allocation14] sm:$0xff]
        %v1930 = vld [vmem:[#allocation14 + $0x8] sm:$0xff]
        %v1931 = vld [vmem:[#allocation14 + $0x10] sm:$0xff]
        %v1932 = vld [vmem:[#allocation14 + $0x18] sm:$0xff]
        %v1933 = vld [vmem:[#allocation14 + $0x20] sm:$0xff]
        %v1934 = vld [vmem:[#allocation14 + $0x28] sm:$0xff]
        %v1935 = vld [vmem:[#allocation14 + $0x30] sm:$0xff]
        %v1936 = vld [vmem:[#allocation14 + $0x38] sm:$0xff]
        %v1937 = vld [vmem:[#allocation14 + $0x40] sm:$0xff]
        %v1938 = vld [vmem:[#allocation14 + $0x48] sm:$0xff]
        %v1939 = vld [vmem:[#allocation14 + $0x50] sm:$0xff]
        %v1940 = vld [vmem:[#allocation14 + $0x58] sm:$0xff]
        %v1941 = vld [vmem:[#allocation14 + $0x60] sm:$0xff]
        %v1942 = vld [vmem:[#allocation14 + $0x68] sm:$0xff]
        %v1943 = vld [vmem:[#allocation14 + $0x70] sm:$0xff]
        %v1944 = vld [vmem:[#allocation14 + $0x78] sm:$0xff]
        %v1945 = vld [vmem:[#allocation16] sm:$0x1]
        %v1947 = vlaneseq
        %v1948 = vshrl.u32 %v1947, 7
        %v1949 = vsub.s32 0, %v1948
        %v1950 = vrot.slane %v1945, %v1949
        %1952 = vmatprep.subr.mxu0 0.0
        %1953 = vmatpush1.msra.mxu0 %v1929
        %1954 = vmatprep.subr.mxu0 0.0
        %1955 = vmatpush1.msra.mxu0 %v1930
        %1956 = vmatprep.subr.mxu0 0.0
        %1957 = vmatpush1.msra.mxu0 %v1931
        %1958 = vmatprep.subr.mxu0 0.0
        %1959 = vmatpush1.msra.mxu0 %v1932
        %1960 = vmatprep.subr.mxu0 0.0
        %1961 = vmatpush1.msra.mxu0 %v1933
        %1962 = vmatprep.subr.mxu0 0.0
        %1963 = vmatpush1.msra.mxu0 %v1934
        %1964 = vmatprep.subr.mxu0 0.0
        %1965 = vmatpush1.msra.mxu0 %v1935
        %1966 = vmatprep.subr.mxu0 0.0
        %1967 = vmatpush1.msra.mxu0 %v1936
        %1968 = vmatprep.subr.mxu0 0.0
        %1969 = vmatpush1.msra.mxu0 %v1937
        %1970 = vmatprep.subr.mxu0 0.0
        %1971 = vmatpush1.msra.mxu0 %v1938
        %1972 = vmatprep.subr.mxu0 0.0
        %1973 = vmatpush1.msra.mxu0 %v1939
        %1974 = vmatprep.subr.mxu0 0.0
        %1975 = vmatpush1.msra.mxu0 %v1940
        %1976 = vmatprep.subr.mxu0 0.0
        %1977 = vmatpush1.msra.mxu0 %v1941
        %1978 = vmatprep.subr.mxu0 0.0
        %1979 = vmatpush1.msra.mxu0 %v1942
        %1980 = vmatprep.subr.mxu0 0.0
        %1981 = vmatpush1.msra.mxu0 %v1943
        %1982 = vmatprep.subr.mxu0 0.0
        %1983 = vmatpush1.msra.mxu0 %v1944
        %1984 = vmatprep.subr.mxu0 0.0
        %1985 = vmatpush1.msra.mxu0 0.0
        %1986 = vmatprep.subr.mxu0 0.0
        %1987 = vmatpush1.msra.mxu0 0.0
        %1988 = vmatprep.subr.mxu0 0.0
        %1989 = vmatpush1.msra.mxu0 0.0
        %1990 = vmatprep.subr.mxu0 0.0
        %1991 = vmatpush1.msra.mxu0 0.0
        %1992 = vmatprep.subr.mxu0 0.0
        %1993 = vmatpush1.msra.mxu0 0.0
        %1994 = vmatprep.subr.mxu0 0.0
        %1995 = vmatpush1.msra.mxu0 0.0
        %1996 = vmatprep.subr.mxu0 0.0
        %1997 = vmatpush1.msra.mxu0 0.0
        %1998 = vmatprep.subr.mxu0 0.0
        %1999 = vmatpush1.msra.mxu0 0.0
        %2000 = vmatprep.subr.mxu0 0.0
        %2001 = vmatpush1.msra.mxu0 0.0
        %2002 = vmatprep.subr.mxu0 0.0
        %2003 = vmatpush1.msra.mxu0 0.0
        %2004 = vmatprep.subr.mxu0 0.0
        %2005 = vmatpush1.msra.mxu0 0.0
        %2006 = vmatprep.subr.mxu0 0.0
        %2007 = vmatpush1.msra.mxu0 0.0
        %2008 = vmatprep.subr.mxu0 0.0
        %2009 = vmatpush1.msra.mxu0 0.0
        %2010 = vmatprep.subr.mxu0 0.0
        %2011 = vmatpush1.msra.mxu0 0.0
        %2012 = vmatprep.subr.mxu0 0.0
        %2013 = vmatpush1.msra.mxu0 0.0
        %2014 = vmatprep.subr.mxu0 0.0
        %2015 = vmatpush1.msra.mxu0 0.0
        %2016 = vmatprep.mubr.f32.mxu0 0.0
        %2017 = vmatmul.mubr.f32.gmra.mrb[0].mxu0 %v1928
        %v2018 = vpop.f32.mrb[0].mxu0
        %v2019 = vadd.f32 %v1950, %v2018
        %v2020 = vpop.f32.mrb[0].mxu0
        %2021 = vdwg.mxu0
        %v2022 = vmax.f32 %v2019, 0.0
        %v2023 = vld [vmem:[#allocation17] sm:$0xff]
        %v2024 = vld [vmem:[#allocation17 + $0x8] sm:$0xff]
        %v2025 = vld [vmem:[#allocation17 + $0x10] sm:$0xff]
        %v2026 = vld [vmem:[#allocation17 + $0x18] sm:$0xff]
        %v2027 = vld [vmem:[#allocation17 + $0x20] sm:$0xff]
        %v2028 = vld [vmem:[#allocation17 + $0x28] sm:$0xff]
        %v2029 = vld [vmem:[#allocation17 + $0x30] sm:$0xff]
        %v2030 = vld [vmem:[#allocation17 + $0x38] sm:$0xff]
        %v2031 = vld [vmem:[#allocation17 + $0x40] sm:$0xff]
        %v2032 = vld [vmem:[#allocation17 + $0x48] sm:$0xff]
        %v2033 = vld [vmem:[#allocation17 + $0x50] sm:$0xff]
        %v2034 = vld [vmem:[#allocation17 + $0x58] sm:$0xff]
        %v2035 = vld [vmem:[#allocation17 + $0x60] sm:$0xff]
        %v2036 = vld [vmem:[#allocation17 + $0x68] sm:$0xff]
        %v2037 = vld [vmem:[#allocation17 + $0x70] sm:$0xff]
        %v2038 = vld [vmem:[#allocation17 + $0x78] sm:$0xff]
        %v2039 = vld [vmem:[#allocation19] sm:$0x1]
        %v2041 = vlaneseq
        %v2042 = vshrl.u32 %v2041, 7
        %v2043 = vsub.s32 0, %v2042
        %v2044 = vrot.slane %v2039, %v2043
        %2046 = vmatprep.subr.mxu0 0.0
        %2047 = vmatpush1.msra.mxu0 %v2023
        %2048 = vmatprep.subr.mxu0 0.0
        %2049 = vmatpush1.msra.mxu0 %v2024
        %2050 = vmatprep.subr.mxu0 0.0
        %2051 = vmatpush1.msra.mxu0 %v2025
        %2052 = vmatprep.subr.mxu0 0.0
        %2053 = vmatpush1.msra.mxu0 %v2026
        %2054 = vmatprep.subr.mxu0 0.0
        %2055 = vmatpush1.msra.mxu0 %v2027
        %2056 = vmatprep.subr.mxu0 0.0
        %2057 = vmatpush1.msra.mxu0 %v2028
        %2058 = vmatprep.subr.mxu0 0.0
        %2059 = vmatpush1.msra.mxu0 %v2029
        %2060 = vmatprep.subr.mxu0 0.0
        %2061 = vmatpush1.msra.mxu0 %v2030
        %2062 = vmatprep.subr.mxu0 0.0
        %2063 = vmatpush1.msra.mxu0 %v2031
        %2064 = vmatprep.subr.mxu0 0.0
        %2065 = vmatpush1.msra.mxu0 %v2032
        %2066 = vmatprep.subr.mxu0 0.0
        %2067 = vmatpush1.msra.mxu0 %v2033
        %2068 = vmatprep.subr.mxu0 0.0
        %2069 = vmatpush1.msra.mxu0 %v2034
        %2070 = vmatprep.subr.mxu0 0.0
        %2071 = vmatpush1.msra.mxu0 %v2035
        %2072 = vmatprep.subr.mxu0 0.0
        %2073 = vmatpush1.msra.mxu0 %v2036
        %2074 = vmatprep.subr.mxu0 0.0
        %2075 = vmatpush1.msra.mxu0 %v2037
        %2076 = vmatprep.subr.mxu0 0.0
        %2077 = vmatpush1.msra.mxu0 %v2038
        %2078 = vmatprep.subr.mxu0 0.0
        %2079 = vmatpush1.msra.mxu0 0.0
        %2080 = vmatprep.subr.mxu0 0.0
        %2081 = vmatpush1.msra.mxu0 0.0
        %2082 = vmatprep.subr.mxu0 0.0
        %2083 = vmatpush1.msra.mxu0 0.0
        %2084 = vmatprep.subr.mxu0 0.0
        %2085 = vmatpush1.msra.mxu0 0.0
        %2086 = vmatprep.subr.mxu0 0.0
        %2087 = vmatpush1.msra.mxu0 0.0
        %2088 = vmatprep.subr.mxu0 0.0
        %2089 = vmatpush1.msra.mxu0 0.0
        %2090 = vmatprep.subr.mxu0 0.0
        %2091 = vmatpush1.msra.mxu0 0.0
        %2092 = vmatprep.subr.mxu0 0.0
        %2093 = vmatpush1.msra.mxu0 0.0
        %2094 = vmatprep.subr.mxu0 0.0
        %2095 = vmatpush1.msra.mxu0 0.0
        %2096 = vmatprep.subr.mxu0 0.0
        %2097 = vmatpush1.msra.mxu0 0.0
        %2098 = vmatprep.subr.mxu0 0.0
        %2099 = vmatpush1.msra.mxu0 0.0
        %2100 = vmatprep.subr.mxu0 0.0
        %2101 = vmatpush1.msra.mxu0 0.0
        %2102 = vmatprep.subr.mxu0 0.0
        %2103 = vmatpush1.msra.mxu0 0.0
        %2104 = vmatprep.subr.mxu0 0.0
        %2105 = vmatpush1.msra.mxu0 0.0
        %2106 = vmatprep.subr.mxu0 0.0
        %2107 = vmatpush1.msra.mxu0 0.0
        %2108 = vmatprep.subr.mxu0 0.0
        %2109 = vmatpush1.msra.mxu0 0.0
        %2110 = vmatprep.mubr.f32.mxu0 0.0
        %2111 = vmatmul.mubr.f32.gmra.mrb[0].mxu0 %v2022
        %v2112 = vpop.f32.mrb[0].mxu0
        %v2113 = vadd.f32 %v2044, %v2112
        %v2114 = vpop.f32.mrb[0].mxu0
        %2115 = vdwg.mxu0
        %2116 = vst [vmem:[%s537] sm:$0xff] %v2113
        %s2117 = sand.u32 %s277, 1
        %s2118 = scalar_lea.sflag [#allocation4], %s2117
        %s2119 = sand.u32 %s277, 1
        %s2120 = smul.addr %s2119, 8
        %s2121 = scalar_lea.vmem [#allocation20], %s2120
        // Predicated region
        $region109: #{tpu_custom_call.1} parent=63 // pred_check
          %p2122 = pneg %p287
        $region110: #{tpu_custom_call.1} parent=63 // pred_check_branch
          %2124 = sbr.rel (%p2122) target = $region112
        $region111: #{tpu_custom_call.1} parent=63 // pred_region
          %s2126 = ssub.s32 128, 128
          %2127 = vsyncadd %s2118, %s2126
          %s2128 = smul.addr %s33, 128
          %s2129 = scalar_lea.hbm %s11, %s2128
          %s2131 = sshll.u32 %s2121, 4
          %s2132 = int_to_ptr.vmem [resolvable:$true] %s2131
          %2134 = dma.vmem_to_hbm [thread:$0]  %s2132, 128, %s2129, %s2118
        $region112: #{tpu_custom_call.1} parent=63 // pred_fallthru
          _
      $region64: #{tpu_custom_call.1} parent=5 // pred_fallthru
        _
      %p2135 = scmp.le.s32.totalorder 2, %s28
      // Predicated region
      $region113: #{tpu_custom_call.1} parent=5 // pred_check
        %p2136 = pneg %p2135
      $region114: #{tpu_custom_call.1} parent=5 // pred_check_branch
        %2138 = sbr.rel (%p2136) target = $region116
      $region115: #{tpu_custom_call.1} parent=5 // pred_region
        %s2139 = ssub.s32 %s28, 2
        // Predicated region
        $region117: #{tpu_custom_call.1} parent=115 // pred_check
          %p2140 = pneg %p293
        $region118: #{tpu_custom_call.1} parent=115 // pred_check_branch
          %2142 = sbr.rel (%p2140) target = $region120
        $region119: #{tpu_custom_call.1} parent=115 // pred_region
          %s2143 = sand.u32 %s278, 1
          %s2144 = scalar_lea.sflag [#allocation4], %s2143
          %s2145 = sand.u32 %s278, 1
          %s2146 = smul.addr %s2145, 8
          %s2147 = scalar_lea.vmem [#allocation20], %s2146
          %2148 = dma.done %s2144, 128
        $region120: #{tpu_custom_call.1} parent=115 // pred_fallthru
          _
      $region116: #{tpu_custom_call.1} parent=5 // pred_fallthru
        _
    $region6: #{tpu_custom_call.1} parent=1 // loop_footer
      %s32 = sadd.s32 1, %s28
    $region7: #{tpu_custom_call.1} parent=1 // loop_footer_branch
      %27 = sbr.rel target = $region3
    $region8: #{tpu_custom_call.1} parent=1 // loop_exit
      _
    %2149 = vsyncpa [#allocation3], 1
    %s2150 = scalar_lea.sflag [#allocation3], 1
    %2151 = vsyncpa %s2150, 1
    %2152 = vsyncpa [#allocation6], 1
    %2153 = vsyncpa [#allocation9], 1
    %2154 = vsyncpa [#allocation12], 1
    %2155 = vsyncpa [#allocation15], 1
    %2156 = vsyncpa [#allocation18], 1
    %2157 = vsyncpa [#allocation4], 1
    %s2158 = scalar_lea.sflag [#allocation4], 1
    %2159 = vsyncpa %s2158, 1

</llo_original>
